<compile_context>
chip_gen: v7x
topology: tpu7x:2x2x1
jax: 0.10.0
libtpu: 0.0.40
codegen_flags: <defaults>
</compile_context>

<pallas_src>
import functools

import jax
import jax.numpy as jnp
from jax import lax
from jax.experimental import pallas as pl
from jax.experimental.pallas import tpu as pltpu

FC_PAD = 128  # lane-dense fc head width (real head is 2 classes)


def gru_block_kernel(x_ref,                    # (Tb*Bp, I)  time-major rows for this block
                     wih_ref, bih_ref,         # (I, 3H), (1, 3H)
                     whh_ref, bhh_ref,         # (H, 3H), (1, 3H)
                     wfc_ref, bfc_ref,         # (H, FC_PAD), (1, FC_PAD)
                     out_ref,                  # (Bp, FC_PAD)
                     h_ref, gi_ref,            # scratch: (Bp, H), (Tb*Bp, 3H)
                     *, seq_len, block_steps):
    t = pl.program_id(0)
    bp, hidden = h_ref.shape

    @pl.when(t == 0)
    def _():
        h_ref[...] = jnp.zeros_like(h_ref)     # h_0 = zeros (matches PyTorch)

    # Batched input projection for the whole time block: one MXU matmul
    # instead of per-timestep tiny dots.  Bias folded in here once.
    gi_ref[...] = (jnp.dot(x_ref[...], wih_ref[...],
                           preferred_element_type=jnp.float32) + bih_ref[...])

    # Hoisted broadcasts / scalars (not re-emitted per loop iteration).
    bhh = jnp.broadcast_to(bhh_ref[...], (bp, 3 * hidden))
    t_base = t * block_steps

    def step(s, h):
        row = pl.multiple_of(s * bp, bp)
        gi = gi_ref[pl.ds(row, bp), :]                           # (Bp, 3H)
        gh = jnp.dot(h, whh_ref[...],
                     preferred_element_type=jnp.float32) + bhh   # (Bp, 3H)
        r = jax.nn.sigmoid(gi[:, :hidden] + gh[:, :hidden])
        z = jax.nn.sigmoid(gi[:, hidden:2 * hidden] + gh[:, hidden:2 * hidden])
        n = jnp.tanh(gi[:, 2 * hidden:] + r * gh[:, 2 * hidden:])
        h_new = (1.0 - z) * n + z * h
        # Mask zero-padded time steps so the recurrence stops at seq_len.
        return jnp.where(t_base + s < seq_len, h_new, h)

    # Short fixed trip count -> fully unrolled so Mosaic schedules across steps.
    h = lax.fori_loop(0, block_steps, step, h_ref[...], unroll=True)
    h_ref[...] = h

    @pl.when(t == pl.num_programs(0) - 1)
    def _():
        # Dropout is an inference-mode identity.  fc head padded to FC_PAD lanes
        # so the final store is an unmasked, lane-dense vst.
        logits = (jnp.dot(h, wfc_ref[...], preferred_element_type=jnp.float32)
                  + bfc_ref[...])
        out_ref[...] = jax.nn.sigmoid(logits).astype(out_ref.dtype)


def prepare_params(params):
    """One-time layout prep: transposes / padding done here, NOT per call."""
    Wih, bih, Whh, bhh, Wfc, bfc = params
    H = Whh.shape[1]
    wfc_t = jnp.zeros((H, FC_PAD), jnp.float32).at[:, :2].set(
        jnp.asarray(Wfc.T, jnp.float32))
    bfc_p = jnp.zeros((1, FC_PAD), jnp.float32).at[0, :2].set(
        bfc.astype(jnp.float32))
    return dict(
        wih_t=jnp.asarray(Wih.T, jnp.float32),            # (I, 3H)
        bih=bih.reshape(1, -1).astype(jnp.float32),       # (1, 3H)
        whh_t=jnp.asarray(Whh.T, jnp.float32),            # (H, 3H)
        bhh=bhh.reshape(1, -1).astype(jnp.float32),       # (1, 3H)
        wfc_t=wfc_t,                                      # (H, FC_PAD)
        bfc=bfc_p,                                        # (1, FC_PAD)
    )


def recurrent_forward(x, prep, labels=None, block_steps=8):
    """x: (B, T, I) batch_first, matching the PyTorch module's forward(x)."""
    B, T, I = x.shape
    H = prep["whh_t"].shape[0]
    Bp = max(8, -(-B // 8) * 8)            # pad batch rows to full sublanes
    Tb = min(block_steps, T)
    Tpad = -(-T // Tb) * Tb

    # --- glue: time-major, pad batch/time, flatten to a 2-D (Tpad*Bp, I) slab ---
    xs = jnp.transpose(x, (1, 0, 2))                         # (T, B, I)
    xs = jnp.pad(xs, ((0, Tpad - T), (0, Bp - B), (0, 0)))   # (Tpad, Bp, I)
    xs2d = xs.reshape(Tpad * Bp, I).astype(jnp.float32)

    kernel = functools.partial(gru_block_kernel, seq_len=T, block_steps=Tb)
    out = pl.pallas_call(
        kernel,
        out_shape=jax.ShapeDtypeStruct((Bp, FC_PAD), jnp.float32),
        grid_spec=pltpu.PrefetchScalarGridSpec(
            num_scalar_prefetch=0,
            grid=(Tpad // Tb,),
            in_specs=[
                pl.BlockSpec((Tb * Bp, I), lambda t: (t, 0)),     # streamed x
                pl.BlockSpec((I, 3 * H), lambda t: (0, 0)),       # resident
                pl.BlockSpec((1, 3 * H), lambda t: (0, 0)),
                pl.BlockSpec((H, 3 * H), lambda t: (0, 0)),
                pl.BlockSpec((1, 3 * H), lambda t: (0, 0)),
                pl.BlockSpec((H, FC_PAD), lambda t: (0, 0)),
                pl.BlockSpec((1, FC_PAD), lambda t: (0, 0)),
            ],
            out_specs=pl.BlockSpec((Bp, FC_PAD), lambda t: (0, 0)),
            scratch_shapes=[pltpu.VMEM((Bp, H), jnp.float32),            # h state
                            pltpu.VMEM((Tb * Bp, 3 * H), jnp.float32)],  # gi block
        ),
        compiler_params=pltpu.CompilerParams(
            dimension_semantics=("arbitrary",),      # recurrence is sequential
            vmem_limit_bytes=48 * 1024 * 1024),      # headroom on v7x's 64 MiB
    )(xs2d, prep["wih_t"], prep["bih"], prep["whh_t"], prep["bhh"],
      prep["wfc_t"], prep["bfc"])
    out = out[:B, :2]

    if labels is None:
        return out
    labels = labels.astype(jnp.float32)
    loss = (jnp.log(out[:, 0] + 1e-10) * labels
            + jnp.log((1.0 - out)[:, 0] + 1e-10) * (1.0 - labels))
    return -loss.mean(), out


# ---------------- deterministic parameter init (PyTorch GRU conventions) --------
def init_params(key, input_size, hidden):
    ks = jax.random.split(key, 6)
    b = float(hidden) ** -0.5

    def u(k, shape, bound):
        return jax.random.uniform(k, shape, jnp.float32, -bound, bound)

    Wih = u(ks[0], (3 * hidden, input_size), b)   # gate order: r, z, n (PyTorch)
    bih = u(ks[1], (3 * hidden,), b)
    Whh = u(ks[2], (3 * hidden, hidden), b)
    bhh = u(ks[3], (3 * hidden,), b)
    Wfc = u(ks[4], (2, hidden), b)                # Linear(l1, 2)
    bfc = u(ks[5], (2,), b)
    return Wih, bih, Whh, bhh, Wfc, bfc


# ---------------- pure-JAX reference with exact PyTorch GRU semantics -----------
def ref_forward(x, params):
    Wih, bih, Whh, bhh, Wfc, bfc = params
    B, T, I = x.shape
    H = Whh.shape[1]
    hp = jax.lax.Precision.HIGHEST
    h = jnp.zeros((B, H), jnp.float32)
    for t in range(T):
        gi = jnp.dot(x[:, t, :], Wih.T, precision=hp) + bih
        gh = jnp.dot(h, Whh.T, precision=hp) + bhh
        r = jax.nn.sigmoid(gi[:, :H] + gh[:, :H])
        z = jax.nn.sigmoid(gi[:, H:2 * H] + gh[:, H:2 * H])
        n = jnp.tanh(gi[:, 2 * H:] + r * gh[:, 2 * H:])
        h = (1.0 - z) * n + z * h
    logits = jnp.dot(h, Wfc.T, precision=hp) + bfc
    return jax.nn.sigmoid(logits)


if __name__ == "__main__":
    B, T, I = 2, 8, 16      # batch, xshape1 (seq length), xshape2 (features)
    H = 256                 # l1 (hidden size); kept small for the demo
    key = jax.random.PRNGKey(0)
    kx, kp = jax.random.split(key)
    x = jax.random.normal(kx, (B, T, I), jnp.float32)
    params = init_params(kp, I, H)
    prep = prepare_params(params)

    out = recurrent_forward(x, prep)
    out = jax.block_until_ready(out)
    assert out.shape == (B, 2), out.shape

    ref = ref_forward(x, params)
    # Kernel-side MXU f32 path vs XLA 'highest' reference can differ ~1e-3
    # through the 8-step recurrence; keep a small margin.
    if not jnp.allclose(out, ref, rtol=5e-3, atol=5e-3):
        raise AssertionError(f"mismatch: kernel={out}, ref={ref}")
    print("KERNEL_OK")
</pallas_src>

<mosaic_0001>
module attributes {stable_mosaic.version = 11 : i64} {
  func.func @gru_block_kernel(%arg0: i32, %arg1: memref<64x16xf32, #tpu.memory_space<vmem>>, %arg2: memref<16x768xf32, #tpu.memory_space<vmem>>, %arg3: memref<1x768xf32, #tpu.memory_space<vmem>>, %arg4: memref<256x768xf32, #tpu.memory_space<vmem>>, %arg5: memref<1x768xf32, #tpu.memory_space<vmem>>, %arg6: memref<256x128xf32, #tpu.memory_space<vmem>>, %arg7: memref<1x128xf32, #tpu.memory_space<vmem>>, %arg8: memref<8x128xf32, #tpu.memory_space<vmem>>, %arg9: memref<8x256xf32, #tpu.memory_space<vmem>>, %arg10: memref<64x768xf32, #tpu.memory_space<vmem>>) attributes {dimension_semantics = [#tpu.dimension_semantics<arbitrary>], iteration_bounds = array<i64: 1>, scalar_prefetch = 0 : i64, scratch_operands = 2 : i64, tpu.core_type = #tpu.core_type<tc>, window_params = [{transform_indices = @transform_0, window_bounds = array<i64: 64, 16>}, {pipeline_mode = #tpu.pipeline_mode<synchronous>, transform_indices = @transform_1, window_bounds = array<i64: 16, 768>}, {pipeline_mode = #tpu.pipeline_mode<synchronous>, transform_indices = @transform_2, window_bounds = array<i64: 1, 768>}, {pipeline_mode = #tpu.pipeline_mode<synchronous>, transform_indices = @transform_3, window_bounds = array<i64: 256, 768>}, {pipeline_mode = #tpu.pipeline_mode<synchronous>, transform_indices = @transform_4, window_bounds = array<i64: 1, 768>}, {pipeline_mode = #tpu.pipeline_mode<synchronous>, transform_indices = @transform_5, window_bounds = array<i64: 256, 128>}, {pipeline_mode = #tpu.pipeline_mode<synchronous>, transform_indices = @transform_6, window_bounds = array<i64: 1, 128>}, {pipeline_mode = #tpu.pipeline_mode<synchronous>, transform_indices = @transform_7, window_bounds = array<i64: 8, 128>}]} {
    %c0_i32 = arith.constant 0 : i32
    %0 = arith.cmpi eq, %arg0, %c0_i32 : i32
    %1 = arith.extui %0 : i1 to i32
    %c0_i32_0 = arith.constant 0 : i32
    %2 = arith.cmpi ne, %1, %c0_i32_0 : i32
    scf.if %2 {
      %cst_90 = arith.constant 0.000000e+00 : f32
      %307 = vector.broadcast %cst_90 : f32 to vector<8x256xf32>
      %c0_91 = arith.constant 0 : index
      %c0_92 = arith.constant 0 : index
      %308 = vector.load %arg9[%c0_91, %c0_92] : memref<8x256xf32, #tpu.memory_space<vmem>>, vector<8x256xf32>
      tpu.vector_store %arg9[%c0_91, %c0_92], %307 {strides = array<i32>} : memref<8x256xf32, #tpu.memory_space<vmem>>, vector<8x256xf32>,
    } else {
    }
    %c0 = arith.constant 0 : index
    %c0_1 = arith.constant 0 : index
    %3 = vector.load %arg1[%c0, %c0_1] : memref<64x16xf32, #tpu.memory_space<vmem>>, vector<64x16xf32>
    %c0_2 = arith.constant 0 : index
    %c0_3 = arith.constant 0 : index
    %4 = vector.load %arg2[%c0_2, %c0_3] : memref<16x768xf32, #tpu.memory_space<vmem>>, vector<16x768xf32>
    %cst = arith.constant dense<0.000000e+00> : vector<64x768xf32>
    %5 = tpu.matmul %3, %4, %cst {dimension_numbers = #tpu.dot_dimension_numbers<[1], [0], [0], [1], [0, 0, 1, 1], [], []>} : vector<64x16xf32>, vector<16x768xf32>, vector<64x768xf32> -> vector<64x768xf32>
    %c0_4 = arith.constant 0 : index
    %c0_5 = arith.constant 0 : index
    %6 = vector.load %arg3[%c0_4, %c0_5] : memref<1x768xf32, #tpu.memory_space<vmem>>, vector<1x768xf32>
    %7 = vector.broadcast %6 : vector<1x768xf32> to vector<64x768xf32>
    %8 = arith.addf %5, %7 : vector<64x768xf32>
    %c0_6 = arith.constant 0 : index
    %c0_7 = arith.constant 0 : index
    %9 = vector.load %arg10[%c0_6, %c0_7] : memref<64x768xf32, #tpu.memory_space<vmem>>, vector<64x768xf32>
    tpu.vector_store %arg10[%c0_6, %c0_7], %8 {strides = array<i32>} : memref<64x768xf32, #tpu.memory_space<vmem>>, vector<64x768xf32>,
    %c0_8 = arith.constant 0 : index
    %c0_9 = arith.constant 0 : index
    %10 = vector.load %arg5[%c0_8, %c0_9] : memref<1x768xf32, #tpu.memory_space<vmem>>, vector<1x768xf32>
    %11 = vector.shape_cast %10 : vector<1x768xf32> to vector<1x768xf32>
    %12 = vector.broadcast %11 : vector<1x768xf32> to vector<8x768xf32>
    %c8_i32 = arith.constant 8 : i32
    %13 = arith.muli %arg0, %c8_i32 : i32
    %c0_10 = arith.constant 0 : index
    %c0_11 = arith.constant 0 : index
    %14 = vector.load %arg9[%c0_10, %c0_11] : memref<8x256xf32, #tpu.memory_space<vmem>>, vector<8x256xf32>
    %c0_i32_12 = arith.constant 0 : i32
    %c8_i32_13 = arith.constant 8 : i32
    %15 = arith.muli %c0_i32_12, %c8_i32_13 : i32
    %16 = tpu.assume_multiple %15, 8 : i32
    %17 = arith.index_cast %16 : i32 to index
    %c0_14 = arith.constant 0 : index
    %18 = vector.load %arg10[%17, %c0_14] : memref<64x768xf32, #tpu.memory_space<vmem>>, vector<8x768xf32>
    %c0_15 = arith.constant 0 : index
    %c0_16 = arith.constant 0 : index
    %19 = vector.load %arg4[%c0_15, %c0_16] : memref<256x768xf32, #tpu.memory_space<vmem>>, vector<256x768xf32>
    %cst_17 = arith.constant dense<0.000000e+00> : vector<8x768xf32>
    %20 = tpu.matmul %14, %19, %cst_17 {dimension_numbers = #tpu.dot_dimension_numbers<[1], [0], [0], [1], [0, 0, 1, 1], [], []>} : vector<8x256xf32>, vector<256x768xf32>, vector<8x768xf32> -> vector<8x768xf32>
    %21 = arith.addf %20, %12 : vector<8x768xf32>
    %22 = vector.extract_strided_slice %18 {offsets = [0, 0], sizes = [8, 256], strides = [1, 1]} : vector<8x768xf32> to vector<8x256xf32>
    %23 = vector.extract_strided_slice %21 {offsets = [0, 0], sizes = [8, 256], strides = [1, 1]} : vector<8x768xf32> to vector<8x256xf32>
    %24 = arith.addf %22, %23 : vector<8x256xf32>
    %25 = arith.negf %24 : vector<8x256xf32>
    %26 = math.exp %25 : vector<8x256xf32>
    %cst_18 = arith.constant 1.000000e+00 : f32
    %27 = vector.broadcast %cst_18 : f32 to vector<8x256xf32>
    %28 = arith.addf %27, %26 : vector<8x256xf32>
    %29 = arith.divf %27, %28 : vector<8x256xf32>
    %30 = vector.extract_strided_slice %18 {offsets = [0, 256], sizes = [8, 256], strides = [1, 1]} : vector<8x768xf32> to vector<8x256xf32>
    %31 = vector.extract_strided_slice %21 {offsets = [0, 256], sizes = [8, 256], strides = [1, 1]} : vector<8x768xf32> to vector<8x256xf32>
    %32 = arith.addf %30, %31 : vector<8x256xf32>
    %33 = arith.negf %32 : vector<8x256xf32>
    %34 = math.exp %33 : vector<8x256xf32>
    %cst_19 = arith.constant 1.000000e+00 : f32
    %35 = vector.broadcast %cst_19 : f32 to vector<8x256xf32>
    %36 = arith.addf %35, %34 : vector<8x256xf32>
    %37 = arith.divf %35, %36 : vector<8x256xf32>
    %38 = vector.extract_strided_slice %18 {offsets = [0, 512], sizes = [8, 256], strides = [1, 1]} : vector<8x768xf32> to vector<8x256xf32>
    %39 = vector.extract_strided_slice %21 {offsets = [0, 512], sizes = [8, 256], strides = [1, 1]} : vector<8x768xf32> to vector<8x256xf32>
    %40 = arith.mulf %29, %39 : vector<8x256xf32>
    %41 = arith.addf %38, %40 : vector<8x256xf32>
    %42 = math.tanh %41 : vector<8x256xf32>
    %cst_20 = arith.constant 1.000000e+00 : f32
    %43 = vector.broadcast %cst_20 : f32 to vector<8x256xf32>
    %44 = arith.subf %43, %37 : vector<8x256xf32>
    %45 = arith.mulf %44, %42 : vector<8x256xf32>
    %46 = arith.mulf %37, %14 : vector<8x256xf32>
    %47 = arith.addf %45, %46 : vector<8x256xf32>
    %48 = arith.addi %13, %c0_i32_12 : i32
    %c8_i32_21 = arith.constant 8 : i32
    %49 = arith.cmpi slt, %48, %c8_i32_21 : i32
    %50 = arith.select %49, %47, %14 : vector<8x256xf32>
    %c1_i32 = arith.constant 1 : i32
    %c8_i32_22 = arith.constant 8 : i32
    %51 = arith.muli %c1_i32, %c8_i32_22 : i32
    %52 = tpu.assume_multiple %51, 8 : i32
    %53 = arith.index_cast %52 : i32 to index
    %c0_23 = arith.constant 0 : index
    %54 = vector.load %arg10[%53, %c0_23] : memref<64x768xf32, #tpu.memory_space<vmem>>, vector<8x768xf32>
    %c0_24 = arith.constant 0 : index
    %c0_25 = arith.constant 0 : index
    %55 = vector.load %arg4[%c0_24, %c0_25] : memref<256x768xf32, #tpu.memory_space<vmem>>, vector<256x768xf32>
    %cst_26 = arith.constant dense<0.000000e+00> : vector<8x768xf32>
    %56 = tpu.matmul %50, %55, %cst_26 {dimension_numbers = #tpu.dot_dimension_numbers<[1], [0], [0], [1], [0, 0, 1, 1], [], []>} : vector<8x256xf32>, vector<256x768xf32>, vector<8x768xf32> -> vector<8x768xf32>
    %57 = arith.addf %56, %12 : vector<8x768xf32>
    %58 = vector.extract_strided_slice %54 {offsets = [0, 0], sizes = [8, 256], strides = [1, 1]} : vector<8x768xf32> to vector<8x256xf32>
    %59 = vector.extract_strided_slice %57 {offsets = [0, 0], sizes = [8, 256], strides = [1, 1]} : vector<8x768xf32> to vector<8x256xf32>
    %60 = arith.addf %58, %59 : vector<8x256xf32>
    %61 = arith.negf %60 : vector<8x256xf32>
    %62 = math.exp %61 : vector<8x256xf32>
    %cst_27 = arith.constant 1.000000e+00 : f32
    %63 = vector.broadcast %cst_27 : f32 to vector<8x256xf32>
    %64 = arith.addf %63, %62 : vector<8x256xf32>
    %65 = arith.divf %63, %64 : vector<8x256xf32>
    %66 = vector.extract_strided_slice %54 {offsets = [0, 256], sizes = [8, 256], strides = [1, 1]} : vector<8x768xf32> to vector<8x256xf32>
    %67 = vector.extract_strided_slice %57 {offsets = [0, 256], sizes = [8, 256], strides = [1, 1]} : vector<8x768xf32> to vector<8x256xf32>
    %68 = arith.addf %66, %67 : vector<8x256xf32>
    %69 = arith.negf %68 : vector<8x256xf32>
    %70 = math.exp %69 : vector<8x256xf32>
    %cst_28 = arith.constant 1.000000e+00 : f32
    %71 = vector.broadcast %cst_28 : f32 to vector<8x256xf32>
    %72 = arith.addf %71, %70 : vector<8x256xf32>
    %73 = arith.divf %71, %72 : vector<8x256xf32>
    %74 = vector.extract_strided_slice %54 {offsets = [0, 512], sizes = [8, 256], strides = [1, 1]} : vector<8x768xf32> to vector<8x256xf32>
    %75 = vector.extract_strided_slice %57 {offsets = [0, 512], sizes = [8, 256], strides = [1, 1]} : vector<8x768xf32> to vector<8x256xf32>
    %76 = arith.mulf %65, %75 : vector<8x256xf32>
    %77 = arith.addf %74, %76 : vector<8x256xf32>
    %78 = math.tanh %77 : vector<8x256xf32>
    %cst_29 = arith.constant 1.000000e+00 : f32
    %79 = vector.broadcast %cst_29 : f32 to vector<8x256xf32>
    %80 = arith.subf %79, %73 : vector<8x256xf32>
    %81 = arith.mulf %80, %78 : vector<8x256xf32>
    %82 = arith.mulf %73, %50 : vector<8x256xf32>
    %83 = arith.addf %81, %82 : vector<8x256xf32>
    %84 = arith.addi %13, %c1_i32 : i32
    %c8_i32_30 = arith.constant 8 : i32
    %85 = arith.cmpi slt, %84, %c8_i32_30 : i32
    %86 = arith.select %85, %83, %50 : vector<8x256xf32>
    %c2_i32 = arith.constant 2 : i32
    %c8_i32_31 = arith.constant 8 : i32
    %87 = arith.muli %c2_i32, %c8_i32_31 : i32
    %88 = tpu.assume_multiple %87, 8 : i32
    %89 = arith.index_cast %88 : i32 to index
    %c0_32 = arith.constant 0 : index
    %90 = vector.load %arg10[%89, %c0_32] : memref<64x768xf32, #tpu.memory_space<vmem>>, vector<8x768xf32>
    %c0_33 = arith.constant 0 : index
    %c0_34 = arith.constant 0 : index
    %91 = vector.load %arg4[%c0_33, %c0_34] : memref<256x768xf32, #tpu.memory_space<vmem>>, vector<256x768xf32>
    %cst_35 = arith.constant dense<0.000000e+00> : vector<8x768xf32>
    %92 = tpu.matmul %86, %91, %cst_35 {dimension_numbers = #tpu.dot_dimension_numbers<[1], [0], [0], [1], [0, 0, 1, 1], [], []>} : vector<8x256xf32>, vector<256x768xf32>, vector<8x768xf32> -> vector<8x768xf32>
    %93 = arith.addf %92, %12 : vector<8x768xf32>
    %94 = vector.extract_strided_slice %90 {offsets = [0, 0], sizes = [8, 256], strides = [1, 1]} : vector<8x768xf32> to vector<8x256xf32>
    %95 = vector.extract_strided_slice %93 {offsets = [0, 0], sizes = [8, 256], strides = [1, 1]} : vector<8x768xf32> to vector<8x256xf32>
    %96 = arith.addf %94, %95 : vector<8x256xf32>
    %97 = arith.negf %96 : vector<8x256xf32>
    %98 = math.exp %97 : vector<8x256xf32>
    %cst_36 = arith.constant 1.000000e+00 : f32
    %99 = vector.broadcast %cst_36 : f32 to vector<8x256xf32>
    %100 = arith.addf %99, %98 : vector<8x256xf32>
    %101 = arith.divf %99, %100 : vector<8x256xf32>
    %102 = vector.extract_strided_slice %90 {offsets = [0, 256], sizes = [8, 256], strides = [1, 1]} : vector<8x768xf32> to vector<8x256xf32>
    %103 = vector.extract_strided_slice %93 {offsets = [0, 256], sizes = [8, 256], strides = [1, 1]} : vector<8x768xf32> to vector<8x256xf32>
    %104 = arith.addf %102, %103 : vector<8x256xf32>
    %105 = arith.negf %104 : vector<8x256xf32>
    %106 = math.exp %105 : vector<8x256xf32>
    %cst_37 = arith.constant 1.000000e+00 : f32
    %107 = vector.broadcast %cst_37 : f32 to vector<8x256xf32>
    %108 = arith.addf %107, %106 : vector<8x256xf32>
    %109 = arith.divf %107, %108 : vector<8x256xf32>
    %110 = vector.extract_strided_slice %90 {offsets = [0, 512], sizes = [8, 256], strides = [1, 1]} : vector<8x768xf32> to vector<8x256xf32>
    %111 = vector.extract_strided_slice %93 {offsets = [0, 512], sizes = [8, 256], strides = [1, 1]} : vector<8x768xf32> to vector<8x256xf32>
    %112 = arith.mulf %101, %111 : vector<8x256xf32>
    %113 = arith.addf %110, %112 : vector<8x256xf32>
    %114 = math.tanh %113 : vector<8x256xf32>
    %cst_38 = arith.constant 1.000000e+00 : f32
    %115 = vector.broadcast %cst_38 : f32 to vector<8x256xf32>
    %116 = arith.subf %115, %109 : vector<8x256xf32>
    %117 = arith.mulf %116, %114 : vector<8x256xf32>
    %118 = arith.mulf %109, %86 : vector<8x256xf32>
    %119 = arith.addf %117, %118 : vector<8x256xf32>
    %120 = arith.addi %13, %c2_i32 : i32
    %c8_i32_39 = arith.constant 8 : i32
    %121 = arith.cmpi slt, %120, %c8_i32_39 : i32
    %122 = arith.select %121, %119, %86 : vector<8x256xf32>
    %c3_i32 = arith.constant 3 : i32
    %c8_i32_40 = arith.constant 8 : i32
    %123 = arith.muli %c3_i32, %c8_i32_40 : i32
    %124 = tpu.assume_multiple %123, 8 : i32
    %125 = arith.index_cast %124 : i32 to index
    %c0_41 = arith.constant 0 : index
    %126 = vector.load %arg10[%125, %c0_41] : memref<64x768xf32, #tpu.memory_space<vmem>>, vector<8x768xf32>
    %c0_42 = arith.constant 0 : index
    %c0_43 = arith.constant 0 : index
    %127 = vector.load %arg4[%c0_42, %c0_43] : memref<256x768xf32, #tpu.memory_space<vmem>>, vector<256x768xf32>
    %cst_44 = arith.constant dense<0.000000e+00> : vector<8x768xf32>
    %128 = tpu.matmul %122, %127, %cst_44 {dimension_numbers = #tpu.dot_dimension_numbers<[1], [0], [0], [1], [0, 0, 1, 1], [], []>} : vector<8x256xf32>, vector<256x768xf32>, vector<8x768xf32> -> vector<8x768xf32>
    %129 = arith.addf %128, %12 : vector<8x768xf32>
    %130 = vector.extract_strided_slice %126 {offsets = [0, 0], sizes = [8, 256], strides = [1, 1]} : vector<8x768xf32> to vector<8x256xf32>
    %131 = vector.extract_strided_slice %129 {offsets = [0, 0], sizes = [8, 256], strides = [1, 1]} : vector<8x768xf32> to vector<8x256xf32>
    %132 = arith.addf %130, %131 : vector<8x256xf32>
    %133 = arith.negf %132 : vector<8x256xf32>
    %134 = math.exp %133 : vector<8x256xf32>
    %cst_45 = arith.constant 1.000000e+00 : f32
    %135 = vector.broadcast %cst_45 : f32 to vector<8x256xf32>
    %136 = arith.addf %135, %134 : vector<8x256xf32>
    %137 = arith.divf %135, %136 : vector<8x256xf32>
    %138 = vector.extract_strided_slice %126 {offsets = [0, 256], sizes = [8, 256], strides = [1, 1]} : vector<8x768xf32> to vector<8x256xf32>
    %139 = vector.extract_strided_slice %129 {offsets = [0, 256], sizes = [8, 256], strides = [1, 1]} : vector<8x768xf32> to vector<8x256xf32>
    %140 = arith.addf %138, %139 : vector<8x256xf32>
    %141 = arith.negf %140 : vector<8x256xf32>
    %142 = math.exp %141 : vector<8x256xf32>
    %cst_46 = arith.constant 1.000000e+00 : f32
    %143 = vector.broadcast %cst_46 : f32 to vector<8x256xf32>
    %144 = arith.addf %143, %142 : vector<8x256xf32>
    %145 = arith.divf %143, %144 : vector<8x256xf32>
    %146 = vector.extract_strided_slice %126 {offsets = [0, 512], sizes = [8, 256], strides = [1, 1]} : vector<8x768xf32> to vector<8x256xf32>
    %147 = vector.extract_strided_slice %129 {offsets = [0, 512], sizes = [8, 256], strides = [1, 1]} : vector<8x768xf32> to vector<8x256xf32>
    %148 = arith.mulf %137, %147 : vector<8x256xf32>
    %149 = arith.addf %146, %148 : vector<8x256xf32>
    %150 = math.tanh %149 : vector<8x256xf32>
    %cst_47 = arith.constant 1.000000e+00 : f32
    %151 = vector.broadcast %cst_47 : f32 to vector<8x256xf32>
    %152 = arith.subf %151, %145 : vector<8x256xf32>
    %153 = arith.mulf %152, %150 : vector<8x256xf32>
    %154 = arith.mulf %145, %122 : vector<8x256xf32>
    %155 = arith.addf %153, %154 : vector<8x256xf32>
    %156 = arith.addi %13, %c3_i32 : i32
    %c8_i32_48 = arith.constant 8 : i32
    %157 = arith.cmpi slt, %156, %c8_i32_48 : i32
    %158 = arith.select %157, %155, %122 : vector<8x256xf32>
    %c4_i32 = arith.constant 4 : i32
    %c8_i32_49 = arith.constant 8 : i32
    %159 = arith.muli %c4_i32, %c8_i32_49 : i32
    %160 = tpu.assume_multiple %159, 8 : i32
    %161 = arith.index_cast %160 : i32 to index
    %c0_50 = arith.constant 0 : index
    %162 = vector.load %arg10[%161, %c0_50] : memref<64x768xf32, #tpu.memory_space<vmem>>, vector<8x768xf32>
    %c0_51 = arith.constant 0 : index
    %c0_52 = arith.constant 0 : index
    %163 = vector.load %arg4[%c0_51, %c0_52] : memref<256x768xf32, #tpu.memory_space<vmem>>, vector<256x768xf32>
    %cst_53 = arith.constant dense<0.000000e+00> : vector<8x768xf32>
    %164 = tpu.matmul %158, %163, %cst_53 {dimension_numbers = #tpu.dot_dimension_numbers<[1], [0], [0], [1], [0, 0, 1, 1], [], []>} : vector<8x256xf32>, vector<256x768xf32>, vector<8x768xf32> -> vector<8x768xf32>
    %165 = arith.addf %164, %12 : vector<8x768xf32>
    %166 = vector.extract_strided_slice %162 {offsets = [0, 0], sizes = [8, 256], strides = [1, 1]} : vector<8x768xf32> to vector<8x256xf32>
    %167 = vector.extract_strided_slice %165 {offsets = [0, 0], sizes = [8, 256], strides = [1, 1]} : vector<8x768xf32> to vector<8x256xf32>
    %168 = arith.addf %166, %167 : vector<8x256xf32>
    %169 = arith.negf %168 : vector<8x256xf32>
    %170 = math.exp %169 : vector<8x256xf32>
    %cst_54 = arith.constant 1.000000e+00 : f32
    %171 = vector.broadcast %cst_54 : f32 to vector<8x256xf32>
    %172 = arith.addf %171, %170 : vector<8x256xf32>
    %173 = arith.divf %171, %172 : vector<8x256xf32>
    %174 = vector.extract_strided_slice %162 {offsets = [0, 256], sizes = [8, 256], strides = [1, 1]} : vector<8x768xf32> to vector<8x256xf32>
    %175 = vector.extract_strided_slice %165 {offsets = [0, 256], sizes = [8, 256], strides = [1, 1]} : vector<8x768xf32> to vector<8x256xf32>
    %176 = arith.addf %174, %175 : vector<8x256xf32>
    %177 = arith.negf %176 : vector<8x256xf32>
    %178 = math.exp %177 : vector<8x256xf32>
    %cst_55 = arith.constant 1.000000e+00 : f32
    %179 = vector.broadcast %cst_55 : f32 to vector<8x256xf32>
    %180 = arith.addf %179, %178 : vector<8x256xf32>
    %181 = arith.divf %179, %180 : vector<8x256xf32>
    %182 = vector.extract_strided_slice %162 {offsets = [0, 512], sizes = [8, 256], strides = [1, 1]} : vector<8x768xf32> to vector<8x256xf32>
    %183 = vector.extract_strided_slice %165 {offsets = [0, 512], sizes = [8, 256], strides = [1, 1]} : vector<8x768xf32> to vector<8x256xf32>
    %184 = arith.mulf %173, %183 : vector<8x256xf32>
    %185 = arith.addf %182, %184 : vector<8x256xf32>
    %186 = math.tanh %185 : vector<8x256xf32>
    %cst_56 = arith.constant 1.000000e+00 : f32
    %187 = vector.broadcast %cst_56 : f32 to vector<8x256xf32>
    %188 = arith.subf %187, %181 : vector<8x256xf32>
    %189 = arith.mulf %188, %186 : vector<8x256xf32>
    %190 = arith.mulf %181, %158 : vector<8x256xf32>
    %191 = arith.addf %189, %190 : vector<8x256xf32>
    %192 = arith.addi %13, %c4_i32 : i32
    %c8_i32_57 = arith.constant 8 : i32
    %193 = arith.cmpi slt, %192, %c8_i32_57 : i32
    %194 = arith.select %193, %191, %158 : vector<8x256xf32>
    %c5_i32 = arith.constant 5 : i32
    %c8_i32_58 = arith.constant 8 : i32
    %195 = arith.muli %c5_i32, %c8_i32_58 : i32
    %196 = tpu.assume_multiple %195, 8 : i32
    %197 = arith.index_cast %196 : i32 to index
    %c0_59 = arith.constant 0 : index
    %198 = vector.load %arg10[%197, %c0_59] : memref<64x768xf32, #tpu.memory_space<vmem>>, vector<8x768xf32>
    %c0_60 = arith.constant 0 : index
    %c0_61 = arith.constant 0 : index
    %199 = vector.load %arg4[%c0_60, %c0_61] : memref<256x768xf32, #tpu.memory_space<vmem>>, vector<256x768xf32>
    %cst_62 = arith.constant dense<0.000000e+00> : vector<8x768xf32>
    %200 = tpu.matmul %194, %199, %cst_62 {dimension_numbers = #tpu.dot_dimension_numbers<[1], [0], [0], [1], [0, 0, 1, 1], [], []>} : vector<8x256xf32>, vector<256x768xf32>, vector<8x768xf32> -> vector<8x768xf32>
    %201 = arith.addf %200, %12 : vector<8x768xf32>
    %202 = vector.extract_strided_slice %198 {offsets = [0, 0], sizes = [8, 256], strides = [1, 1]} : vector<8x768xf32> to vector<8x256xf32>
    %203 = vector.extract_strided_slice %201 {offsets = [0, 0], sizes = [8, 256], strides = [1, 1]} : vector<8x768xf32> to vector<8x256xf32>
    %204 = arith.addf %202, %203 : vector<8x256xf32>
    %205 = arith.negf %204 : vector<8x256xf32>
    %206 = math.exp %205 : vector<8x256xf32>
    %cst_63 = arith.constant 1.000000e+00 : f32
    %207 = vector.broadcast %cst_63 : f32 to vector<8x256xf32>
    %208 = arith.addf %207, %206 : vector<8x256xf32>
    %209 = arith.divf %207, %208 : vector<8x256xf32>
    %210 = vector.extract_strided_slice %198 {offsets = [0, 256], sizes = [8, 256], strides = [1, 1]} : vector<8x768xf32> to vector<8x256xf32>
    %211 = vector.extract_strided_slice %201 {offsets = [0, 256], sizes = [8, 256], strides = [1, 1]} : vector<8x768xf32> to vector<8x256xf32>
    %212 = arith.addf %210, %211 : vector<8x256xf32>
    %213 = arith.negf %212 : vector<8x256xf32>
    %214 = math.exp %213 : vector<8x256xf32>
    %cst_64 = arith.constant 1.000000e+00 : f32
    %215 = vector.broadcast %cst_64 : f32 to vector<8x256xf32>
    %216 = arith.addf %215, %214 : vector<8x256xf32>
    %217 = arith.divf %215, %216 : vector<8x256xf32>
    %218 = vector.extract_strided_slice %198 {offsets = [0, 512], sizes = [8, 256], strides = [1, 1]} : vector<8x768xf32> to vector<8x256xf32>
    %219 = vector.extract_strided_slice %201 {offsets = [0, 512], sizes = [8, 256], strides = [1, 1]} : vector<8x768xf32> to vector<8x256xf32>
    %220 = arith.mulf %209, %219 : vector<8x256xf32>
    %221 = arith.addf %218, %220 : vector<8x256xf32>
    %222 = math.tanh %221 : vector<8x256xf32>
    %cst_65 = arith.constant 1.000000e+00 : f32
    %223 = vector.broadcast %cst_65 : f32 to vector<8x256xf32>
    %224 = arith.subf %223, %217 : vector<8x256xf32>
    %225 = arith.mulf %224, %222 : vector<8x256xf32>
    %226 = arith.mulf %217, %194 : vector<8x256xf32>
    %227 = arith.addf %225, %226 : vector<8x256xf32>
    %228 = arith.addi %13, %c5_i32 : i32
    %c8_i32_66 = arith.constant 8 : i32
    %229 = arith.cmpi slt, %228, %c8_i32_66 : i32
    %230 = arith.select %229, %227, %194 : vector<8x256xf32>
    %c6_i32 = arith.constant 6 : i32
    %c8_i32_67 = arith.constant 8 : i32
    %231 = arith.muli %c6_i32, %c8_i32_67 : i32
    %232 = tpu.assume_multiple %231, 8 : i32
    %233 = arith.index_cast %232 : i32 to index
    %c0_68 = arith.constant 0 : index
    %234 = vector.load %arg10[%233, %c0_68] : memref<64x768xf32, #tpu.memory_space<vmem>>, vector<8x768xf32>
    %c0_69 = arith.constant 0 : index
    %c0_70 = arith.constant 0 : index
    %235 = vector.load %arg4[%c0_69, %c0_70] : memref<256x768xf32, #tpu.memory_space<vmem>>, vector<256x768xf32>
    %cst_71 = arith.constant dense<0.000000e+00> : vector<8x768xf32>
    %236 = tpu.matmul %230, %235, %cst_71 {dimension_numbers = #tpu.dot_dimension_numbers<[1], [0], [0], [1], [0, 0, 1, 1], [], []>} : vector<8x256xf32>, vector<256x768xf32>, vector<8x768xf32> -> vector<8x768xf32>
    %237 = arith.addf %236, %12 : vector<8x768xf32>
    %238 = vector.extract_strided_slice %234 {offsets = [0, 0], sizes = [8, 256], strides = [1, 1]} : vector<8x768xf32> to vector<8x256xf32>
    %239 = vector.extract_strided_slice %237 {offsets = [0, 0], sizes = [8, 256], strides = [1, 1]} : vector<8x768xf32> to vector<8x256xf32>
    %240 = arith.addf %238, %239 : vector<8x256xf32>
    %241 = arith.negf %240 : vector<8x256xf32>
    %242 = math.exp %241 : vector<8x256xf32>
    %cst_72 = arith.constant 1.000000e+00 : f32
    %243 = vector.broadcast %cst_72 : f32 to vector<8x256xf32>
    %244 = arith.addf %243, %242 : vector<8x256xf32>
    %245 = arith.divf %243, %244 : vector<8x256xf32>
    %246 = vector.extract_strided_slice %234 {offsets = [0, 256], sizes = [8, 256], strides = [1, 1]} : vector<8x768xf32> to vector<8x256xf32>
    %247 = vector.extract_strided_slice %237 {offsets = [0, 256], sizes = [8, 256], strides = [1, 1]} : vector<8x768xf32> to vector<8x256xf32>
    %248 = arith.addf %246, %247 : vector<8x256xf32>
    %249 = arith.negf %248 : vector<8x256xf32>
    %250 = math.exp %249 : vector<8x256xf32>
    %cst_73 = arith.constant 1.000000e+00 : f32
    %251 = vector.broadcast %cst_73 : f32 to vector<8x256xf32>
    %252 = arith.addf %251, %250 : vector<8x256xf32>
    %253 = arith.divf %251, %252 : vector<8x256xf32>
    %254 = vector.extract_strided_slice %234 {offsets = [0, 512], sizes = [8, 256], strides = [1, 1]} : vector<8x768xf32> to vector<8x256xf32>
    %255 = vector.extract_strided_slice %237 {offsets = [0, 512], sizes = [8, 256], strides = [1, 1]} : vector<8x768xf32> to vector<8x256xf32>
    %256 = arith.mulf %245, %255 : vector<8x256xf32>
    %257 = arith.addf %254, %256 : vector<8x256xf32>
    %258 = math.tanh %257 : vector<8x256xf32>
    %cst_74 = arith.constant 1.000000e+00 : f32
    %259 = vector.broadcast %cst_74 : f32 to vector<8x256xf32>
    %260 = arith.subf %259, %253 : vector<8x256xf32>
    %261 = arith.mulf %260, %258 : vector<8x256xf32>
    %262 = arith.mulf %253, %230 : vector<8x256xf32>
    %263 = arith.addf %261, %262 : vector<8x256xf32>
    %264 = arith.addi %13, %c6_i32 : i32
    %c8_i32_75 = arith.constant 8 : i32
    %265 = arith.cmpi slt, %264, %c8_i32_75 : i32
    %266 = arith.select %265, %263, %230 : vector<8x256xf32>
    %c7_i32 = arith.constant 7 : i32
    %c8_i32_76 = arith.constant 8 : i32
    %267 = arith.muli %c7_i32, %c8_i32_76 : i32
    %268 = tpu.assume_multiple %267, 8 : i32
    %269 = arith.index_cast %268 : i32 to index
    %c0_77 = arith.constant 0 : index
    %270 = vector.load %arg10[%269, %c0_77] : memref<64x768xf32, #tpu.memory_space<vmem>>, vector<8x768xf32>
    %c0_78 = arith.constant 0 : index
    %c0_79 = arith.constant 0 : index
    %271 = vector.load %arg4[%c0_78, %c0_79] : memref<256x768xf32, #tpu.memory_space<vmem>>, vector<256x768xf32>
    %cst_80 = arith.constant dense<0.000000e+00> : vector<8x768xf32>
    %272 = tpu.matmul %266, %271, %cst_80 {dimension_numbers = #tpu.dot_dimension_numbers<[1], [0], [0], [1], [0, 0, 1, 1], [], []>} : vector<8x256xf32>, vector<256x768xf32>, vector<8x768xf32> -> vector<8x768xf32>
    %273 = arith.addf %272, %12 : vector<8x768xf32>
    %274 = vector.extract_strided_slice %270 {offsets = [0, 0], sizes = [8, 256], strides = [1, 1]} : vector<8x768xf32> to vector<8x256xf32>
    %275 = vector.extract_strided_slice %273 {offsets = [0, 0], sizes = [8, 256], strides = [1, 1]} : vector<8x768xf32> to vector<8x256xf32>
    %276 = arith.addf %274, %275 : vector<8x256xf32>
    %277 = arith.negf %276 : vector<8x256xf32>
    %278 = math.exp %277 : vector<8x256xf32>
    %cst_81 = arith.constant 1.000000e+00 : f32
    %279 = vector.broadcast %cst_81 : f32 to vector<8x256xf32>
    %280 = arith.addf %279, %278 : vector<8x256xf32>
    %281 = arith.divf %279, %280 : vector<8x256xf32>
    %282 = vector.extract_strided_slice %270 {offsets = [0, 256], sizes = [8, 256], strides = [1, 1]} : vector<8x768xf32> to vector<8x256xf32>
    %283 = vector.extract_strided_slice %273 {offsets = [0, 256], sizes = [8, 256], strides = [1, 1]} : vector<8x768xf32> to vector<8x256xf32>
    %284 = arith.addf %282, %283 : vector<8x256xf32>
    %285 = arith.negf %284 : vector<8x256xf32>
    %286 = math.exp %285 : vector<8x256xf32>
    %cst_82 = arith.constant 1.000000e+00 : f32
    %287 = vector.broadcast %cst_82 : f32 to vector<8x256xf32>
    %288 = arith.addf %287, %286 : vector<8x256xf32>
    %289 = arith.divf %287, %288 : vector<8x256xf32>
    %290 = vector.extract_strided_slice %270 {offsets = [0, 512], sizes = [8, 256], strides = [1, 1]} : vector<8x768xf32> to vector<8x256xf32>
    %291 = vector.extract_strided_slice %273 {offsets = [0, 512], sizes = [8, 256], strides = [1, 1]} : vector<8x768xf32> to vector<8x256xf32>
    %292 = arith.mulf %281, %291 : vector<8x256xf32>
    %293 = arith.addf %290, %292 : vector<8x256xf32>
    %294 = math.tanh %293 : vector<8x256xf32>
    %cst_83 = arith.constant 1.000000e+00 : f32
    %295 = vector.broadcast %cst_83 : f32 to vector<8x256xf32>
    %296 = arith.subf %295, %289 : vector<8x256xf32>
    %297 = arith.mulf %296, %294 : vector<8x256xf32>
    %298 = arith.mulf %289, %266 : vector<8x256xf32>
    %299 = arith.addf %297, %298 : vector<8x256xf32>
    %300 = arith.addi %13, %c7_i32 : i32
    %c8_i32_84 = arith.constant 8 : i32
    %301 = arith.cmpi slt, %300, %c8_i32_84 : i32
    %302 = arith.select %301, %299, %266 : vector<8x256xf32>
    %c8_i32_85 = arith.constant 8 : i32
    %c0_86 = arith.constant 0 : index
    %c0_87 = arith.constant 0 : index
    %303 = vector.load %arg9[%c0_86, %c0_87] : memref<8x256xf32, #tpu.memory_space<vmem>>, vector<8x256xf32>
    tpu.vector_store %arg9[%c0_86, %c0_87], %302 {strides = array<i32>} : memref<8x256xf32, #tpu.memory_space<vmem>>, vector<8x256xf32>,
    %c0_i32_88 = arith.constant 0 : i32
    %304 = arith.cmpi eq, %arg0, %c0_i32_88 : i32
    %305 = arith.extui %304 : i1 to i32
    %c0_i32_89 = arith.constant 0 : i32
    %306 = arith.cmpi ne, %305, %c0_i32_89 : i32
    scf.if %306 {
      %c0_90 = arith.constant 0 : index
      %c0_91 = arith.constant 0 : index
      %307 = vector.load %arg6[%c0_90, %c0_91] : memref<256x128xf32, #tpu.memory_space<vmem>>, vector<256x128xf32>
      %cst_92 = arith.constant dense<0.000000e+00> : vector<8x128xf32>
      %308 = tpu.matmul %302, %307, %cst_92 {dimension_numbers = #tpu.dot_dimension_numbers<[1], [0], [0], [1], [0, 0, 1, 1], [], []>} : vector<8x256xf32>, vector<256x128xf32>, vector<8x128xf32> -> vector<8x128xf32>
      %c0_93 = arith.constant 0 : index
      %c0_94 = arith.constant 0 : index
      %309 = vector.load %arg7[%c0_93, %c0_94] : memref<1x128xf32, #tpu.memory_space<vmem>>, vector<1x128xf32>
      %310 = vector.broadcast %309 : vector<1x128xf32> to vector<8x128xf32>
      %311 = arith.addf %308, %310 : vector<8x128xf32>
      %312 = arith.negf %311 : vector<8x128xf32>
      %313 = math.exp %312 : vector<8x128xf32>
      %cst_95 = arith.constant 1.000000e+00 : f32
      %314 = vector.broadcast %cst_95 : f32 to vector<8x128xf32>
      %315 = arith.addf %314, %313 : vector<8x128xf32>
      %316 = arith.divf %314, %315 : vector<8x128xf32>
      %c0_96 = arith.constant 0 : index
      %c0_97 = arith.constant 0 : index
      %317 = vector.load %arg8[%c0_96, %c0_97] : memref<8x128xf32, #tpu.memory_space<vmem>>, vector<8x128xf32>
      tpu.vector_store %arg8[%c0_96, %c0_97], %316 {strides = array<i32>} : memref<8x128xf32, #tpu.memory_space<vmem>>, vector<8x128xf32>,
    } else {
    }
    return
  }
  func.func @transform_0(%arg0: i32) -> (i32, i32) {
    %c0_i32 = arith.constant 0 : i32
    %c0_i32_0 = arith.constant 0 : i32
    return %arg0, %c0_i32 : i32, i32
  }
  func.func @transform_1(%arg0: i32) -> (i32, i32) {
    %c0_i32 = arith.constant 0 : i32
    %c0_i32_0 = arith.constant 0 : i32
    %c0_i32_1 = arith.constant 0 : i32
    return %c0_i32, %c0_i32_0 : i32, i32
  }
  func.func @transform_2(%arg0: i32) -> (i32, i32) {
    %c0_i32 = arith.constant 0 : i32
    %c0_i32_0 = arith.constant 0 : i32
    %c0_i32_1 = arith.constant 0 : i32
    return %c0_i32, %c0_i32_0 : i32, i32
  }
  func.func @transform_3(%arg0: i32) -> (i32, i32) {
    %c0_i32 = arith.constant 0 : i32
    %c0_i32_0 = arith.constant 0 : i32
    %c0_i32_1 = arith.constant 0 : i32
    return %c0_i32, %c0_i32_0 : i32, i32
  }
  func.func @transform_4(%arg0: i32) -> (i32, i32) {
    %c0_i32 = arith.constant 0 : i32
    %c0_i32_0 = arith.constant 0 : i32
    %c0_i32_1 = arith.constant 0 : i32
    return %c0_i32, %c0_i32_0 : i32, i32
  }
  func.func @transform_5(%arg0: i32) -> (i32, i32) {
    %c0_i32 = arith.constant 0 : i32
    %c0_i32_0 = arith.constant 0 : i32
    %c0_i32_1 = arith.constant 0 : i32
    return %c0_i32, %c0_i32_0 : i32, i32
  }
  func.func @transform_6(%arg0: i32) -> (i32, i32) {
    %c0_i32 = arith.constant 0 : i32
    %c0_i32_0 = arith.constant 0 : i32
    %c0_i32_1 = arith.constant 0 : i32
    return %c0_i32, %c0_i32_0 : i32, i32
  }
  func.func @transform_7(%arg0: i32) -> (i32, i32) {
    %c0_i32 = arith.constant 0 : i32
    %c0_i32_0 = arith.constant 0 : i32
    %c0_i32_1 = arith.constant 0 : i32
    return %c0_i32, %c0_i32_0 : i32, i32
  }
}

</mosaic_0001>

<llo_original>
// kernel: tpu_custom_call.1
$region0: #{tpu_custom_call.1}
  #allocation0 [shape = 'u32[]', space=smem, size = 0x4, offset = 0x4, fixed_abs, tag = 'smem constant byte address 0x4 - core index']
  #allocation1 [shape = 'u32[144,128]{1,0:T(1,128)}', space=vmem, size = 0x12000, scoped, tag = 'internal scratch']
  #allocation2 [shape = 'f32[8,256]{1,0:T(8,128)}', space=vmem, size = 0x2000, scoped, tag = 'scratch operand']
  #allocation3 [shape = 'f32[64,768]{1,0:T(8,128)}', space=vmem, size = 0x30000, scoped, tag = 'scratch operand']
  %s0 = inlined_call_operand.vmem [shape: f32[64,16], index: 0, kind: input, shape index: {}]
  %s1 = inlined_call_operand.hbm [shape: f32[16,768], index: 1, kind: input, shape index: {}]
  %s2 = inlined_call_operand.vmem [shape: f32[1,768], index: 2, kind: input, shape index: {}]
  %s3 = inlined_call_operand.hbm [shape: f32[256,768], index: 3, kind: input, shape index: {}]
  %s4 = inlined_call_operand.vmem [shape: f32[1,768], index: 4, kind: input, shape index: {}]
  %s5 = inlined_call_operand.hbm [shape: f32[256,128], index: 5, kind: input, shape index: {}]
  %s6 = inlined_call_operand.vmem [shape: f32[1,128], index: 6, kind: input, shape index: {}]
  %s7 = inlined_call_operand.hbm [shape: f32[8,128], index: 7, kind: output, shape index: {}]
  %s8 = sld [smem:[#allocation0]]
  $region58: #{tpu_custom_call.1} parent=0
    _
  %s10 = ssub.s32 1, %s8
  %s11 = scalar_select 0, %s10, %s8
  $region1: #{tpu_custom_call.1} parent=0
    #allocation4 [shape = 'u8[49152]{0}', space=vmem, size = 0xc000, scoped, tag = 'input window, operand 1, single buffered']
    #allocation5 [shape = 's32[1]{0}', space=sflag, size = 0x4, scoped, tag = 'scoped memory for tpu_custom_call.1']
    #allocation6 [shape = 's32[1]{0}', space=sflag, size = 0x4, scoped, tag = 'scoped memory for tpu_custom_call.1']
    #allocation7 [shape = 'u8[786432]{0}', space=vmem, size = 0xc0000, scoped, tag = 'input window, operand 3, single buffered']
    #allocation8 [shape = 's32[1]{0}', space=sflag, size = 0x4, scoped, tag = 'scoped memory for tpu_custom_call.1']
    #allocation9 [shape = 'u8[131072]{0}', space=vmem, size = 0x20000, scoped, tag = 'input window, operand 5, single buffered']
    #allocation10 [shape = 'u8[4096]{0}', space=vmem, size = 0x1000, scoped, tag = 'output window, operand 0, single buffered']
    %12 = vsyncpa [#allocation5], 0
    %13 = vsyncpa [#allocation8], 0
    %14 = vsyncpa [#allocation6], 0
    // Predicated region
    $region2: #{tpu_custom_call.1} parent=1 // pred_check
      _
    $region3: #{tpu_custom_call.1} parent=1 // pred_check_branch
      %16 = sbr.rel (0) target = $region5
    $region4: #{tpu_custom_call.1} parent=1 // pred_region
      _
    $region5: #{tpu_custom_call.1} parent=1 // pred_fallthru
      _
    // Predicated region
    $region6: #{tpu_custom_call.1} parent=1 // pred_check
      _
    $region7: #{tpu_custom_call.1} parent=1 // pred_check_branch
      %18 = sbr.rel (0) target = $region9
    $region8: #{tpu_custom_call.1} parent=1 // pred_region
      %s20 = ssub.s32 1536, 1536
      %21 = vsyncadd [#allocation5], %s20
      %s22 = sshll.u32 [#allocation4], 4
      %s23 = int_to_ptr.vmem [resolvable:$true] %s22
      %28 = dma.hbm_to_vmem [thread:$0]  %s1, 1536, %s23, [#allocation5], 768, 768, 48
    $region9: #{tpu_custom_call.1} parent=1 // pred_fallthru
      _
    // Predicated region
    $region10: #{tpu_custom_call.1} parent=1 // pred_check
      _
    $region11: #{tpu_custom_call.1} parent=1 // pred_check_branch
      %30 = sbr.rel (0) target = $region13
    $region12: #{tpu_custom_call.1} parent=1 // pred_region
      _
    $region13: #{tpu_custom_call.1} parent=1 // pred_fallthru
      _
    // Predicated region
    $region14: #{tpu_custom_call.1} parent=1 // pred_check
      _
    $region15: #{tpu_custom_call.1} parent=1 // pred_check_branch
      %32 = sbr.rel (0) target = $region17
    $region16: #{tpu_custom_call.1} parent=1 // pred_region
      %s34 = ssub.s32 24576, 24576
      %35 = vsyncadd [#allocation8], %s34
      %s36 = sshll.u32 [#allocation7], 4
      %s37 = int_to_ptr.vmem [resolvable:$true] %s36
      %42 = dma.hbm_to_vmem [thread:$0]  %s3, 24576, %s37, [#allocation8], 768, 768, 48
    $region17: #{tpu_custom_call.1} parent=1 // pred_fallthru
      _
    // Predicated region
    $region18: #{tpu_custom_call.1} parent=1 // pred_check
      _
    $region19: #{tpu_custom_call.1} parent=1 // pred_check_branch
      %44 = sbr.rel (0) target = $region21
    $region20: #{tpu_custom_call.1} parent=1 // pred_region
      _
    $region21: #{tpu_custom_call.1} parent=1 // pred_fallthru
      _
    // Predicated region
    $region22: #{tpu_custom_call.1} parent=1 // pred_check
      _
    $region23: #{tpu_custom_call.1} parent=1 // pred_check_branch
      %46 = sbr.rel (0) target = $region25
    $region24: #{tpu_custom_call.1} parent=1 // pred_region
      %s48 = ssub.s32 4096, 4096
      %49 = vsyncadd [#allocation8], %s48
      %s50 = sshll.u32 [#allocation9], 4
      %s51 = int_to_ptr.vmem [resolvable:$true] %s50
      %56 = dma.hbm_to_vmem [thread:$0]  %s5, 4096, %s51, [#allocation8], 128, 128, 8
    $region25: #{tpu_custom_call.1} parent=1 // pred_fallthru
      _
    // Predicated region
    $region26: #{tpu_custom_call.1} parent=1 // pred_check
      _
    $region27: #{tpu_custom_call.1} parent=1 // pred_check_branch
      %58 = sbr.rel (0) target = $region29
    $region28: #{tpu_custom_call.1} parent=1 // pred_region
      _
    $region29: #{tpu_custom_call.1} parent=1 // pred_fallthru
      _
    // Predicated region
    $region30: #{tpu_custom_call.1} parent=1 // pred_check
      _
    $region31: #{tpu_custom_call.1} parent=1 // pred_check_branch
      %60 = sbr.rel (0) target = $region33
    $region32: #{tpu_custom_call.1} parent=1 // pred_region
      %61 = dma.done [#allocation5], 1536
    $region33: #{tpu_custom_call.1} parent=1 // pred_fallthru
      _
    // Predicated region
    $region34: #{tpu_custom_call.1} parent=1 // pred_check
      _
    $region35: #{tpu_custom_call.1} parent=1 // pred_check_branch
      %63 = sbr.rel (0) target = $region37
    $region36: #{tpu_custom_call.1} parent=1 // pred_region
      %64 = dma.done [#allocation8], 24576
    $region37: #{tpu_custom_call.1} parent=1 // pred_fallthru
      _
    // Predicated region
    $region38: #{tpu_custom_call.1} parent=1 // pred_check
      _
    $region39: #{tpu_custom_call.1} parent=1 // pred_check_branch
      %66 = sbr.rel (0) target = $region41
    $region40: #{tpu_custom_call.1} parent=1 // pred_region
      %67 = dma.done [#allocation8], 4096
    $region41: #{tpu_custom_call.1} parent=1 // pred_fallthru
      _
    %p68 = scmp.eq.s32.totalorder 0, 0
    // Predicated region
    $region42: #{tpu_custom_call.1} parent=1 // pred_check
      %p69 = pneg %p68
    $region43: #{tpu_custom_call.1} parent=1 // pred_check_branch
      %71 = sbr.rel (%p69) target = $region45
    $region44: #{tpu_custom_call.1} parent=1 // pred_region
      %72 = vst [vmem:[#allocation2] sm:$0xff] 0.0
      %73 = vst [vmem:[#allocation2 + $0x8] sm:$0xff] 0.0
    $region45: #{tpu_custom_call.1} parent=1 // pred_fallthru
      _
    %v74 = vld [vmem:[%s0] sm:$0xff]
    %v75 = vld [vmem:[%s0 + $0x8] sm:$0xff]
    %v76 = vld [vmem:[%s0 + $0x10] sm:$0xff]
    %v77 = vld [vmem:[%s0 + $0x18] sm:$0xff]
    %v78 = vld [vmem:[%s0 + $0x20] sm:$0xff]
    %v79 = vld [vmem:[%s0 + $0x28] sm:$0xff]
    %v80 = vld [vmem:[%s0 + $0x30] sm:$0xff]
    %v81 = vld [vmem:[%s0 + $0x38] sm:$0xff]
    %v82 = vld [vmem:[#allocation4] sm:$0xff]
    %v83 = vld [vmem:[#allocation4 + $0x8] sm:$0xff]
    %v84 = vld [vmem:[#allocation4 + $0x10] sm:$0xff]
    %v85 = vld [vmem:[#allocation4 + $0x18] sm:$0xff]
    %v86 = vld [vmem:[#allocation4 + $0x20] sm:$0xff]
    %v87 = vld [vmem:[#allocation4 + $0x28] sm:$0xff]
    %v88 = vld [vmem:[#allocation4 + $0x30] sm:$0xff]
    %v89 = vld [vmem:[#allocation4 + $0x38] sm:$0xff]
    %v90 = vld [vmem:[#allocation4 + $0x40] sm:$0xff]
    %v91 = vld [vmem:[#allocation4 + $0x48] sm:$0xff]
    %v92 = vld [vmem:[#allocation4 + $0x50] sm:$0xff]
    %v93 = vld [vmem:[#allocation4 + $0x58] sm:$0xff]
    %v94 = vld [vmem:[%s2] sm:$0x3f]
    %v96 = vlaneseq
    %v97 = vshrl.u32 %v96, 7
    %v98 = vsub.s32 0, %v97
    %v99 = vrot.slane %v94, %v98
    %v100 = vlaneseq
    %v101 = vshrl.u32 %v100, 7
    %v102 = vsub.s32 1, %v101
    %v103 = vrot.slane %v94, %v102
    %v104 = vlaneseq
    %v105 = vshrl.u32 %v104, 7
    %v106 = vsub.s32 2, %v105
    %v107 = vrot.slane %v94, %v106
    %v108 = vlaneseq
    %v109 = vshrl.u32 %v108, 7
    %v110 = vsub.s32 3, %v109
    %v111 = vrot.slane %v94, %v110
    %v112 = vlaneseq
    %v113 = vshrl.u32 %v112, 7
    %v114 = vsub.s32 4, %v113
    %v115 = vrot.slane %v94, %v114
    %v116 = vlaneseq
    %v117 = vshrl.u32 %v116, 7
    %v118 = vsub.s32 5, %v117
    %v119 = vrot.slane %v94, %v118
    %vm126 = vcmask 130048
    %v128 = vsel %vm126, %v74, 0
    %v131 = vsel %vm126, %v75, 0
    %v134 = vsel %vm126, %v76, 0
    %v137 = vsel %vm126, %v77, 0
    %v140 = vsel %vm126, %v78, 0
    %v143 = vsel %vm126, %v79, 0
    %v146 = vsel %vm126, %v80, 0
    %v149 = vsel %vm126, %v81, 0
    %151 = vmatprep.subr.mxu0 %v83
    %152 = vmatpush1.msra.mxu0 %v82
    %153 = vmatprep.subr.mxu0 %v89
    %154 = vmatpush1.msra.mxu0 %v88
    %155 = vmatprep.subr.mxu0 0.0
    %156 = vmatpush1.msra.mxu0 0.0
    %157 = vmatprep.subr.mxu0 0.0
    %158 = vmatpush1.msra.mxu0 0.0
    %159 = vmatprep.subr.mxu0 0.0
    %160 = vmatpush1.msra.mxu0 0.0
    %161 = vmatprep.subr.mxu0 0.0
    %162 = vmatpush1.msra.mxu0 0.0
    %163 = vmatprep.subr.mxu0 0.0
    %164 = vmatpush1.msra.mxu0 0.0
    %165 = vmatprep.subr.mxu0 0.0
    %166 = vmatpush1.msra.mxu0 0.0
    %167 = vmatprep.subr.mxu0 0.0
    %168 = vmatpush1.msra.mxu0 0.0
    %169 = vmatprep.subr.mxu0 0.0
    %170 = vmatpush1.msra.mxu0 0.0
    %171 = vmatprep.subr.mxu0 0.0
    %172 = vmatpush1.msra.mxu0 0.0
    %173 = vmatprep.subr.mxu0 0.0
    %174 = vmatpush1.msra.mxu0 0.0
    %175 = vmatprep.subr.mxu0 0.0
    %176 = vmatpush1.msra.mxu0 0.0
    %177 = vmatprep.subr.mxu0 0.0
    %178 = vmatpush1.msra.mxu0 0.0
    %179 = vmatprep.subr.mxu0 0.0
    %180 = vmatpush1.msra.mxu0 0.0
    %181 = vmatprep.subr.mxu0 0.0
    %182 = vmatpush1.msra.mxu0 0.0
    %183 = vmatprep.subr.mxu0 0.0
    %184 = vmatpush1.msra.mxu0 0.0
    %185 = vmatprep.subr.mxu0 0.0
    %186 = vmatpush1.msra.mxu0 0.0
    %187 = vmatprep.subr.mxu0 0.0
    %188 = vmatpush1.msra.mxu0 0.0
    %189 = vmatprep.subr.mxu0 0.0
    %190 = vmatpush1.msra.mxu0 0.0
    %191 = vmatprep.subr.mxu0 0.0
    %192 = vmatpush1.msra.mxu0 0.0
    %193 = vmatprep.subr.mxu0 0.0
    %194 = vmatpush1.msra.mxu0 0.0
    %195 = vmatprep.subr.mxu0 0.0
    %196 = vmatpush1.msra.mxu0 0.0
    %197 = vmatprep.subr.mxu0 0.0
    %198 = vmatpush1.msra.mxu0 0.0
    %199 = vmatprep.subr.mxu0 0.0
    %200 = vmatpush1.msra.mxu0 0.0
    %201 = vmatprep.subr.mxu0 0.0
    %202 = vmatpush1.msra.mxu0 0.0
    %203 = vmatprep.subr.mxu0 0.0
    %204 = vmatpush1.msra.mxu0 0.0
    %205 = vmatprep.subr.mxu0 0.0
    %206 = vmatpush1.msra.mxu0 0.0
    %207 = vmatprep.subr.mxu0 0.0
    %208 = vmatpush1.msra.mxu0 0.0
    %209 = vmatprep.subr.mxu0 0.0
    %210 = vmatpush1.msra.mxu0 0.0
    %211 = vmatprep.subr.mxu0 0.0
    %212 = vmatpush1.msra.mxu0 0.0
    %213 = vmatprep.subr.mxu0 0.0
    %214 = vmatpush1.msra.mxu0 0.0
    %215 = vmatprep.mubr.f32.mxu0 0.0
    %216 = vmatmul.mubr.f32.gmra.mrb[0].mxu0 %v128
    %v217 = vpop.f32.mrb[0].mxu0
    %v218 = vadd.f32 %v99, %v217
    %v219 = vpop.f32.mrb[0].mxu0
    %v220 = vadd.f32 %v103, %v219
    %221 = vmatprep.mubr.f32.mxu0 0.0
    %222 = vmatmul.mubr.f32.gmra.mrb[0].mxu0 %v131
    %v223 = vpop.f32.mrb[0].mxu0
    %v224 = vadd.f32 %v99, %v223
    %v225 = vpop.f32.mrb[0].mxu0
    %v226 = vadd.f32 %v103, %v225
    %227 = vmatprep.mubr.f32.mxu0 0.0
    %228 = vmatmul.mubr.f32.gmra.mrb[0].mxu0 %v134
    %v229 = vpop.f32.mrb[0].mxu0
    %v230 = vadd.f32 %v99, %v229
    %v231 = vpop.f32.mrb[0].mxu0
    %v232 = vadd.f32 %v103, %v231
    %233 = vmatprep.mubr.f32.mxu0 0.0
    %234 = vmatmul.mubr.f32.gmra.mrb[0].mxu0 %v137
    %v235 = vpop.f32.mrb[0].mxu0
    %v236 = vadd.f32 %v99, %v235
    %v237 = vpop.f32.mrb[0].mxu0
    %v238 = vadd.f32 %v103, %v237
    %239 = vmatprep.mubr.f32.mxu0 0.0
    %240 = vmatmul.mubr.f32.gmra.mrb[0].mxu0 %v140
    %v241 = vpop.f32.mrb[0].mxu0
    %v242 = vadd.f32 %v99, %v241
    %v243 = vpop.f32.mrb[0].mxu0
    %v244 = vadd.f32 %v103, %v243
    %245 = vmatprep.mubr.f32.mxu0 0.0
    %246 = vmatmul.mubr.f32.gmra.mrb[0].mxu0 %v143
    %v247 = vpop.f32.mrb[0].mxu0
    %v248 = vadd.f32 %v99, %v247
    %v249 = vpop.f32.mrb[0].mxu0
    %v250 = vadd.f32 %v103, %v249
    %251 = vmatprep.mubr.f32.mxu0 0.0
    %252 = vmatmul.mubr.f32.gmra.mrb[0].mxu0 %v146
    %v253 = vpop.f32.mrb[0].mxu0
    %v254 = vadd.f32 %v99, %v253
    %v255 = vpop.f32.mrb[0].mxu0
    %v256 = vadd.f32 %v103, %v255
    %257 = vmatprep.mubr.f32.mxu0 0.0
    %258 = vmatmul.mubr.f32.gmra.mrb[0].mxu0 %v149
    %v259 = vpop.f32.mrb[0].mxu0
    %v260 = vadd.f32 %v99, %v259
    %v261 = vpop.f32.mrb[0].mxu0
    %v262 = vadd.f32 %v103, %v261
    %263 = vdwg.mxu0
    %264 = vmatprep.subr.mxu0 %v85
    %265 = vmatpush1.msra.mxu0 %v84
    %266 = vmatprep.subr.mxu0 %v91
    %267 = vmatpush1.msra.mxu0 %v90
    %268 = vmatprep.subr.mxu0 0.0
    %269 = vmatpush1.msra.mxu0 0.0
    %270 = vmatprep.subr.mxu0 0.0
    %271 = vmatpush1.msra.mxu0 0.0
    %272 = vmatprep.subr.mxu0 0.0
    %273 = vmatpush1.msra.mxu0 0.0
    %274 = vmatprep.subr.mxu0 0.0
    %275 = vmatpush1.msra.mxu0 0.0
    %276 = vmatprep.subr.mxu0 0.0
    %277 = vmatpush1.msra.mxu0 0.0
    %278 = vmatprep.subr.mxu0 0.0
    %279 = vmatpush1.msra.mxu0 0.0
    %280 = vmatprep.subr.mxu0 0.0
    %281 = vmatpush1.msra.mxu0 0.0
    %282 = vmatprep.subr.mxu0 0.0
    %283 = vmatpush1.msra.mxu0 0.0
    %284 = vmatprep.subr.mxu0 0.0
    %285 = vmatpush1.msra.mxu0 0.0
    %286 = vmatprep.subr.mxu0 0.0
    %287 = vmatpush1.msra.mxu0 0.0
    %288 = vmatprep.subr.mxu0 0.0
    %289 = vmatpush1.msra.mxu0 0.0
    %290 = vmatprep.subr.mxu0 0.0
    %291 = vmatpush1.msra.mxu0 0.0
    %292 = vmatprep.subr.mxu0 0.0
    %293 = vmatpush1.msra.mxu0 0.0
    %294 = vmatprep.subr.mxu0 0.0
    %295 = vmatpush1.msra.mxu0 0.0
    %296 = vmatprep.subr.mxu0 0.0
    %297 = vmatpush1.msra.mxu0 0.0
    %298 = vmatprep.subr.mxu0 0.0
    %299 = vmatpush1.msra.mxu0 0.0
    %300 = vmatprep.subr.mxu0 0.0
    %301 = vmatpush1.msra.mxu0 0.0
    %302 = vmatprep.subr.mxu0 0.0
    %303 = vmatpush1.msra.mxu0 0.0
    %304 = vmatprep.subr.mxu0 0.0
    %305 = vmatpush1.msra.mxu0 0.0
    %306 = vmatprep.subr.mxu0 0.0
    %307 = vmatpush1.msra.mxu0 0.0
    %308 = vmatprep.subr.mxu0 0.0
    %309 = vmatpush1.msra.mxu0 0.0
    %310 = vmatprep.subr.mxu0 0.0
    %311 = vmatpush1.msra.mxu0 0.0
    %312 = vmatprep.subr.mxu0 0.0
    %313 = vmatpush1.msra.mxu0 0.0
    %314 = vmatprep.subr.mxu0 0.0
    %315 = vmatpush1.msra.mxu0 0.0
    %316 = vmatprep.subr.mxu0 0.0
    %317 = vmatpush1.msra.mxu0 0.0
    %318 = vmatprep.subr.mxu0 0.0
    %319 = vmatpush1.msra.mxu0 0.0
    %320 = vmatprep.subr.mxu0 0.0
    %321 = vmatpush1.msra.mxu0 0.0
    %322 = vmatprep.subr.mxu0 0.0
    %323 = vmatpush1.msra.mxu0 0.0
    %324 = vmatprep.subr.mxu0 0.0
    %325 = vmatpush1.msra.mxu0 0.0
    %326 = vmatprep.subr.mxu0 0.0
    %327 = vmatpush1.msra.mxu0 0.0
    %328 = vmatprep.mubr.f32.mxu0 0.0
    %329 = vmatmul.mubr.f32.gmra.mrb[0].mxu0 %v128
    %v330 = vpop.f32.mrb[0].mxu0
    %v331 = vadd.f32 %v107, %v330
    %v332 = vpop.f32.mrb[0].mxu0
    %v333 = vadd.f32 %v111, %v332
    %334 = vmatprep.mubr.f32.mxu0 0.0
    %335 = vmatmul.mubr.f32.gmra.mrb[0].mxu0 %v131
    %v336 = vpop.f32.mrb[0].mxu0
    %v337 = vadd.f32 %v107, %v336
    %v338 = vpop.f32.mrb[0].mxu0
    %v339 = vadd.f32 %v111, %v338
    %340 = vmatprep.mubr.f32.mxu0 0.0
    %341 = vmatmul.mubr.f32.gmra.mrb[0].mxu0 %v134
    %v342 = vpop.f32.mrb[0].mxu0
    %v343 = vadd.f32 %v107, %v342
    %v344 = vpop.f32.mrb[0].mxu0
    %v345 = vadd.f32 %v111, %v344
    %346 = vmatprep.mubr.f32.mxu0 0.0
    %347 = vmatmul.mubr.f32.gmra.mrb[0].mxu0 %v137
    %v348 = vpop.f32.mrb[0].mxu0
    %v349 = vadd.f32 %v107, %v348
    %v350 = vpop.f32.mrb[0].mxu0
    %v351 = vadd.f32 %v111, %v350
    %352 = vmatprep.mubr.f32.mxu0 0.0
    %353 = vmatmul.mubr.f32.gmra.mrb[0].mxu0 %v140
    %v354 = vpop.f32.mrb[0].mxu0
    %v355 = vadd.f32 %v107, %v354
    %v356 = vpop.f32.mrb[0].mxu0
    %v357 = vadd.f32 %v111, %v356
    %358 = vmatprep.mubr.f32.mxu0 0.0
    %359 = vmatmul.mubr.f32.gmra.mrb[0].mxu0 %v143
    %v360 = vpop.f32.mrb[0].mxu0
    %v361 = vadd.f32 %v107, %v360
    %v362 = vpop.f32.mrb[0].mxu0
    %v363 = vadd.f32 %v111, %v362
    %364 = vmatprep.mubr.f32.mxu0 0.0
    %365 = vmatmul.mubr.f32.gmra.mrb[0].mxu0 %v146
    %v366 = vpop.f32.mrb[0].mxu0
    %v367 = vadd.f32 %v107, %v366
    %v368 = vpop.f32.mrb[0].mxu0
    %v369 = vadd.f32 %v111, %v368
    %370 = vmatprep.mubr.f32.mxu0 0.0
    %371 = vmatmul.mubr.f32.gmra.mrb[0].mxu0 %v149
    %v372 = vpop.f32.mrb[0].mxu0
    %v373 = vadd.f32 %v107, %v372
    %v374 = vpop.f32.mrb[0].mxu0
    %v375 = vadd.f32 %v111, %v374
    %376 = vdwg.mxu0
    %377 = vmatprep.subr.mxu0 %v87
    %378 = vmatpush1.msra.mxu0 %v86
    %379 = vmatprep.subr.mxu0 %v93
    %380 = vmatpush1.msra.mxu0 %v92
    %381 = vmatprep.subr.mxu0 0.0
    %382 = vmatpush1.msra.mxu0 0.0
    %383 = vmatprep.subr.mxu0 0.0
    %384 = vmatpush1.msra.mxu0 0.0
    %385 = vmatprep.subr.mxu0 0.0
    %386 = vmatpush1.msra.mxu0 0.0
    %387 = vmatprep.subr.mxu0 0.0
    %388 = vmatpush1.msra.mxu0 0.0
    %389 = vmatprep.subr.mxu0 0.0
    %390 = vmatpush1.msra.mxu0 0.0
    %391 = vmatprep.subr.mxu0 0.0
    %392 = vmatpush1.msra.mxu0 0.0
    %393 = vmatprep.subr.mxu0 0.0
    %394 = vmatpush1.msra.mxu0 0.0
    %395 = vmatprep.subr.mxu0 0.0
    %396 = vmatpush1.msra.mxu0 0.0
    %397 = vmatprep.subr.mxu0 0.0
    %398 = vmatpush1.msra.mxu0 0.0
    %399 = vmatprep.subr.mxu0 0.0
    %400 = vmatpush1.msra.mxu0 0.0
    %401 = vmatprep.subr.mxu0 0.0
    %402 = vmatpush1.msra.mxu0 0.0
    %403 = vmatprep.subr.mxu0 0.0
    %404 = vmatpush1.msra.mxu0 0.0
    %405 = vmatprep.subr.mxu0 0.0
    %406 = vmatpush1.msra.mxu0 0.0
    %407 = vmatprep.subr.mxu0 0.0
    %408 = vmatpush1.msra.mxu0 0.0
    %409 = vmatprep.subr.mxu0 0.0
    %410 = vmatpush1.msra.mxu0 0.0
    %411 = vmatprep.subr.mxu0 0.0
    %412 = vmatpush1.msra.mxu0 0.0
    %413 = vmatprep.subr.mxu0 0.0
    %414 = vmatpush1.msra.mxu0 0.0
    %415 = vmatprep.subr.mxu0 0.0
    %416 = vmatpush1.msra.mxu0 0.0
    %417 = vmatprep.subr.mxu0 0.0
    %418 = vmatpush1.msra.mxu0 0.0
    %419 = vmatprep.subr.mxu0 0.0
    %420 = vmatpush1.msra.mxu0 0.0
    %421 = vmatprep.subr.mxu0 0.0
    %422 = vmatpush1.msra.mxu0 0.0
    %423 = vmatprep.subr.mxu0 0.0
    %424 = vmatpush1.msra.mxu0 0.0
    %425 = vmatprep.subr.mxu0 0.0
    %426 = vmatpush1.msra.mxu0 0.0
    %427 = vmatprep.subr.mxu0 0.0
    %428 = vmatpush1.msra.mxu0 0.0
    %429 = vmatprep.subr.mxu0 0.0
    %430 = vmatpush1.msra.mxu0 0.0
    %431 = vmatprep.subr.mxu0 0.0
    %432 = vmatpush1.msra.mxu0 0.0
    %433 = vmatprep.subr.mxu0 0.0
    %434 = vmatpush1.msra.mxu0 0.0
    %435 = vmatprep.subr.mxu0 0.0
    %436 = vmatpush1.msra.mxu0 0.0
    %437 = vmatprep.subr.mxu0 0.0
    %438 = vmatpush1.msra.mxu0 0.0
    %439 = vmatprep.subr.mxu0 0.0
    %440 = vmatpush1.msra.mxu0 0.0
    %441 = vmatprep.mubr.f32.mxu0 0.0
    %442 = vmatmul.mubr.f32.gmra.mrb[0].mxu0 %v128
    %v443 = vpop.f32.mrb[0].mxu0
    %v444 = vadd.f32 %v115, %v443
    %v445 = vpop.f32.mrb[0].mxu0
    %v446 = vadd.f32 %v119, %v445
    %447 = vmatprep.mubr.f32.mxu0 0.0
    %448 = vmatmul.mubr.f32.gmra.mrb[0].mxu0 %v131
    %v449 = vpop.f32.mrb[0].mxu0
    %v450 = vadd.f32 %v115, %v449
    %v451 = vpop.f32.mrb[0].mxu0
    %v452 = vadd.f32 %v119, %v451
    %453 = vmatprep.mubr.f32.mxu0 0.0
    %454 = vmatmul.mubr.f32.gmra.mrb[0].mxu0 %v134
    %v455 = vpop.f32.mrb[0].mxu0
    %v456 = vadd.f32 %v115, %v455
    %v457 = vpop.f32.mrb[0].mxu0
    %v458 = vadd.f32 %v119, %v457
    %459 = vmatprep.mubr.f32.mxu0 0.0
    %460 = vmatmul.mubr.f32.gmra.mrb[0].mxu0 %v137
    %v461 = vpop.f32.mrb[0].mxu0
    %v462 = vadd.f32 %v115, %v461
    %v463 = vpop.f32.mrb[0].mxu0
    %v464 = vadd.f32 %v119, %v463
    %465 = vmatprep.mubr.f32.mxu0 0.0
    %466 = vmatmul.mubr.f32.gmra.mrb[0].mxu0 %v140
    %v467 = vpop.f32.mrb[0].mxu0
    %v468 = vadd.f32 %v115, %v467
    %v469 = vpop.f32.mrb[0].mxu0
    %v470 = vadd.f32 %v119, %v469
    %471 = vmatprep.mubr.f32.mxu0 0.0
    %472 = vmatmul.mubr.f32.gmra.mrb[0].mxu0 %v143
    %v473 = vpop.f32.mrb[0].mxu0
    %v474 = vadd.f32 %v115, %v473
    %v475 = vpop.f32.mrb[0].mxu0
    %v476 = vadd.f32 %v119, %v475
    %477 = vmatprep.mubr.f32.mxu0 0.0
    %478 = vmatmul.mubr.f32.gmra.mrb[0].mxu0 %v146
    %v479 = vpop.f32.mrb[0].mxu0
    %v480 = vadd.f32 %v115, %v479
    %v481 = vpop.f32.mrb[0].mxu0
    %v482 = vadd.f32 %v119, %v481
    %483 = vmatprep.mubr.f32.mxu0 0.0
    %484 = vmatmul.mubr.f32.gmra.mrb[0].mxu0 %v149
    %v485 = vpop.f32.mrb[0].mxu0
    %v486 = vadd.f32 %v115, %v485
    %v487 = vpop.f32.mrb[0].mxu0
    %v488 = vadd.f32 %v119, %v487
    %489 = vdwg.mxu0
    %490 = vst [vmem:[#allocation3] sm:$0xff] %v218
    %491 = vst [vmem:[#allocation3 + $0x8] sm:$0xff] %v220
    %492 = vst [vmem:[#allocation3 + $0x10] sm:$0xff] %v331
    %493 = vst [vmem:[#allocation3 + $0x18] sm:$0xff] %v333
    %494 = vst [vmem:[#allocation3 + $0x20] sm:$0xff] %v444
    %495 = vst [vmem:[#allocation3 + $0x28] sm:$0xff] %v446
    %496 = vst [vmem:[#allocation3 + $0x30] sm:$0xff] %v224
    %497 = vst [vmem:[#allocation3 + $0x38] sm:$0xff] %v226
    %498 = vst [vmem:[#allocation3 + $0x40] sm:$0xff] %v337
    %499 = vst [vmem:[#allocation3 + $0x48] sm:$0xff] %v339
    %500 = vst [vmem:[#allocation3 + $0x50] sm:$0xff] %v450
    %501 = vst [vmem:[#allocation3 + $0x58] sm:$0xff] %v452
    %502 = vst [vmem:[#allocation3 + $0x60] sm:$0xff] %v230
    %503 = vst [vmem:[#allocation3 + $0x68] sm:$0xff] %v232
    %504 = vst [vmem:[#allocation3 + $0x70] sm:$0xff] %v343
    %505 = vst [vmem:[#allocation3 + $0x78] sm:$0xff] %v345
    %506 = vst [vmem:[#allocation3 + $0x80] sm:$0xff] %v456
    %507 = vst [vmem:[#allocation3 + $0x88] sm:$0xff] %v458
    %508 = vst [vmem:[#allocation3 + $0x90] sm:$0xff] %v236
    %509 = vst [vmem:[#allocation3 + $0x98] sm:$0xff] %v238
    %510 = vst [vmem:[#allocation3 + $0xa0] sm:$0xff] %v349
    %511 = vst [vmem:[#allocation3 + $0xa8] sm:$0xff] %v351
    %512 = vst [vmem:[#allocation3 + $0xb0] sm:$0xff] %v462
    %513 = vst [vmem:[#allocation3 + $0xb8] sm:$0xff] %v464
    %514 = vst [vmem:[#allocation3 + $0xc0] sm:$0xff] %v242
    %515 = vst [vmem:[#allocation3 + $0xc8] sm:$0xff] %v244
    %516 = vst [vmem:[#allocation3 + $0xd0] sm:$0xff] %v355
    %517 = vst [vmem:[#allocation3 + $0xd8] sm:$0xff] %v357
    %518 = vst [vmem:[#allocation3 + $0xe0] sm:$0xff] %v468
    %519 = vst [vmem:[#allocation3 + $0xe8] sm:$0xff] %v470
    %520 = vst [vmem:[#allocation3 + $0xf0] sm:$0xff] %v248
    %521 = vst [vmem:[#allocation3 + $0xf8] sm:$0xff] %v250
    %522 = vst [vmem:[#allocation3 + $0x100] sm:$0xff] %v361
    %523 = vst [vmem:[#allocation3 + $0x108] sm:$0xff] %v363
    %524 = vst [vmem:[#allocation3 + $0x110] sm:$0xff] %v474
    %525 = vst [vmem:[#allocation3 + $0x118] sm:$0xff] %v476
    %526 = vst [vmem:[#allocation3 + $0x120] sm:$0xff] %v254
    %527 = vst [vmem:[#allocation3 + $0x128] sm:$0xff] %v256
    %528 = vst [vmem:[#allocation3 + $0x130] sm:$0xff] %v367
    %529 = vst [vmem:[#allocation3 + $0x138] sm:$0xff] %v369
    %530 = vst [vmem:[#allocation3 + $0x140] sm:$0xff] %v480
    %531 = vst [vmem:[#allocation3 + $0x148] sm:$0xff] %v482
    %532 = vst [vmem:[#allocation3 + $0x150] sm:$0xff] %v260
    %533 = vst [vmem:[#allocation3 + $0x158] sm:$0xff] %v262
    %534 = vst [vmem:[#allocation3 + $0x160] sm:$0xff] %v373
    %535 = vst [vmem:[#allocation3 + $0x168] sm:$0xff] %v375
    %536 = vst [vmem:[#allocation3 + $0x170] sm:$0xff] %v486
    %537 = vst [vmem:[#allocation3 + $0x178] sm:$0xff] %v488
    %v538 = vld [vmem:[%s4] sm:$0x3f]
    %v540 = vlaneseq
    %v541 = vshrl.u32 %v540, 7
    %v542 = vsub.s32 0, %v541
    %v543 = vrot.slane %v538, %v542
    %v544 = vlaneseq
    %v545 = vshrl.u32 %v544, 7
    %v546 = vsub.s32 1, %v545
    %v547 = vrot.slane %v538, %v546
    %v548 = vlaneseq
    %v549 = vshrl.u32 %v548, 7
    %v550 = vsub.s32 2, %v549
    %v551 = vrot.slane %v538, %v550
    %v552 = vlaneseq
    %v553 = vshrl.u32 %v552, 7
    %v554 = vsub.s32 3, %v553
    %v555 = vrot.slane %v538, %v554
    %v556 = vlaneseq
    %v557 = vshrl.u32 %v556, 7
    %v558 = vsub.s32 4, %v557
    %v559 = vrot.slane %v538, %v558
    %v560 = vlaneseq
    %v561 = vshrl.u32 %v560, 7
    %v562 = vsub.s32 5, %v561
    %v563 = vrot.slane %v538, %v562
    %s570 = smul.u32 0, 8
    %v571 = vld [vmem:[#allocation2] sm:$0xff]
    %v572 = vld [vmem:[#allocation2 + $0x8] sm:$0xff]
    %s573 = smul.u32 0, 6
    %s574 = smul.addr %s573, 8
    %s575 = scalar_lea.vmem [#allocation3], %s574
    %v576 = vld [vmem:[%s575] sm:$0xff]
    %v577 = vld [vmem:[%s575 + $0x8] sm:$0xff]
    %v578 = vld [vmem:[%s575 + $0x10] sm:$0xff]
    %v579 = vld [vmem:[%s575 + $0x18] sm:$0xff]
    %v580 = vld [vmem:[%s575 + $0x20] sm:$0xff]
    %v581 = vld [vmem:[%s575 + $0x28] sm:$0xff]
    %v582 = vld [vmem:[#allocation7] sm:$0xff]
    %v583 = vld [vmem:[#allocation7 + $0x8] sm:$0xff]
    %v584 = vld [vmem:[#allocation7 + $0x10] sm:$0xff]
    %v585 = vld [vmem:[#allocation7 + $0x18] sm:$0xff]
    %v586 = vld [vmem:[#allocation7 + $0x20] sm:$0xff]
    %v587 = vld [vmem:[#allocation7 + $0x28] sm:$0xff]
    %v588 = vld [vmem:[#allocation7 + $0x30] sm:$0xff]
    %v589 = vld [vmem:[#allocation7 + $0x38] sm:$0xff]
    %v590 = vld [vmem:[#allocation7 + $0x40] sm:$0xff]
    %v591 = vld [vmem:[#allocation7 + $0x48] sm:$0xff]
    %v592 = vld [vmem:[#allocation7 + $0x50] sm:$0xff]
    %v593 = vld [vmem:[#allocation7 + $0x58] sm:$0xff]
    %v594 = vld [vmem:[#allocation7 + $0x60] sm:$0xff]
    %v595 = vld [vmem:[#allocation7 + $0x68] sm:$0xff]
    %v596 = vld [vmem:[#allocation7 + $0x70] sm:$0xff]
    %v597 = vld [vmem:[#allocation7 + $0x78] sm:$0xff]
    %v598 = vld [vmem:[#allocation7 + $0x80] sm:$0xff]
    %v599 = vld [vmem:[#allocation7 + $0x88] sm:$0xff]
    %v600 = vld [vmem:[#allocation7 + $0x90] sm:$0xff]
    %v601 = vld [vmem:[#allocation7 + $0x98] sm:$0xff]
    %v602 = vld [vmem:[#allocation7 + $0xa0] sm:$0xff]
    %v603 = vld [vmem:[#allocation7 + $0xa8] sm:$0xff]
    %v604 = vld [vmem:[#allocation7 + $0xb0] sm:$0xff]
    %v605 = vld [vmem:[#allocation7 + $0xb8] sm:$0xff]
    %v606 = vld [vmem:[#allocation7 + $0xc0] sm:$0xff]
    %v607 = vld [vmem:[#allocation7 + $0xc8] sm:$0xff]
    %v608 = vld [vmem:[#allocation7 + $0xd0] sm:$0xff]
    %v609 = vld [vmem:[#allocation7 + $0xd8] sm:$0xff]
    %v610 = vld [vmem:[#allocation7 + $0xe0] sm:$0xff]
    %v611 = vld [vmem:[#allocation7 + $0xe8] sm:$0xff]
    %v612 = vld [vmem:[#allocation7 + $0xf0] sm:$0xff]
    %v613 = vld [vmem:[#allocation7 + $0xf8] sm:$0xff]
    %v614 = vld [vmem:[#allocation7 + $0x100] sm:$0xff]
    %v615 = vld [vmem:[#allocation7 + $0x108] sm:$0xff]
    %v616 = vld [vmem:[#allocation7 + $0x110] sm:$0xff]
    %v617 = vld [vmem:[#allocation7 + $0x118] sm:$0xff]
    %v618 = vld [vmem:[#allocation7 + $0x120] sm:$0xff]
    %v619 = vld [vmem:[#allocation7 + $0x128] sm:$0xff]
    %v620 = vld [vmem:[#allocation7 + $0x130] sm:$0xff]
    %v621 = vld [vmem:[#allocation7 + $0x138] sm:$0xff]
    %v622 = vld [vmem:[#allocation7 + $0x140] sm:$0xff]
    %v623 = vld [vmem:[#allocation7 + $0x148] sm:$0xff]
    %v624 = vld [vmem:[#allocation7 + $0x150] sm:$0xff]
    %v625 = vld [vmem:[#allocation7 + $0x158] sm:$0xff]
    %v626 = vld [vmem:[#allocation7 + $0x160] sm:$0xff]
    %v627 = vld [vmem:[#allocation7 + $0x168] sm:$0xff]
    %v628 = vld [vmem:[#allocation7 + $0x170] sm:$0xff]
    %v629 = vld [vmem:[#allocation7 + $0x178] sm:$0xff]
    %v630 = vld [vmem:[#allocation7 + $0x180] sm:$0xff]
    %v631 = vld [vmem:[#allocation7 + $0x188] sm:$0xff]
    %v632 = vld [vmem:[#allocation7 + $0x190] sm:$0xff]
    %v633 = vld [vmem:[#allocation7 + $0x198] sm:$0xff]
    %v634 = vld [vmem:[#allocation7 + $0x1a0] sm:$0xff]
    %v635 = vld [vmem:[#allocation7 + $0x1a8] sm:$0xff]
    %v636 = vld [vmem:[#allocation7 + $0x1b0] sm:$0xff]
    %v637 = vld [vmem:[#allocation7 + $0x1b8] sm:$0xff]
    %v638 = vld [vmem:[#allocation7 + $0x1c0] sm:$0xff]
    %v639 = vld [vmem:[#allocation7 + $0x1c8] sm:$0xff]
    %v640 = vld [vmem:[#allocation7 + $0x1d0] sm:$0xff]
    %v641 = vld [vmem:[#allocation7 + $0x1d8] sm:$0xff]
    %v642 = vld [vmem:[#allocation7 + $0x1e0] sm:$0xff]
    %v643 = vld [vmem:[#allocation7 + $0x1e8] sm:$0xff]
    %v644 = vld [vmem:[#allocation7 + $0x1f0] sm:$0xff]
    %v645 = vld [vmem:[#allocation7 + $0x1f8] sm:$0xff]
    %v646 = vld [vmem:[#allocation7 + $0x200] sm:$0xff]
    %v647 = vld [vmem:[#allocation7 + $0x208] sm:$0xff]
    %v648 = vld [vmem:[#allocation7 + $0x210] sm:$0xff]
    %v649 = vld [vmem:[#allocation7 + $0x218] sm:$0xff]
    %v650 = vld [vmem:[#allocation7 + $0x220] sm:$0xff]
    %v651 = vld [vmem:[#allocation7 + $0x228] sm:$0xff]
    %v652 = vld [vmem:[#allocation7 + $0x230] sm:$0xff]
    %v653 = vld [vmem:[#allocation7 + $0x238] sm:$0xff]
    %v654 = vld [vmem:[#allocation7 + $0x240] sm:$0xff]
    %v655 = vld [vmem:[#allocation7 + $0x248] sm:$0xff]
    %v656 = vld [vmem:[#allocation7 + $0x250] sm:$0xff]
    %v657 = vld [vmem:[#allocation7 + $0x258] sm:$0xff]
    %v658 = vld [vmem:[#allocation7 + $0x260] sm:$0xff]
    %v659 = vld [vmem:[#allocation7 + $0x268] sm:$0xff]
    %v660 = vld [vmem:[#allocation7 + $0x270] sm:$0xff]
    %v661 = vld [vmem:[#allocation7 + $0x278] sm:$0xff]
    %v662 = vld [vmem:[#allocation7 + $0x280] sm:$0xff]
    %v663 = vld [vmem:[#allocation7 + $0x288] sm:$0xff]
    %v664 = vld [vmem:[#allocation7 + $0x290] sm:$0xff]
    %v665 = vld [vmem:[#allocation7 + $0x298] sm:$0xff]
    %v666 = vld [vmem:[#allocation7 + $0x2a0] sm:$0xff]
    %v667 = vld [vmem:[#allocation7 + $0x2a8] sm:$0xff]
    %v668 = vld [vmem:[#allocation7 + $0x2b0] sm:$0xff]
    %v669 = vld [vmem:[#allocation7 + $0x2b8] sm:$0xff]
    %v670 = vld [vmem:[#allocation7 + $0x2c0] sm:$0xff]
    %v671 = vld [vmem:[#allocation7 + $0x2c8] sm:$0xff]
    %v672 = vld [vmem:[#allocation7 + $0x2d0] sm:$0xff]
    %v673 = vld [vmem:[#allocation7 + $0x2d8] sm:$0xff]
    %v674 = vld [vmem:[#allocation7 + $0x2e0] sm:$0xff]
    %v675 = vld [vmem:[#allocation7 + $0x2e8] sm:$0xff]
    %v676 = vld [vmem:[#allocation7 + $0x2f0] sm:$0xff]
    %v677 = vld [vmem:[#allocation7 + $0x2f8] sm:$0xff]
    %v678 = vld [vmem:[#allocation7 + $0x300] sm:$0xff]
    %v679 = vld [vmem:[#allocation7 + $0x308] sm:$0xff]
    %v680 = vld [vmem:[#allocation7 + $0x310] sm:$0xff]
    %v681 = vld [vmem:[#allocation7 + $0x318] sm:$0xff]
    %v682 = vld [vmem:[#allocation7 + $0x320] sm:$0xff]
    %v683 = vld [vmem:[#allocation7 + $0x328] sm:$0xff]
    %v684 = vld [vmem:[#allocation7 + $0x330] sm:$0xff]
    %v685 = vld [vmem:[#allocation7 + $0x338] sm:$0xff]
    %v686 = vld [vmem:[#allocation7 + $0x340] sm:$0xff]
    %v687 = vld [vmem:[#allocation7 + $0x348] sm:$0xff]
    %v688 = vld [vmem:[#allocation7 + $0x350] sm:$0xff]
    %v689 = vld [vmem:[#allocation7 + $0x358] sm:$0xff]
    %v690 = vld [vmem:[#allocation7 + $0x360] sm:$0xff]
    %v691 = vld [vmem:[#allocation7 + $0x368] sm:$0xff]
    %v692 = vld [vmem:[#allocation7 + $0x370] sm:$0xff]
    %v693 = vld [vmem:[#allocation7 + $0x378] sm:$0xff]
    %v694 = vld [vmem:[#allocation7 + $0x380] sm:$0xff]
    %v695 = vld [vmem:[#allocation7 + $0x388] sm:$0xff]
    %v696 = vld [vmem:[#allocation7 + $0x390] sm:$0xff]
    %v697 = vld [vmem:[#allocation7 + $0x398] sm:$0xff]
    %v698 = vld [vmem:[#allocation7 + $0x3a0] sm:$0xff]
    %v699 = vld [vmem:[#allocation7 + $0x3a8] sm:$0xff]
    %v700 = vld [vmem:[#allocation7 + $0x3b0] sm:$0xff]
    %v701 = vld [vmem:[#allocation7 + $0x3b8] sm:$0xff]
    %v702 = vld [vmem:[#allocation7 + $0x3c0] sm:$0xff]
    %v703 = vld [vmem:[#allocation7 + $0x3c8] sm:$0xff]
    %v704 = vld [vmem:[#allocation7 + $0x3d0] sm:$0xff]
    %v705 = vld [vmem:[#allocation7 + $0x3d8] sm:$0xff]
    %v706 = vld [vmem:[#allocation7 + $0x3e0] sm:$0xff]
    %v707 = vld [vmem:[#allocation7 + $0x3e8] sm:$0xff]
    %v708 = vld [vmem:[#allocation7 + $0x3f0] sm:$0xff]
    %v709 = vld [vmem:[#allocation7 + $0x3f8] sm:$0xff]
    %v710 = vld [vmem:[#allocation7 + $0x400] sm:$0xff]
    %v711 = vld [vmem:[#allocation7 + $0x408] sm:$0xff]
    %v712 = vld [vmem:[#allocation7 + $0x410] sm:$0xff]
    %v713 = vld [vmem:[#allocation7 + $0x418] sm:$0xff]
    %v714 = vld [vmem:[#allocation7 + $0x420] sm:$0xff]
    %v715 = vld [vmem:[#allocation7 + $0x428] sm:$0xff]
    %v716 = vld [vmem:[#allocation7 + $0x430] sm:$0xff]
    %v717 = vld [vmem:[#allocation7 + $0x438] sm:$0xff]
    %v718 = vld [vmem:[#allocation7 + $0x440] sm:$0xff]
    %v719 = vld [vmem:[#allocation7 + $0x448] sm:$0xff]
    %v720 = vld [vmem:[#allocation7 + $0x450] sm:$0xff]
    %v721 = vld [vmem:[#allocation7 + $0x458] sm:$0xff]
    %v722 = vld [vmem:[#allocation7 + $0x460] sm:$0xff]
    %v723 = vld [vmem:[#allocation7 + $0x468] sm:$0xff]
    %v724 = vld [vmem:[#allocation7 + $0x470] sm:$0xff]
    %v725 = vld [vmem:[#allocation7 + $0x478] sm:$0xff]
    %v726 = vld [vmem:[#allocation7 + $0x480] sm:$0xff]
    %v727 = vld [vmem:[#allocation7 + $0x488] sm:$0xff]
    %v728 = vld [vmem:[#allocation7 + $0x490] sm:$0xff]
    %v729 = vld [vmem:[#allocation7 + $0x498] sm:$0xff]
    %v730 = vld [vmem:[#allocation7 + $0x4a0] sm:$0xff]
    %v731 = vld [vmem:[#allocation7 + $0x4a8] sm:$0xff]
    %v732 = vld [vmem:[#allocation7 + $0x4b0] sm:$0xff]
    %v733 = vld [vmem:[#allocation7 + $0x4b8] sm:$0xff]
    %v734 = vld [vmem:[#allocation7 + $0x4c0] sm:$0xff]
    %v735 = vld [vmem:[#allocation7 + $0x4c8] sm:$0xff]
    %v736 = vld [vmem:[#allocation7 + $0x4d0] sm:$0xff]
    %v737 = vld [vmem:[#allocation7 + $0x4d8] sm:$0xff]
    %v738 = vld [vmem:[#allocation7 + $0x4e0] sm:$0xff]
    %v739 = vld [vmem:[#allocation7 + $0x4e8] sm:$0xff]
    %v740 = vld [vmem:[#allocation7 + $0x4f0] sm:$0xff]
    %v741 = vld [vmem:[#allocation7 + $0x4f8] sm:$0xff]
    %v742 = vld [vmem:[#allocation7 + $0x500] sm:$0xff]
    %v743 = vld [vmem:[#allocation7 + $0x508] sm:$0xff]
    %v744 = vld [vmem:[#allocation7 + $0x510] sm:$0xff]
    %v745 = vld [vmem:[#allocation7 + $0x518] sm:$0xff]
    %v746 = vld [vmem:[#allocation7 + $0x520] sm:$0xff]
    %v747 = vld [vmem:[#allocation7 + $0x528] sm:$0xff]
    %v748 = vld [vmem:[#allocation7 + $0x530] sm:$0xff]
    %v749 = vld [vmem:[#allocation7 + $0x538] sm:$0xff]
    %v750 = vld [vmem:[#allocation7 + $0x540] sm:$0xff]
    %v751 = vld [vmem:[#allocation7 + $0x548] sm:$0xff]
    %v752 = vld [vmem:[#allocation7 + $0x550] sm:$0xff]
    %v753 = vld [vmem:[#allocation7 + $0x558] sm:$0xff]
    %v754 = vld [vmem:[#allocation7 + $0x560] sm:$0xff]
    %v755 = vld [vmem:[#allocation7 + $0x568] sm:$0xff]
    %v756 = vld [vmem:[#allocation7 + $0x570] sm:$0xff]
    %v757 = vld [vmem:[#allocation7 + $0x578] sm:$0xff]
    %v758 = vld [vmem:[#allocation7 + $0x580] sm:$0xff]
    %v759 = vld [vmem:[#allocation7 + $0x588] sm:$0xff]
    %v760 = vld [vmem:[#allocation7 + $0x590] sm:$0xff]
    %v761 = vld [vmem:[#allocation7 + $0x598] sm:$0xff]
    %v762 = vld [vmem:[#allocation7 + $0x5a0] sm:$0xff]
    %v763 = vld [vmem:[#allocation7 + $0x5a8] sm:$0xff]
    %v764 = vld [vmem:[#allocation7 + $0x5b0] sm:$0xff]
    %v765 = vld [vmem:[#allocation7 + $0x5b8] sm:$0xff]
    %v766 = vld [vmem:[#allocation7 + $0x5c0] sm:$0xff]
    %v767 = vld [vmem:[#allocation7 + $0x5c8] sm:$0xff]
    %v768 = vld [vmem:[#allocation7 + $0x5d0] sm:$0xff]
    %v769 = vld [vmem:[#allocation7 + $0x5d8] sm:$0xff]
    %v770 = vld [vmem:[#allocation7 + $0x5e0] sm:$0xff]
    %v771 = vld [vmem:[#allocation7 + $0x5e8] sm:$0xff]
    %v772 = vld [vmem:[#allocation7 + $0x5f0] sm:$0xff]
    %v773 = vld [vmem:[#allocation7 + $0x5f8] sm:$0xff]
    %774 = vmatprep.subr.mxu0 %v583
    %775 = vmatpush1.msra.mxu0 %v582
    %776 = vmatprep.subr.mxu0 %v589
    %777 = vmatpush1.msra.mxu0 %v588
    %778 = vmatprep.subr.mxu0 %v595
    %779 = vmatpush1.msra.mxu0 %v594
    %780 = vmatprep.subr.mxu0 %v601
    %781 = vmatpush1.msra.mxu0 %v600
    %782 = vmatprep.subr.mxu0 %v607
    %783 = vmatpush1.msra.mxu0 %v606
    %784 = vmatprep.subr.mxu0 %v613
    %785 = vmatpush1.msra.mxu0 %v612
    %786 = vmatprep.subr.mxu0 %v619
    %787 = vmatpush1.msra.mxu0 %v618
    %788 = vmatprep.subr.mxu0 %v625
    %789 = vmatpush1.msra.mxu0 %v624
    %790 = vmatprep.subr.mxu0 %v631
    %791 = vmatpush1.msra.mxu0 %v630
    %792 = vmatprep.subr.mxu0 %v637
    %793 = vmatpush1.msra.mxu0 %v636
    %794 = vmatprep.subr.mxu0 %v643
    %795 = vmatpush1.msra.mxu0 %v642
    %796 = vmatprep.subr.mxu0 %v649
    %797 = vmatpush1.msra.mxu0 %v648
    %798 = vmatprep.subr.mxu0 %v655
    %799 = vmatpush1.msra.mxu0 %v654
    %800 = vmatprep.subr.mxu0 %v661
    %801 = vmatpush1.msra.mxu0 %v660
    %802 = vmatprep.subr.mxu0 %v667
    %803 = vmatpush1.msra.mxu0 %v666
    %804 = vmatprep.subr.mxu0 %v673
    %805 = vmatpush1.msra.mxu0 %v672
    %806 = vmatprep.subr.mxu0 %v679
    %807 = vmatpush1.msra.mxu0 %v678
    %808 = vmatprep.subr.mxu0 %v685
    %809 = vmatpush1.msra.mxu0 %v684
    %810 = vmatprep.subr.mxu0 %v691
    %811 = vmatpush1.msra.mxu0 %v690
    %812 = vmatprep.subr.mxu0 %v697
    %813 = vmatpush1.msra.mxu0 %v696
    %814 = vmatprep.subr.mxu0 %v703
    %815 = vmatpush1.msra.mxu0 %v702
    %816 = vmatprep.subr.mxu0 %v709
    %817 = vmatpush1.msra.mxu0 %v708
    %818 = vmatprep.subr.mxu0 %v715
    %819 = vmatpush1.msra.mxu0 %v714
    %820 = vmatprep.subr.mxu0 %v721
    %821 = vmatpush1.msra.mxu0 %v720
    %822 = vmatprep.subr.mxu0 %v727
    %823 = vmatpush1.msra.mxu0 %v726
    %824 = vmatprep.subr.mxu0 %v733
    %825 = vmatpush1.msra.mxu0 %v732
    %826 = vmatprep.subr.mxu0 %v739
    %827 = vmatpush1.msra.mxu0 %v738
    %828 = vmatprep.subr.mxu0 %v745
    %829 = vmatpush1.msra.mxu0 %v744
    %830 = vmatprep.subr.mxu0 %v751
    %831 = vmatpush1.msra.mxu0 %v750
    %832 = vmatprep.subr.mxu0 %v757
    %833 = vmatpush1.msra.mxu0 %v756
    %834 = vmatprep.subr.mxu0 %v763
    %835 = vmatpush1.msra.mxu0 %v762
    %836 = vmatprep.subr.mxu0 %v769
    %837 = vmatpush1.msra.mxu0 %v768
    %838 = vmatprep.mubr.f32.mxu0 %v572
    %839 = vmatmul.mubr.f32.gmra.mrb[0].mxu0 %v571
    %v840 = vpop.f32.mrb[0].mxu0
    %v841 = vadd.f32 %v543, %v840
    %v842 = vpop.f32.mrb[0].mxu0
    %v843 = vadd.f32 %v547, %v842
    %844 = vdwg.mxu0
    %845 = vmatprep.subr.mxu0 %v585
    %846 = vmatpush1.msra.mxu0 %v584
    %847 = vmatprep.subr.mxu0 %v591
    %848 = vmatpush1.msra.mxu0 %v590
    %849 = vmatprep.subr.mxu0 %v597
    %850 = vmatpush1.msra.mxu0 %v596
    %851 = vmatprep.subr.mxu0 %v603
    %852 = vmatpush1.msra.mxu0 %v602
    %853 = vmatprep.subr.mxu0 %v609
    %854 = vmatpush1.msra.mxu0 %v608
    %855 = vmatprep.subr.mxu0 %v615
    %856 = vmatpush1.msra.mxu0 %v614
    %857 = vmatprep.subr.mxu0 %v621
    %858 = vmatpush1.msra.mxu0 %v620
    %859 = vmatprep.subr.mxu0 %v627
    %860 = vmatpush1.msra.mxu0 %v626
    %861 = vmatprep.subr.mxu0 %v633
    %862 = vmatpush1.msra.mxu0 %v632
    %863 = vmatprep.subr.mxu0 %v639
    %864 = vmatpush1.msra.mxu0 %v638
    %865 = vmatprep.subr.mxu0 %v645
    %866 = vmatpush1.msra.mxu0 %v644
    %867 = vmatprep.subr.mxu0 %v651
    %868 = vmatpush1.msra.mxu0 %v650
    %869 = vmatprep.subr.mxu0 %v657
    %870 = vmatpush1.msra.mxu0 %v656
    %871 = vmatprep.subr.mxu0 %v663
    %872 = vmatpush1.msra.mxu0 %v662
    %873 = vmatprep.subr.mxu0 %v669
    %874 = vmatpush1.msra.mxu0 %v668
    %875 = vmatprep.subr.mxu0 %v675
    %876 = vmatpush1.msra.mxu0 %v674
    %877 = vmatprep.subr.mxu0 %v681
    %878 = vmatpush1.msra.mxu0 %v680
    %879 = vmatprep.subr.mxu0 %v687
    %880 = vmatpush1.msra.mxu0 %v686
    %881 = vmatprep.subr.mxu0 %v693
    %882 = vmatpush1.msra.mxu0 %v692
    %883 = vmatprep.subr.mxu0 %v699
    %884 = vmatpush1.msra.mxu0 %v698
    %885 = vmatprep.subr.mxu0 %v705
    %886 = vmatpush1.msra.mxu0 %v704
    %887 = vmatprep.subr.mxu0 %v711
    %888 = vmatpush1.msra.mxu0 %v710
    %889 = vmatprep.subr.mxu0 %v717
    %890 = vmatpush1.msra.mxu0 %v716
    %891 = vmatprep.subr.mxu0 %v723
    %892 = vmatpush1.msra.mxu0 %v722
    %893 = vmatprep.subr.mxu0 %v729
    %894 = vmatpush1.msra.mxu0 %v728
    %895 = vmatprep.subr.mxu0 %v735
    %896 = vmatpush1.msra.mxu0 %v734
    %897 = vmatprep.subr.mxu0 %v741
    %898 = vmatpush1.msra.mxu0 %v740
    %899 = vmatprep.subr.mxu0 %v747
    %900 = vmatpush1.msra.mxu0 %v746
    %901 = vmatprep.subr.mxu0 %v753
    %902 = vmatpush1.msra.mxu0 %v752
    %903 = vmatprep.subr.mxu0 %v759
    %904 = vmatpush1.msra.mxu0 %v758
    %905 = vmatprep.subr.mxu0 %v765
    %906 = vmatpush1.msra.mxu0 %v764
    %907 = vmatprep.subr.mxu0 %v771
    %908 = vmatpush1.msra.mxu0 %v770
    %909 = vmatprep.mubr.f32.mxu0 %v572
    %910 = vmatmul.mubr.f32.gmra.mrb[0].mxu0 %v571
    %v911 = vpop.f32.mrb[0].mxu0
    %v912 = vadd.f32 %v551, %v911
    %v913 = vpop.f32.mrb[0].mxu0
    %v914 = vadd.f32 %v555, %v913
    %915 = vdwg.mxu0
    %916 = vmatprep.subr.mxu0 %v587
    %917 = vmatpush1.msra.mxu0 %v586
    %918 = vmatprep.subr.mxu0 %v593
    %919 = vmatpush1.msra.mxu0 %v592
    %920 = vmatprep.subr.mxu0 %v599
    %921 = vmatpush1.msra.mxu0 %v598
    %922 = vmatprep.subr.mxu0 %v605
    %923 = vmatpush1.msra.mxu0 %v604
    %924 = vmatprep.subr.mxu0 %v611
    %925 = vmatpush1.msra.mxu0 %v610
    %926 = vmatprep.subr.mxu0 %v617
    %927 = vmatpush1.msra.mxu0 %v616
    %928 = vmatprep.subr.mxu0 %v623
    %929 = vmatpush1.msra.mxu0 %v622
    %930 = vmatprep.subr.mxu0 %v629
    %931 = vmatpush1.msra.mxu0 %v628
    %932 = vmatprep.subr.mxu0 %v635
    %933 = vmatpush1.msra.mxu0 %v634
    %934 = vmatprep.subr.mxu0 %v641
    %935 = vmatpush1.msra.mxu0 %v640
    %936 = vmatprep.subr.mxu0 %v647
    %937 = vmatpush1.msra.mxu0 %v646
    %938 = vmatprep.subr.mxu0 %v653
    %939 = vmatpush1.msra.mxu0 %v652
    %940 = vmatprep.subr.mxu0 %v659
    %941 = vmatpush1.msra.mxu0 %v658
    %942 = vmatprep.subr.mxu0 %v665
    %943 = vmatpush1.msra.mxu0 %v664
    %944 = vmatprep.subr.mxu0 %v671
    %945 = vmatpush1.msra.mxu0 %v670
    %946 = vmatprep.subr.mxu0 %v677
    %947 = vmatpush1.msra.mxu0 %v676
    %948 = vmatprep.subr.mxu0 %v683
    %949 = vmatpush1.msra.mxu0 %v682
    %950 = vmatprep.subr.mxu0 %v689
    %951 = vmatpush1.msra.mxu0 %v688
    %952 = vmatprep.subr.mxu0 %v695
    %953 = vmatpush1.msra.mxu0 %v694
    %954 = vmatprep.subr.mxu0 %v701
    %955 = vmatpush1.msra.mxu0 %v700
    %956 = vmatprep.subr.mxu0 %v707
    %957 = vmatpush1.msra.mxu0 %v706
    %958 = vmatprep.subr.mxu0 %v713
    %959 = vmatpush1.msra.mxu0 %v712
    %960 = vmatprep.subr.mxu0 %v719
    %961 = vmatpush1.msra.mxu0 %v718
    %962 = vmatprep.subr.mxu0 %v725
    %963 = vmatpush1.msra.mxu0 %v724
    %964 = vmatprep.subr.mxu0 %v731
    %965 = vmatpush1.msra.mxu0 %v730
    %966 = vmatprep.subr.mxu0 %v737
    %967 = vmatpush1.msra.mxu0 %v736
    %968 = vmatprep.subr.mxu0 %v743
    %969 = vmatpush1.msra.mxu0 %v742
    %970 = vmatprep.subr.mxu0 %v749
    %971 = vmatpush1.msra.mxu0 %v748
    %972 = vmatprep.subr.mxu0 %v755
    %973 = vmatpush1.msra.mxu0 %v754
    %974 = vmatprep.subr.mxu0 %v761
    %975 = vmatpush1.msra.mxu0 %v760
    %976 = vmatprep.subr.mxu0 %v767
    %977 = vmatpush1.msra.mxu0 %v766
    %978 = vmatprep.subr.mxu0 %v773
    %979 = vmatpush1.msra.mxu0 %v772
    %980 = vmatprep.mubr.f32.mxu0 %v572
    %981 = vmatmul.mubr.f32.gmra.mrb[0].mxu0 %v571
    %v982 = vpop.f32.mrb[0].mxu0
    %v983 = vadd.f32 %v559, %v982
    %v984 = vpop.f32.mrb[0].mxu0
    %v985 = vadd.f32 %v563, %v984
    %986 = vdwg.mxu0
    %v987 = vadd.f32 %v576, %v841
    %v988 = vadd.f32 %v577, %v843
    %v989 = vxor.u32 %v987, 2147483648
    %v990 = vxor.u32 %v988, 2147483648
    %v991 = vmul.f32 %v989, 1.442695
    %v992 = vpow.pop %v991
    %v993 = vmul.f32 %v990, 1.442695
    %v994 = vpow.pop %v993
    %v995 = vadd.f32 %v992, 1.0
    %v996 = vadd.f32 %v994, 1.0
    %v997 = vrcp.pop %v995
    %v998 = vmul.f32 1.0, %v997
    %v999 = vrcp.pop %v996
    %v1000 = vmul.f32 1.0, %v999
    %v1001 = vadd.f32 %v578, %v912
    %v1002 = vadd.f32 %v579, %v914
    %v1003 = vxor.u32 %v1001, 2147483648
    %v1004 = vxor.u32 %v1002, 2147483648
    %v1005 = vmul.f32 %v1003, 1.442695
    %v1006 = vpow.pop %v1005
    %v1007 = vmul.f32 %v1004, 1.442695
    %v1008 = vpow.pop %v1007
    %v1009 = vadd.f32 %v1006, 1.0
    %v1010 = vadd.f32 %v1008, 1.0
    %v1011 = vrcp.pop %v1009
    %v1012 = vmul.f32 1.0, %v1011
    %v1013 = vrcp.pop %v1010
    %v1014 = vmul.f32 1.0, %v1013
    %v1015 = vmul.f32 %v998, %v983
    %v1016 = vmul.f32 %v1000, %v985
    %v1017 = vadd.f32 %v580, %v1015
    %v1018 = vadd.f32 %v581, %v1016
    %v1019 = vtanh.pop %v1017
    %v1020 = vtanh.pop %v1018
    %v1021 = vsub.f32 1.0, %v1012
    %v1022 = vsub.f32 1.0, %v1014
    %v1023 = vmul.f32 %v1021, %v1019
    %v1024 = vmul.f32 %v1022, %v1020
    %v1025 = vmul.f32 %v1012, %v571
    %v1026 = vmul.f32 %v1014, %v572
    %v1027 = vadd.f32 %v1023, %v1025
    %v1028 = vadd.f32 %v1024, %v1026
    %p1029 = scmp.lt.s32.totalorder %s570, 8
    %s1030 = scalar_select %p1029, 1, 0
    %v1031 = vstv %s1030
    %vm1032 = vcmp.eq.s32.totalorder %v1031, 1
    %v1033 = vsel %vm1032, %v1027, %v571
    %v1034 = vsel %vm1032, %v1028, %v572
    %s1035 = smul.u32 1, 6
    %s1036 = smul.addr %s1035, 8
    %s1037 = scalar_lea.vmem [#allocation3], %s1036
    %v1038 = vld [vmem:[%s1037] sm:$0xff]
    %v1039 = vld [vmem:[%s1037 + $0x8] sm:$0xff]
    %v1040 = vld [vmem:[%s1037 + $0x10] sm:$0xff]
    %v1041 = vld [vmem:[%s1037 + $0x18] sm:$0xff]
    %v1042 = vld [vmem:[%s1037 + $0x20] sm:$0xff]
    %v1043 = vld [vmem:[%s1037 + $0x28] sm:$0xff]
    %1044 = vmatprep.subr.mxu0 %v583
    %1045 = vmatpush1.msra.mxu0 %v582
    %1046 = vmatprep.subr.mxu0 %v589
    %1047 = vmatpush1.msra.mxu0 %v588
    %1048 = vmatprep.subr.mxu0 %v595
    %1049 = vmatpush1.msra.mxu0 %v594
    %1050 = vmatprep.subr.mxu0 %v601
    %1051 = vmatpush1.msra.mxu0 %v600
    %1052 = vmatprep.subr.mxu0 %v607
    %1053 = vmatpush1.msra.mxu0 %v606
    %1054 = vmatprep.subr.mxu0 %v613
    %1055 = vmatpush1.msra.mxu0 %v612
    %1056 = vmatprep.subr.mxu0 %v619
    %1057 = vmatpush1.msra.mxu0 %v618
    %1058 = vmatprep.subr.mxu0 %v625
    %1059 = vmatpush1.msra.mxu0 %v624
    %1060 = vmatprep.subr.mxu0 %v631
    %1061 = vmatpush1.msra.mxu0 %v630
    %1062 = vmatprep.subr.mxu0 %v637
    %1063 = vmatpush1.msra.mxu0 %v636
    %1064 = vmatprep.subr.mxu0 %v643
    %1065 = vmatpush1.msra.mxu0 %v642
    %1066 = vmatprep.subr.mxu0 %v649
    %1067 = vmatpush1.msra.mxu0 %v648
    %1068 = vmatprep.subr.mxu0 %v655
    %1069 = vmatpush1.msra.mxu0 %v654
    %1070 = vmatprep.subr.mxu0 %v661
    %1071 = vmatpush1.msra.mxu0 %v660
    %1072 = vmatprep.subr.mxu0 %v667
    %1073 = vmatpush1.msra.mxu0 %v666
    %1074 = vmatprep.subr.mxu0 %v673
    %1075 = vmatpush1.msra.mxu0 %v672
    %1076 = vmatprep.subr.mxu0 %v679
    %1077 = vmatpush1.msra.mxu0 %v678
    %1078 = vmatprep.subr.mxu0 %v685
    %1079 = vmatpush1.msra.mxu0 %v684
    %1080 = vmatprep.subr.mxu0 %v691
    %1081 = vmatpush1.msra.mxu0 %v690
    %1082 = vmatprep.subr.mxu0 %v697
    %1083 = vmatpush1.msra.mxu0 %v696
    %1084 = vmatprep.subr.mxu0 %v703
    %1085 = vmatpush1.msra.mxu0 %v702
    %1086 = vmatprep.subr.mxu0 %v709
    %1087 = vmatpush1.msra.mxu0 %v708
    %1088 = vmatprep.subr.mxu0 %v715
    %1089 = vmatpush1.msra.mxu0 %v714
    %1090 = vmatprep.subr.mxu0 %v721
    %1091 = vmatpush1.msra.mxu0 %v720
    %1092 = vmatprep.subr.mxu0 %v727
    %1093 = vmatpush1.msra.mxu0 %v726
    %1094 = vmatprep.subr.mxu0 %v733
    %1095 = vmatpush1.msra.mxu0 %v732
    %1096 = vmatprep.subr.mxu0 %v739
    %1097 = vmatpush1.msra.mxu0 %v738
    %1098 = vmatprep.subr.mxu0 %v745
    %1099 = vmatpush1.msra.mxu0 %v744
    %1100 = vmatprep.subr.mxu0 %v751
    %1101 = vmatpush1.msra.mxu0 %v750
    %1102 = vmatprep.subr.mxu0 %v757
    %1103 = vmatpush1.msra.mxu0 %v756
    %1104 = vmatprep.subr.mxu0 %v763
    %1105 = vmatpush1.msra.mxu0 %v762
    %1106 = vmatprep.subr.mxu0 %v769
    %1107 = vmatpush1.msra.mxu0 %v768
    %1108 = vmatprep.mubr.f32.mxu0 %v1034
    %1109 = vmatmul.mubr.f32.gmra.mrb[0].mxu0 %v1033
    %v1110 = vpop.f32.mrb[0].mxu0
    %v1111 = vadd.f32 %v543, %v1110
    %v1112 = vpop.f32.mrb[0].mxu0
    %v1113 = vadd.f32 %v547, %v1112
    %1114 = vdwg.mxu0
    %1115 = vmatprep.subr.mxu0 %v585
    %1116 = vmatpush1.msra.mxu0 %v584
    %1117 = vmatprep.subr.mxu0 %v591
    %1118 = vmatpush1.msra.mxu0 %v590
    %1119 = vmatprep.subr.mxu0 %v597
    %1120 = vmatpush1.msra.mxu0 %v596
    %1121 = vmatprep.subr.mxu0 %v603
    %1122 = vmatpush1.msra.mxu0 %v602
    %1123 = vmatprep.subr.mxu0 %v609
    %1124 = vmatpush1.msra.mxu0 %v608
    %1125 = vmatprep.subr.mxu0 %v615
    %1126 = vmatpush1.msra.mxu0 %v614
    %1127 = vmatprep.subr.mxu0 %v621
    %1128 = vmatpush1.msra.mxu0 %v620
    %1129 = vmatprep.subr.mxu0 %v627
    %1130 = vmatpush1.msra.mxu0 %v626
    %1131 = vmatprep.subr.mxu0 %v633
    %1132 = vmatpush1.msra.mxu0 %v632
    %1133 = vmatprep.subr.mxu0 %v639
    %1134 = vmatpush1.msra.mxu0 %v638
    %1135 = vmatprep.subr.mxu0 %v645
    %1136 = vmatpush1.msra.mxu0 %v644
    %1137 = vmatprep.subr.mxu0 %v651
    %1138 = vmatpush1.msra.mxu0 %v650
    %1139 = vmatprep.subr.mxu0 %v657
    %1140 = vmatpush1.msra.mxu0 %v656
    %1141 = vmatprep.subr.mxu0 %v663
    %1142 = vmatpush1.msra.mxu0 %v662
    %1143 = vmatprep.subr.mxu0 %v669
    %1144 = vmatpush1.msra.mxu0 %v668
    %1145 = vmatprep.subr.mxu0 %v675
    %1146 = vmatpush1.msra.mxu0 %v674
    %1147 = vmatprep.subr.mxu0 %v681
    %1148 = vmatpush1.msra.mxu0 %v680
    %1149 = vmatprep.subr.mxu0 %v687
    %1150 = vmatpush1.msra.mxu0 %v686
    %1151 = vmatprep.subr.mxu0 %v693
    %1152 = vmatpush1.msra.mxu0 %v692
    %1153 = vmatprep.subr.mxu0 %v699
    %1154 = vmatpush1.msra.mxu0 %v698
    %1155 = vmatprep.subr.mxu0 %v705
    %1156 = vmatpush1.msra.mxu0 %v704
    %1157 = vmatprep.subr.mxu0 %v711
    %1158 = vmatpush1.msra.mxu0 %v710
    %1159 = vmatprep.subr.mxu0 %v717
    %1160 = vmatpush1.msra.mxu0 %v716
    %1161 = vmatprep.subr.mxu0 %v723
    %1162 = vmatpush1.msra.mxu0 %v722
    %1163 = vmatprep.subr.mxu0 %v729
    %1164 = vmatpush1.msra.mxu0 %v728
    %1165 = vmatprep.subr.mxu0 %v735
    %1166 = vmatpush1.msra.mxu0 %v734
    %1167 = vmatprep.subr.mxu0 %v741
    %1168 = vmatpush1.msra.mxu0 %v740
    %1169 = vmatprep.subr.mxu0 %v747
    %1170 = vmatpush1.msra.mxu0 %v746
    %1171 = vmatprep.subr.mxu0 %v753
    %1172 = vmatpush1.msra.mxu0 %v752
    %1173 = vmatprep.subr.mxu0 %v759
    %1174 = vmatpush1.msra.mxu0 %v758
    %1175 = vmatprep.subr.mxu0 %v765
    %1176 = vmatpush1.msra.mxu0 %v764
    %1177 = vmatprep.subr.mxu0 %v771
    %1178 = vmatpush1.msra.mxu0 %v770
    %1179 = vmatprep.mubr.f32.mxu0 %v1034
    %1180 = vmatmul.mubr.f32.gmra.mrb[0].mxu0 %v1033
    %v1181 = vpop.f32.mrb[0].mxu0
    %v1182 = vadd.f32 %v551, %v1181
    %v1183 = vpop.f32.mrb[0].mxu0
    %v1184 = vadd.f32 %v555, %v1183
    %1185 = vdwg.mxu0
    %1186 = vmatprep.subr.mxu0 %v587
    %1187 = vmatpush1.msra.mxu0 %v586
    %1188 = vmatprep.subr.mxu0 %v593
    %1189 = vmatpush1.msra.mxu0 %v592
    %1190 = vmatprep.subr.mxu0 %v599
    %1191 = vmatpush1.msra.mxu0 %v598
    %1192 = vmatprep.subr.mxu0 %v605
    %1193 = vmatpush1.msra.mxu0 %v604
    %1194 = vmatprep.subr.mxu0 %v611
    %1195 = vmatpush1.msra.mxu0 %v610
    %1196 = vmatprep.subr.mxu0 %v617
    %1197 = vmatpush1.msra.mxu0 %v616
    %1198 = vmatprep.subr.mxu0 %v623
    %1199 = vmatpush1.msra.mxu0 %v622
    %1200 = vmatprep.subr.mxu0 %v629
    %1201 = vmatpush1.msra.mxu0 %v628
    %1202 = vmatprep.subr.mxu0 %v635
    %1203 = vmatpush1.msra.mxu0 %v634
    %1204 = vmatprep.subr.mxu0 %v641
    %1205 = vmatpush1.msra.mxu0 %v640
    %1206 = vmatprep.subr.mxu0 %v647
    %1207 = vmatpush1.msra.mxu0 %v646
    %1208 = vmatprep.subr.mxu0 %v653
    %1209 = vmatpush1.msra.mxu0 %v652
    %1210 = vmatprep.subr.mxu0 %v659
    %1211 = vmatpush1.msra.mxu0 %v658
    %1212 = vmatprep.subr.mxu0 %v665
    %1213 = vmatpush1.msra.mxu0 %v664
    %1214 = vmatprep.subr.mxu0 %v671
    %1215 = vmatpush1.msra.mxu0 %v670
    %1216 = vmatprep.subr.mxu0 %v677
    %1217 = vmatpush1.msra.mxu0 %v676
    %1218 = vmatprep.subr.mxu0 %v683
    %1219 = vmatpush1.msra.mxu0 %v682
    %1220 = vmatprep.subr.mxu0 %v689
    %1221 = vmatpush1.msra.mxu0 %v688
    %1222 = vmatprep.subr.mxu0 %v695
    %1223 = vmatpush1.msra.mxu0 %v694
    %1224 = vmatprep.subr.mxu0 %v701
    %1225 = vmatpush1.msra.mxu0 %v700
    %1226 = vmatprep.subr.mxu0 %v707
    %1227 = vmatpush1.msra.mxu0 %v706
    %1228 = vmatprep.subr.mxu0 %v713
    %1229 = vmatpush1.msra.mxu0 %v712
    %1230 = vmatprep.subr.mxu0 %v719
    %1231 = vmatpush1.msra.mxu0 %v718
    %1232 = vmatprep.subr.mxu0 %v725
    %1233 = vmatpush1.msra.mxu0 %v724
    %1234 = vmatprep.subr.mxu0 %v731
    %1235 = vmatpush1.msra.mxu0 %v730
    %1236 = vmatprep.subr.mxu0 %v737
    %1237 = vmatpush1.msra.mxu0 %v736
    %1238 = vmatprep.subr.mxu0 %v743
    %1239 = vmatpush1.msra.mxu0 %v742
    %1240 = vmatprep.subr.mxu0 %v749
    %1241 = vmatpush1.msra.mxu0 %v748
    %1242 = vmatprep.subr.mxu0 %v755
    %1243 = vmatpush1.msra.mxu0 %v754
    %1244 = vmatprep.subr.mxu0 %v761
    %1245 = vmatpush1.msra.mxu0 %v760
    %1246 = vmatprep.subr.mxu0 %v767
    %1247 = vmatpush1.msra.mxu0 %v766
    %1248 = vmatprep.subr.mxu0 %v773
    %1249 = vmatpush1.msra.mxu0 %v772
    %1250 = vmatprep.mubr.f32.mxu0 %v1034
    %1251 = vmatmul.mubr.f32.gmra.mrb[0].mxu0 %v1033
    %v1252 = vpop.f32.mrb[0].mxu0
    %v1253 = vadd.f32 %v559, %v1252
    %v1254 = vpop.f32.mrb[0].mxu0
    %v1255 = vadd.f32 %v563, %v1254
    %1256 = vdwg.mxu0
    %v1257 = vadd.f32 %v1038, %v1111
    %v1258 = vadd.f32 %v1039, %v1113
    %v1259 = vxor.u32 %v1257, 2147483648
    %v1260 = vxor.u32 %v1258, 2147483648
    %v1261 = vmul.f32 %v1259, 1.442695
    %v1262 = vpow.pop %v1261
    %v1263 = vmul.f32 %v1260, 1.442695
    %v1264 = vpow.pop %v1263
    %v1265 = vadd.f32 %v1262, 1.0
    %v1266 = vadd.f32 %v1264, 1.0
    %v1267 = vrcp.pop %v1265
    %v1268 = vmul.f32 1.0, %v1267
    %v1269 = vrcp.pop %v1266
    %v1270 = vmul.f32 1.0, %v1269
    %v1271 = vadd.f32 %v1040, %v1182
    %v1272 = vadd.f32 %v1041, %v1184
    %v1273 = vxor.u32 %v1271, 2147483648
    %v1274 = vxor.u32 %v1272, 2147483648
    %v1275 = vmul.f32 %v1273, 1.442695
    %v1276 = vpow.pop %v1275
    %v1277 = vmul.f32 %v1274, 1.442695
    %v1278 = vpow.pop %v1277
    %v1279 = vadd.f32 %v1276, 1.0
    %v1280 = vadd.f32 %v1278, 1.0
    %v1281 = vrcp.pop %v1279
    %v1282 = vmul.f32 1.0, %v1281
    %v1283 = vrcp.pop %v1280
    %v1284 = vmul.f32 1.0, %v1283
    %v1285 = vmul.f32 %v1268, %v1253
    %v1286 = vmul.f32 %v1270, %v1255
    %v1287 = vadd.f32 %v1042, %v1285
    %v1288 = vadd.f32 %v1043, %v1286
    %v1289 = vtanh.pop %v1287
    %v1290 = vtanh.pop %v1288
    %v1291 = vsub.f32 1.0, %v1282
    %v1292 = vsub.f32 1.0, %v1284
    %v1293 = vmul.f32 %v1291, %v1289
    %v1294 = vmul.f32 %v1292, %v1290
    %v1295 = vmul.f32 %v1282, %v1033
    %v1296 = vmul.f32 %v1284, %v1034
    %v1297 = vadd.f32 %v1293, %v1295
    %v1298 = vadd.f32 %v1294, %v1296
    %s1299 = sadd.s32 %s570, 1
    %p1300 = scmp.lt.s32.totalorder %s1299, 8
    %s1301 = scalar_select %p1300, 1, 0
    %v1302 = vstv %s1301
    %vm1303 = vcmp.eq.s32.totalorder %v1302, 1
    %v1304 = vsel %vm1303, %v1297, %v1033
    %v1305 = vsel %vm1303, %v1298, %v1034
    %s1306 = smul.u32 2, 6
    %s1307 = smul.addr %s1306, 8
    %s1308 = scalar_lea.vmem [#allocation3], %s1307
    %v1309 = vld [vmem:[%s1308] sm:$0xff]
    %v1310 = vld [vmem:[%s1308 + $0x8] sm:$0xff]
    %v1311 = vld [vmem:[%s1308 + $0x10] sm:$0xff]
    %v1312 = vld [vmem:[%s1308 + $0x18] sm:$0xff]
    %v1313 = vld [vmem:[%s1308 + $0x20] sm:$0xff]
    %v1314 = vld [vmem:[%s1308 + $0x28] sm:$0xff]
    %1315 = vmatprep.subr.mxu0 %v583
    %1316 = vmatpush1.msra.mxu0 %v582
    %1317 = vmatprep.subr.mxu0 %v589
    %1318 = vmatpush1.msra.mxu0 %v588
    %1319 = vmatprep.subr.mxu0 %v595
    %1320 = vmatpush1.msra.mxu0 %v594
    %1321 = vmatprep.subr.mxu0 %v601
    %1322 = vmatpush1.msra.mxu0 %v600
    %1323 = vmatprep.subr.mxu0 %v607
    %1324 = vmatpush1.msra.mxu0 %v606
    %1325 = vmatprep.subr.mxu0 %v613
    %1326 = vmatpush1.msra.mxu0 %v612
    %1327 = vmatprep.subr.mxu0 %v619
    %1328 = vmatpush1.msra.mxu0 %v618
    %1329 = vmatprep.subr.mxu0 %v625
    %1330 = vmatpush1.msra.mxu0 %v624
    %1331 = vmatprep.subr.mxu0 %v631
    %1332 = vmatpush1.msra.mxu0 %v630
    %1333 = vmatprep.subr.mxu0 %v637
    %1334 = vmatpush1.msra.mxu0 %v636
    %1335 = vmatprep.subr.mxu0 %v643
    %1336 = vmatpush1.msra.mxu0 %v642
    %1337 = vmatprep.subr.mxu0 %v649
    %1338 = vmatpush1.msra.mxu0 %v648
    %1339 = vmatprep.subr.mxu0 %v655
    %1340 = vmatpush1.msra.mxu0 %v654
    %1341 = vmatprep.subr.mxu0 %v661
    %1342 = vmatpush1.msra.mxu0 %v660
    %1343 = vmatprep.subr.mxu0 %v667
    %1344 = vmatpush1.msra.mxu0 %v666
    %1345 = vmatprep.subr.mxu0 %v673
    %1346 = vmatpush1.msra.mxu0 %v672
    %1347 = vmatprep.subr.mxu0 %v679
    %1348 = vmatpush1.msra.mxu0 %v678
    %1349 = vmatprep.subr.mxu0 %v685
    %1350 = vmatpush1.msra.mxu0 %v684
    %1351 = vmatprep.subr.mxu0 %v691
    %1352 = vmatpush1.msra.mxu0 %v690
    %1353 = vmatprep.subr.mxu0 %v697
    %1354 = vmatpush1.msra.mxu0 %v696
    %1355 = vmatprep.subr.mxu0 %v703
    %1356 = vmatpush1.msra.mxu0 %v702
    %1357 = vmatprep.subr.mxu0 %v709
    %1358 = vmatpush1.msra.mxu0 %v708
    %1359 = vmatprep.subr.mxu0 %v715
    %1360 = vmatpush1.msra.mxu0 %v714
    %1361 = vmatprep.subr.mxu0 %v721
    %1362 = vmatpush1.msra.mxu0 %v720
    %1363 = vmatprep.subr.mxu0 %v727
    %1364 = vmatpush1.msra.mxu0 %v726
    %1365 = vmatprep.subr.mxu0 %v733
    %1366 = vmatpush1.msra.mxu0 %v732
    %1367 = vmatprep.subr.mxu0 %v739
    %1368 = vmatpush1.msra.mxu0 %v738
    %1369 = vmatprep.subr.mxu0 %v745
    %1370 = vmatpush1.msra.mxu0 %v744
    %1371 = vmatprep.subr.mxu0 %v751
    %1372 = vmatpush1.msra.mxu0 %v750
    %1373 = vmatprep.subr.mxu0 %v757
    %1374 = vmatpush1.msra.mxu0 %v756
    %1375 = vmatprep.subr.mxu0 %v763
    %1376 = vmatpush1.msra.mxu0 %v762
    %1377 = vmatprep.subr.mxu0 %v769
    %1378 = vmatpush1.msra.mxu0 %v768
    %1379 = vmatprep.mubr.f32.mxu0 %v1305
    %1380 = vmatmul.mubr.f32.gmra.mrb[0].mxu0 %v1304
    %v1381 = vpop.f32.mrb[0].mxu0
    %v1382 = vadd.f32 %v543, %v1381
    %v1383 = vpop.f32.mrb[0].mxu0
    %v1384 = vadd.f32 %v547, %v1383
    %1385 = vdwg.mxu0
    %1386 = vmatprep.subr.mxu0 %v585
    %1387 = vmatpush1.msra.mxu0 %v584
    %1388 = vmatprep.subr.mxu0 %v591
    %1389 = vmatpush1.msra.mxu0 %v590
    %1390 = vmatprep.subr.mxu0 %v597
    %1391 = vmatpush1.msra.mxu0 %v596
    %1392 = vmatprep.subr.mxu0 %v603
    %1393 = vmatpush1.msra.mxu0 %v602
    %1394 = vmatprep.subr.mxu0 %v609
    %1395 = vmatpush1.msra.mxu0 %v608
    %1396 = vmatprep.subr.mxu0 %v615
    %1397 = vmatpush1.msra.mxu0 %v614
    %1398 = vmatprep.subr.mxu0 %v621
    %1399 = vmatpush1.msra.mxu0 %v620
    %1400 = vmatprep.subr.mxu0 %v627
    %1401 = vmatpush1.msra.mxu0 %v626
    %1402 = vmatprep.subr.mxu0 %v633
    %1403 = vmatpush1.msra.mxu0 %v632
    %1404 = vmatprep.subr.mxu0 %v639
    %1405 = vmatpush1.msra.mxu0 %v638
    %1406 = vmatprep.subr.mxu0 %v645
    %1407 = vmatpush1.msra.mxu0 %v644
    %1408 = vmatprep.subr.mxu0 %v651
    %1409 = vmatpush1.msra.mxu0 %v650
    %1410 = vmatprep.subr.mxu0 %v657
    %1411 = vmatpush1.msra.mxu0 %v656
    %1412 = vmatprep.subr.mxu0 %v663
    %1413 = vmatpush1.msra.mxu0 %v662
    %1414 = vmatprep.subr.mxu0 %v669
    %1415 = vmatpush1.msra.mxu0 %v668
    %1416 = vmatprep.subr.mxu0 %v675
    %1417 = vmatpush1.msra.mxu0 %v674
    %1418 = vmatprep.subr.mxu0 %v681
    %1419 = vmatpush1.msra.mxu0 %v680
    %1420 = vmatprep.subr.mxu0 %v687
    %1421 = vmatpush1.msra.mxu0 %v686
    %1422 = vmatprep.subr.mxu0 %v693
    %1423 = vmatpush1.msra.mxu0 %v692
    %1424 = vmatprep.subr.mxu0 %v699
    %1425 = vmatpush1.msra.mxu0 %v698
    %1426 = vmatprep.subr.mxu0 %v705
    %1427 = vmatpush1.msra.mxu0 %v704
    %1428 = vmatprep.subr.mxu0 %v711
    %1429 = vmatpush1.msra.mxu0 %v710
    %1430 = vmatprep.subr.mxu0 %v717
    %1431 = vmatpush1.msra.mxu0 %v716
    %1432 = vmatprep.subr.mxu0 %v723
    %1433 = vmatpush1.msra.mxu0 %v722
    %1434 = vmatprep.subr.mxu0 %v729
    %1435 = vmatpush1.msra.mxu0 %v728
    %1436 = vmatprep.subr.mxu0 %v735
    %1437 = vmatpush1.msra.mxu0 %v734
    %1438 = vmatprep.subr.mxu0 %v741
    %1439 = vmatpush1.msra.mxu0 %v740
    %1440 = vmatprep.subr.mxu0 %v747
    %1441 = vmatpush1.msra.mxu0 %v746
    %1442 = vmatprep.subr.mxu0 %v753
    %1443 = vmatpush1.msra.mxu0 %v752
    %1444 = vmatprep.subr.mxu0 %v759
    %1445 = vmatpush1.msra.mxu0 %v758
    %1446 = vmatprep.subr.mxu0 %v765
    %1447 = vmatpush1.msra.mxu0 %v764
    %1448 = vmatprep.subr.mxu0 %v771
    %1449 = vmatpush1.msra.mxu0 %v770
    %1450 = vmatprep.mubr.f32.mxu0 %v1305
    %1451 = vmatmul.mubr.f32.gmra.mrb[0].mxu0 %v1304
    %v1452 = vpop.f32.mrb[0].mxu0
    %v1453 = vadd.f32 %v551, %v1452
    %v1454 = vpop.f32.mrb[0].mxu0
    %v1455 = vadd.f32 %v555, %v1454
    %1456 = vdwg.mxu0
    %1457 = vmatprep.subr.mxu0 %v587
    %1458 = vmatpush1.msra.mxu0 %v586
    %1459 = vmatprep.subr.mxu0 %v593
    %1460 = vmatpush1.msra.mxu0 %v592
    %1461 = vmatprep.subr.mxu0 %v599
    %1462 = vmatpush1.msra.mxu0 %v598
    %1463 = vmatprep.subr.mxu0 %v605
    %1464 = vmatpush1.msra.mxu0 %v604
    %1465 = vmatprep.subr.mxu0 %v611
    %1466 = vmatpush1.msra.mxu0 %v610
    %1467 = vmatprep.subr.mxu0 %v617
    %1468 = vmatpush1.msra.mxu0 %v616
    %1469 = vmatprep.subr.mxu0 %v623
    %1470 = vmatpush1.msra.mxu0 %v622
    %1471 = vmatprep.subr.mxu0 %v629
    %1472 = vmatpush1.msra.mxu0 %v628
    %1473 = vmatprep.subr.mxu0 %v635
    %1474 = vmatpush1.msra.mxu0 %v634
    %1475 = vmatprep.subr.mxu0 %v641
    %1476 = vmatpush1.msra.mxu0 %v640
    %1477 = vmatprep.subr.mxu0 %v647
    %1478 = vmatpush1.msra.mxu0 %v646
    %1479 = vmatprep.subr.mxu0 %v653
    %1480 = vmatpush1.msra.mxu0 %v652
    %1481 = vmatprep.subr.mxu0 %v659
    %1482 = vmatpush1.msra.mxu0 %v658
    %1483 = vmatprep.subr.mxu0 %v665
    %1484 = vmatpush1.msra.mxu0 %v664
    %1485 = vmatprep.subr.mxu0 %v671
    %1486 = vmatpush1.msra.mxu0 %v670
    %1487 = vmatprep.subr.mxu0 %v677
    %1488 = vmatpush1.msra.mxu0 %v676
    %1489 = vmatprep.subr.mxu0 %v683
    %1490 = vmatpush1.msra.mxu0 %v682
    %1491 = vmatprep.subr.mxu0 %v689
    %1492 = vmatpush1.msra.mxu0 %v688
    %1493 = vmatprep.subr.mxu0 %v695
    %1494 = vmatpush1.msra.mxu0 %v694
    %1495 = vmatprep.subr.mxu0 %v701
    %1496 = vmatpush1.msra.mxu0 %v700
    %1497 = vmatprep.subr.mxu0 %v707
    %1498 = vmatpush1.msra.mxu0 %v706
    %1499 = vmatprep.subr.mxu0 %v713
    %1500 = vmatpush1.msra.mxu0 %v712
    %1501 = vmatprep.subr.mxu0 %v719
    %1502 = vmatpush1.msra.mxu0 %v718
    %1503 = vmatprep.subr.mxu0 %v725
    %1504 = vmatpush1.msra.mxu0 %v724
    %1505 = vmatprep.subr.mxu0 %v731
    %1506 = vmatpush1.msra.mxu0 %v730
    %1507 = vmatprep.subr.mxu0 %v737
    %1508 = vmatpush1.msra.mxu0 %v736
    %1509 = vmatprep.subr.mxu0 %v743
    %1510 = vmatpush1.msra.mxu0 %v742
    %1511 = vmatprep.subr.mxu0 %v749
    %1512 = vmatpush1.msra.mxu0 %v748
    %1513 = vmatprep.subr.mxu0 %v755
    %1514 = vmatpush1.msra.mxu0 %v754
    %1515 = vmatprep.subr.mxu0 %v761
    %1516 = vmatpush1.msra.mxu0 %v760
    %1517 = vmatprep.subr.mxu0 %v767
    %1518 = vmatpush1.msra.mxu0 %v766
    %1519 = vmatprep.subr.mxu0 %v773
    %1520 = vmatpush1.msra.mxu0 %v772
    %1521 = vmatprep.mubr.f32.mxu0 %v1305
    %1522 = vmatmul.mubr.f32.gmra.mrb[0].mxu0 %v1304
    %v1523 = vpop.f32.mrb[0].mxu0
    %v1524 = vadd.f32 %v559, %v1523
    %v1525 = vpop.f32.mrb[0].mxu0
    %v1526 = vadd.f32 %v563, %v1525
    %1527 = vdwg.mxu0
    %v1528 = vadd.f32 %v1309, %v1382
    %v1529 = vadd.f32 %v1310, %v1384
    %v1530 = vxor.u32 %v1528, 2147483648
    %v1531 = vxor.u32 %v1529, 2147483648
    %v1532 = vmul.f32 %v1530, 1.442695
    %v1533 = vpow.pop %v1532
    %v1534 = vmul.f32 %v1531, 1.442695
    %v1535 = vpow.pop %v1534
    %v1536 = vadd.f32 %v1533, 1.0
    %v1537 = vadd.f32 %v1535, 1.0
    %v1538 = vrcp.pop %v1536
    %v1539 = vmul.f32 1.0, %v1538
    %v1540 = vrcp.pop %v1537
    %v1541 = vmul.f32 1.0, %v1540
    %v1542 = vadd.f32 %v1311, %v1453
    %v1543 = vadd.f32 %v1312, %v1455
    %v1544 = vxor.u32 %v1542, 2147483648
    %v1545 = vxor.u32 %v1543, 2147483648
    %v1546 = vmul.f32 %v1544, 1.442695
    %v1547 = vpow.pop %v1546
    %v1548 = vmul.f32 %v1545, 1.442695
    %v1549 = vpow.pop %v1548
    %v1550 = vadd.f32 %v1547, 1.0
    %v1551 = vadd.f32 %v1549, 1.0
    %v1552 = vrcp.pop %v1550
    %v1553 = vmul.f32 1.0, %v1552
    %v1554 = vrcp.pop %v1551
    %v1555 = vmul.f32 1.0, %v1554
    %v1556 = vmul.f32 %v1539, %v1524
    %v1557 = vmul.f32 %v1541, %v1526
    %v1558 = vadd.f32 %v1313, %v1556
    %v1559 = vadd.f32 %v1314, %v1557
    %v1560 = vtanh.pop %v1558
    %v1561 = vtanh.pop %v1559
    %v1562 = vsub.f32 1.0, %v1553
    %v1563 = vsub.f32 1.0, %v1555
    %v1564 = vmul.f32 %v1562, %v1560
    %v1565 = vmul.f32 %v1563, %v1561
    %v1566 = vmul.f32 %v1553, %v1304
    %v1567 = vmul.f32 %v1555, %v1305
    %v1568 = vadd.f32 %v1564, %v1566
    %v1569 = vadd.f32 %v1565, %v1567
    %s1570 = sadd.s32 %s570, 2
    %p1571 = scmp.lt.s32.totalorder %s1570, 8
    %s1572 = scalar_select %p1571, 1, 0
    %v1573 = vstv %s1572
    %vm1574 = vcmp.eq.s32.totalorder %v1573, 1
    %v1575 = vsel %vm1574, %v1568, %v1304
    %v1576 = vsel %vm1574, %v1569, %v1305
    %s1577 = smul.u32 3, 6
    %s1578 = smul.addr %s1577, 8
    %s1579 = scalar_lea.vmem [#allocation3], %s1578
    %v1580 = vld [vmem:[%s1579] sm:$0xff]
    %v1581 = vld [vmem:[%s1579 + $0x8] sm:$0xff]
    %v1582 = vld [vmem:[%s1579 + $0x10] sm:$0xff]
    %v1583 = vld [vmem:[%s1579 + $0x18] sm:$0xff]
    %v1584 = vld [vmem:[%s1579 + $0x20] sm:$0xff]
    %v1585 = vld [vmem:[%s1579 + $0x28] sm:$0xff]
    %1586 = vmatprep.subr.mxu0 %v583
    %1587 = vmatpush1.msra.mxu0 %v582
    %1588 = vmatprep.subr.mxu0 %v589
    %1589 = vmatpush1.msra.mxu0 %v588
    %1590 = vmatprep.subr.mxu0 %v595
    %1591 = vmatpush1.msra.mxu0 %v594
    %1592 = vmatprep.subr.mxu0 %v601
    %1593 = vmatpush1.msra.mxu0 %v600
    %1594 = vmatprep.subr.mxu0 %v607
    %1595 = vmatpush1.msra.mxu0 %v606
    %1596 = vmatprep.subr.mxu0 %v613
    %1597 = vmatpush1.msra.mxu0 %v612
    %1598 = vmatprep.subr.mxu0 %v619
    %1599 = vmatpush1.msra.mxu0 %v618
    %1600 = vmatprep.subr.mxu0 %v625
    %1601 = vmatpush1.msra.mxu0 %v624
    %1602 = vmatprep.subr.mxu0 %v631
    %1603 = vmatpush1.msra.mxu0 %v630
    %1604 = vmatprep.subr.mxu0 %v637
    %1605 = vmatpush1.msra.mxu0 %v636
    %1606 = vmatprep.subr.mxu0 %v643
    %1607 = vmatpush1.msra.mxu0 %v642
    %1608 = vmatprep.subr.mxu0 %v649
    %1609 = vmatpush1.msra.mxu0 %v648
    %1610 = vmatprep.subr.mxu0 %v655
    %1611 = vmatpush1.msra.mxu0 %v654
    %1612 = vmatprep.subr.mxu0 %v661
    %1613 = vmatpush1.msra.mxu0 %v660
    %1614 = vmatprep.subr.mxu0 %v667
    %1615 = vmatpush1.msra.mxu0 %v666
    %1616 = vmatprep.subr.mxu0 %v673
    %1617 = vmatpush1.msra.mxu0 %v672
    %1618 = vmatprep.subr.mxu0 %v679
    %1619 = vmatpush1.msra.mxu0 %v678
    %1620 = vmatprep.subr.mxu0 %v685
    %1621 = vmatpush1.msra.mxu0 %v684
    %1622 = vmatprep.subr.mxu0 %v691
    %1623 = vmatpush1.msra.mxu0 %v690
    %1624 = vmatprep.subr.mxu0 %v697
    %1625 = vmatpush1.msra.mxu0 %v696
    %1626 = vmatprep.subr.mxu0 %v703
    %1627 = vmatpush1.msra.mxu0 %v702
    %1628 = vmatprep.subr.mxu0 %v709
    %1629 = vmatpush1.msra.mxu0 %v708
    %1630 = vmatprep.subr.mxu0 %v715
    %1631 = vmatpush1.msra.mxu0 %v714
    %1632 = vmatprep.subr.mxu0 %v721
    %1633 = vmatpush1.msra.mxu0 %v720
    %1634 = vmatprep.subr.mxu0 %v727
    %1635 = vmatpush1.msra.mxu0 %v726
    %1636 = vmatprep.subr.mxu0 %v733
    %1637 = vmatpush1.msra.mxu0 %v732
    %1638 = vmatprep.subr.mxu0 %v739
    %1639 = vmatpush1.msra.mxu0 %v738
    %1640 = vmatprep.subr.mxu0 %v745
    %1641 = vmatpush1.msra.mxu0 %v744
    %1642 = vmatprep.subr.mxu0 %v751
    %1643 = vmatpush1.msra.mxu0 %v750
    %1644 = vmatprep.subr.mxu0 %v757
    %1645 = vmatpush1.msra.mxu0 %v756
    %1646 = vmatprep.subr.mxu0 %v763
    %1647 = vmatpush1.msra.mxu0 %v762
    %1648 = vmatprep.subr.mxu0 %v769
    %1649 = vmatpush1.msra.mxu0 %v768
    %1650 = vmatprep.mubr.f32.mxu0 %v1576
    %1651 = vmatmul.mubr.f32.gmra.mrb[0].mxu0 %v1575
    %v1652 = vpop.f32.mrb[0].mxu0
    %v1653 = vadd.f32 %v543, %v1652
    %v1654 = vpop.f32.mrb[0].mxu0
    %v1655 = vadd.f32 %v547, %v1654
    %1656 = vdwg.mxu0
    %1657 = vmatprep.subr.mxu0 %v585
    %1658 = vmatpush1.msra.mxu0 %v584
    %1659 = vmatprep.subr.mxu0 %v591
    %1660 = vmatpush1.msra.mxu0 %v590
    %1661 = vmatprep.subr.mxu0 %v597
    %1662 = vmatpush1.msra.mxu0 %v596
    %1663 = vmatprep.subr.mxu0 %v603
    %1664 = vmatpush1.msra.mxu0 %v602
    %1665 = vmatprep.subr.mxu0 %v609
    %1666 = vmatpush1.msra.mxu0 %v608
    %1667 = vmatprep.subr.mxu0 %v615
    %1668 = vmatpush1.msra.mxu0 %v614
    %1669 = vmatprep.subr.mxu0 %v621
    %1670 = vmatpush1.msra.mxu0 %v620
    %1671 = vmatprep.subr.mxu0 %v627
    %1672 = vmatpush1.msra.mxu0 %v626
    %1673 = vmatprep.subr.mxu0 %v633
    %1674 = vmatpush1.msra.mxu0 %v632
    %1675 = vmatprep.subr.mxu0 %v639
    %1676 = vmatpush1.msra.mxu0 %v638
    %1677 = vmatprep.subr.mxu0 %v645
    %1678 = vmatpush1.msra.mxu0 %v644
    %1679 = vmatprep.subr.mxu0 %v651
    %1680 = vmatpush1.msra.mxu0 %v650
    %1681 = vmatprep.subr.mxu0 %v657
    %1682 = vmatpush1.msra.mxu0 %v656
    %1683 = vmatprep.subr.mxu0 %v663
    %1684 = vmatpush1.msra.mxu0 %v662
    %1685 = vmatprep.subr.mxu0 %v669
    %1686 = vmatpush1.msra.mxu0 %v668
    %1687 = vmatprep.subr.mxu0 %v675
    %1688 = vmatpush1.msra.mxu0 %v674
    %1689 = vmatprep.subr.mxu0 %v681
    %1690 = vmatpush1.msra.mxu0 %v680
    %1691 = vmatprep.subr.mxu0 %v687
    %1692 = vmatpush1.msra.mxu0 %v686
    %1693 = vmatprep.subr.mxu0 %v693
    %1694 = vmatpush1.msra.mxu0 %v692
    %1695 = vmatprep.subr.mxu0 %v699
    %1696 = vmatpush1.msra.mxu0 %v698
    %1697 = vmatprep.subr.mxu0 %v705
    %1698 = vmatpush1.msra.mxu0 %v704
    %1699 = vmatprep.subr.mxu0 %v711
    %1700 = vmatpush1.msra.mxu0 %v710
    %1701 = vmatprep.subr.mxu0 %v717
    %1702 = vmatpush1.msra.mxu0 %v716
    %1703 = vmatprep.subr.mxu0 %v723
    %1704 = vmatpush1.msra.mxu0 %v722
    %1705 = vmatprep.subr.mxu0 %v729
    %1706 = vmatpush1.msra.mxu0 %v728
    %1707 = vmatprep.subr.mxu0 %v735
    %1708 = vmatpush1.msra.mxu0 %v734
    %1709 = vmatprep.subr.mxu0 %v741
    %1710 = vmatpush1.msra.mxu0 %v740
    %1711 = vmatprep.subr.mxu0 %v747
    %1712 = vmatpush1.msra.mxu0 %v746
    %1713 = vmatprep.subr.mxu0 %v753
    %1714 = vmatpush1.msra.mxu0 %v752
    %1715 = vmatprep.subr.mxu0 %v759
    %1716 = vmatpush1.msra.mxu0 %v758
    %1717 = vmatprep.subr.mxu0 %v765
    %1718 = vmatpush1.msra.mxu0 %v764
    %1719 = vmatprep.subr.mxu0 %v771
    %1720 = vmatpush1.msra.mxu0 %v770
    %1721 = vmatprep.mubr.f32.mxu0 %v1576
    %1722 = vmatmul.mubr.f32.gmra.mrb[0].mxu0 %v1575
    %v1723 = vpop.f32.mrb[0].mxu0
    %v1724 = vadd.f32 %v551, %v1723
    %v1725 = vpop.f32.mrb[0].mxu0
    %v1726 = vadd.f32 %v555, %v1725
    %1727 = vdwg.mxu0
    %1728 = vmatprep.subr.mxu0 %v587
    %1729 = vmatpush1.msra.mxu0 %v586
    %1730 = vmatprep.subr.mxu0 %v593
    %1731 = vmatpush1.msra.mxu0 %v592
    %1732 = vmatprep.subr.mxu0 %v599
    %1733 = vmatpush1.msra.mxu0 %v598
    %1734 = vmatprep.subr.mxu0 %v605
    %1735 = vmatpush1.msra.mxu0 %v604
    %1736 = vmatprep.subr.mxu0 %v611
    %1737 = vmatpush1.msra.mxu0 %v610
    %1738 = vmatprep.subr.mxu0 %v617
    %1739 = vmatpush1.msra.mxu0 %v616
    %1740 = vmatprep.subr.mxu0 %v623
    %1741 = vmatpush1.msra.mxu0 %v622
    %1742 = vmatprep.subr.mxu0 %v629
    %1743 = vmatpush1.msra.mxu0 %v628
    %1744 = vmatprep.subr.mxu0 %v635
    %1745 = vmatpush1.msra.mxu0 %v634
    %1746 = vmatprep.subr.mxu0 %v641
    %1747 = vmatpush1.msra.mxu0 %v640
    %1748 = vmatprep.subr.mxu0 %v647
    %1749 = vmatpush1.msra.mxu0 %v646
    %1750 = vmatprep.subr.mxu0 %v653
    %1751 = vmatpush1.msra.mxu0 %v652
    %1752 = vmatprep.subr.mxu0 %v659
    %1753 = vmatpush1.msra.mxu0 %v658
    %1754 = vmatprep.subr.mxu0 %v665
    %1755 = vmatpush1.msra.mxu0 %v664
    %1756 = vmatprep.subr.mxu0 %v671
    %1757 = vmatpush1.msra.mxu0 %v670
    %1758 = vmatprep.subr.mxu0 %v677
    %1759 = vmatpush1.msra.mxu0 %v676
    %1760 = vmatprep.subr.mxu0 %v683
    %1761 = vmatpush1.msra.mxu0 %v682
    %1762 = vmatprep.subr.mxu0 %v689
    %1763 = vmatpush1.msra.mxu0 %v688
    %1764 = vmatprep.subr.mxu0 %v695
    %1765 = vmatpush1.msra.mxu0 %v694
    %1766 = vmatprep.subr.mxu0 %v701
    %1767 = vmatpush1.msra.mxu0 %v700
    %1768 = vmatprep.subr.mxu0 %v707
    %1769 = vmatpush1.msra.mxu0 %v706
    %1770 = vmatprep.subr.mxu0 %v713
    %1771 = vmatpush1.msra.mxu0 %v712
    %1772 = vmatprep.subr.mxu0 %v719
    %1773 = vmatpush1.msra.mxu0 %v718
    %1774 = vmatprep.subr.mxu0 %v725
    %1775 = vmatpush1.msra.mxu0 %v724
    %1776 = vmatprep.subr.mxu0 %v731
    %1777 = vmatpush1.msra.mxu0 %v730
    %1778 = vmatprep.subr.mxu0 %v737
    %1779 = vmatpush1.msra.mxu0 %v736
    %1780 = vmatprep.subr.mxu0 %v743
    %1781 = vmatpush1.msra.mxu0 %v742
    %1782 = vmatprep.subr.mxu0 %v749
    %1783 = vmatpush1.msra.mxu0 %v748
    %1784 = vmatprep.subr.mxu0 %v755
    %1785 = vmatpush1.msra.mxu0 %v754
    %1786 = vmatprep.subr.mxu0 %v761
    %1787 = vmatpush1.msra.mxu0 %v760
    %1788 = vmatprep.subr.mxu0 %v767
    %1789 = vmatpush1.msra.mxu0 %v766
    %1790 = vmatprep.subr.mxu0 %v773
    %1791 = vmatpush1.msra.mxu0 %v772
    %1792 = vmatprep.mubr.f32.mxu0 %v1576
    %1793 = vmatmul.mubr.f32.gmra.mrb[0].mxu0 %v1575
    %v1794 = vpop.f32.mrb[0].mxu0
    %v1795 = vadd.f32 %v559, %v1794
    %v1796 = vpop.f32.mrb[0].mxu0
    %v1797 = vadd.f32 %v563, %v1796
    %1798 = vdwg.mxu0
    %v1799 = vadd.f32 %v1580, %v1653
    %v1800 = vadd.f32 %v1581, %v1655
    %v1801 = vxor.u32 %v1799, 2147483648
    %v1802 = vxor.u32 %v1800, 2147483648
    %v1803 = vmul.f32 %v1801, 1.442695
    %v1804 = vpow.pop %v1803
    %v1805 = vmul.f32 %v1802, 1.442695
    %v1806 = vpow.pop %v1805
    %v1807 = vadd.f32 %v1804, 1.0
    %v1808 = vadd.f32 %v1806, 1.0
    %v1809 = vrcp.pop %v1807
    %v1810 = vmul.f32 1.0, %v1809
    %v1811 = vrcp.pop %v1808
    %v1812 = vmul.f32 1.0, %v1811
    %v1813 = vadd.f32 %v1582, %v1724
    %v1814 = vadd.f32 %v1583, %v1726
    %v1815 = vxor.u32 %v1813, 2147483648
    %v1816 = vxor.u32 %v1814, 2147483648
    %v1817 = vmul.f32 %v1815, 1.442695
    %v1818 = vpow.pop %v1817
    %v1819 = vmul.f32 %v1816, 1.442695
    %v1820 = vpow.pop %v1819
    %v1821 = vadd.f32 %v1818, 1.0
    %v1822 = vadd.f32 %v1820, 1.0
    %v1823 = vrcp.pop %v1821
    %v1824 = vmul.f32 1.0, %v1823
    %v1825 = vrcp.pop %v1822
    %v1826 = vmul.f32 1.0, %v1825
    %v1827 = vmul.f32 %v1810, %v1795
    %v1828 = vmul.f32 %v1812, %v1797
    %v1829 = vadd.f32 %v1584, %v1827
    %v1830 = vadd.f32 %v1585, %v1828
    %v1831 = vtanh.pop %v1829
    %v1832 = vtanh.pop %v1830
    %v1833 = vsub.f32 1.0, %v1824
    %v1834 = vsub.f32 1.0, %v1826
    %v1835 = vmul.f32 %v1833, %v1831
    %v1836 = vmul.f32 %v1834, %v1832
    %v1837 = vmul.f32 %v1824, %v1575
    %v1838 = vmul.f32 %v1826, %v1576
    %v1839 = vadd.f32 %v1835, %v1837
    %v1840 = vadd.f32 %v1836, %v1838
    %s1841 = sadd.s32 %s570, 3
    %p1842 = scmp.lt.s32.totalorder %s1841, 8
    %s1843 = scalar_select %p1842, 1, 0
    %v1844 = vstv %s1843
    %vm1845 = vcmp.eq.s32.totalorder %v1844, 1
    %v1846 = vsel %vm1845, %v1839, %v1575
    %v1847 = vsel %vm1845, %v1840, %v1576
    %s1848 = smul.u32 4, 6
    %s1849 = smul.addr %s1848, 8
    %s1850 = scalar_lea.vmem [#allocation3], %s1849
    %v1851 = vld [vmem:[%s1850] sm:$0xff]
    %v1852 = vld [vmem:[%s1850 + $0x8] sm:$0xff]
    %v1853 = vld [vmem:[%s1850 + $0x10] sm:$0xff]
    %v1854 = vld [vmem:[%s1850 + $0x18] sm:$0xff]
    %v1855 = vld [vmem:[%s1850 + $0x20] sm:$0xff]
    %v1856 = vld [vmem:[%s1850 + $0x28] sm:$0xff]
    %1857 = vmatprep.subr.mxu0 %v583
    %1858 = vmatpush1.msra.mxu0 %v582
    %1859 = vmatprep.subr.mxu0 %v589
    %1860 = vmatpush1.msra.mxu0 %v588
    %1861 = vmatprep.subr.mxu0 %v595
    %1862 = vmatpush1.msra.mxu0 %v594
    %1863 = vmatprep.subr.mxu0 %v601
    %1864 = vmatpush1.msra.mxu0 %v600
    %1865 = vmatprep.subr.mxu0 %v607
    %1866 = vmatpush1.msra.mxu0 %v606
    %1867 = vmatprep.subr.mxu0 %v613
    %1868 = vmatpush1.msra.mxu0 %v612
    %1869 = vmatprep.subr.mxu0 %v619
    %1870 = vmatpush1.msra.mxu0 %v618
    %1871 = vmatprep.subr.mxu0 %v625
    %1872 = vmatpush1.msra.mxu0 %v624
    %1873 = vmatprep.subr.mxu0 %v631
    %1874 = vmatpush1.msra.mxu0 %v630
    %1875 = vmatprep.subr.mxu0 %v637
    %1876 = vmatpush1.msra.mxu0 %v636
    %1877 = vmatprep.subr.mxu0 %v643
    %1878 = vmatpush1.msra.mxu0 %v642
    %1879 = vmatprep.subr.mxu0 %v649
    %1880 = vmatpush1.msra.mxu0 %v648
    %1881 = vmatprep.subr.mxu0 %v655
    %1882 = vmatpush1.msra.mxu0 %v654
    %1883 = vmatprep.subr.mxu0 %v661
    %1884 = vmatpush1.msra.mxu0 %v660
    %1885 = vmatprep.subr.mxu0 %v667
    %1886 = vmatpush1.msra.mxu0 %v666
    %1887 = vmatprep.subr.mxu0 %v673
    %1888 = vmatpush1.msra.mxu0 %v672
    %1889 = vmatprep.subr.mxu0 %v679
    %1890 = vmatpush1.msra.mxu0 %v678
    %1891 = vmatprep.subr.mxu0 %v685
    %1892 = vmatpush1.msra.mxu0 %v684
    %1893 = vmatprep.subr.mxu0 %v691
    %1894 = vmatpush1.msra.mxu0 %v690
    %1895 = vmatprep.subr.mxu0 %v697
    %1896 = vmatpush1.msra.mxu0 %v696
    %1897 = vmatprep.subr.mxu0 %v703
    %1898 = vmatpush1.msra.mxu0 %v702
    %1899 = vmatprep.subr.mxu0 %v709
    %1900 = vmatpush1.msra.mxu0 %v708
    %1901 = vmatprep.subr.mxu0 %v715
    %1902 = vmatpush1.msra.mxu0 %v714
    %1903 = vmatprep.subr.mxu0 %v721
    %1904 = vmatpush1.msra.mxu0 %v720
    %1905 = vmatprep.subr.mxu0 %v727
    %1906 = vmatpush1.msra.mxu0 %v726
    %1907 = vmatprep.subr.mxu0 %v733
    %1908 = vmatpush1.msra.mxu0 %v732
    %1909 = vmatprep.subr.mxu0 %v739
    %1910 = vmatpush1.msra.mxu0 %v738
    %1911 = vmatprep.subr.mxu0 %v745
    %1912 = vmatpush1.msra.mxu0 %v744
    %1913 = vmatprep.subr.mxu0 %v751
    %1914 = vmatpush1.msra.mxu0 %v750
    %1915 = vmatprep.subr.mxu0 %v757
    %1916 = vmatpush1.msra.mxu0 %v756
    %1917 = vmatprep.subr.mxu0 %v763
    %1918 = vmatpush1.msra.mxu0 %v762
    %1919 = vmatprep.subr.mxu0 %v769
    %1920 = vmatpush1.msra.mxu0 %v768
    %1921 = vmatprep.mubr.f32.mxu0 %v1847
    %1922 = vmatmul.mubr.f32.gmra.mrb[0].mxu0 %v1846
    %v1923 = vpop.f32.mrb[0].mxu0
    %v1924 = vadd.f32 %v543, %v1923
    %v1925 = vpop.f32.mrb[0].mxu0
    %v1926 = vadd.f32 %v547, %v1925
    %1927 = vdwg.mxu0
    %1928 = vmatprep.subr.mxu0 %v585
    %1929 = vmatpush1.msra.mxu0 %v584
    %1930 = vmatprep.subr.mxu0 %v591
    %1931 = vmatpush1.msra.mxu0 %v590
    %1932 = vmatprep.subr.mxu0 %v597
    %1933 = vmatpush1.msra.mxu0 %v596
    %1934 = vmatprep.subr.mxu0 %v603
    %1935 = vmatpush1.msra.mxu0 %v602
    %1936 = vmatprep.subr.mxu0 %v609
    %1937 = vmatpush1.msra.mxu0 %v608
    %1938 = vmatprep.subr.mxu0 %v615
    %1939 = vmatpush1.msra.mxu0 %v614
    %1940 = vmatprep.subr.mxu0 %v621
    %1941 = vmatpush1.msra.mxu0 %v620
    %1942 = vmatprep.subr.mxu0 %v627
    %1943 = vmatpush1.msra.mxu0 %v626
    %1944 = vmatprep.subr.mxu0 %v633
    %1945 = vmatpush1.msra.mxu0 %v632
    %1946 = vmatprep.subr.mxu0 %v639
    %1947 = vmatpush1.msra.mxu0 %v638
    %1948 = vmatprep.subr.mxu0 %v645
    %1949 = vmatpush1.msra.mxu0 %v644
    %1950 = vmatprep.subr.mxu0 %v651
    %1951 = vmatpush1.msra.mxu0 %v650
    %1952 = vmatprep.subr.mxu0 %v657
    %1953 = vmatpush1.msra.mxu0 %v656
    %1954 = vmatprep.subr.mxu0 %v663
    %1955 = vmatpush1.msra.mxu0 %v662
    %1956 = vmatprep.subr.mxu0 %v669
    %1957 = vmatpush1.msra.mxu0 %v668
    %1958 = vmatprep.subr.mxu0 %v675
    %1959 = vmatpush1.msra.mxu0 %v674
    %1960 = vmatprep.subr.mxu0 %v681
    %1961 = vmatpush1.msra.mxu0 %v680
    %1962 = vmatprep.subr.mxu0 %v687
    %1963 = vmatpush1.msra.mxu0 %v686
    %1964 = vmatprep.subr.mxu0 %v693
    %1965 = vmatpush1.msra.mxu0 %v692
    %1966 = vmatprep.subr.mxu0 %v699
    %1967 = vmatpush1.msra.mxu0 %v698
    %1968 = vmatprep.subr.mxu0 %v705
    %1969 = vmatpush1.msra.mxu0 %v704
    %1970 = vmatprep.subr.mxu0 %v711
    %1971 = vmatpush1.msra.mxu0 %v710
    %1972 = vmatprep.subr.mxu0 %v717
    %1973 = vmatpush1.msra.mxu0 %v716
    %1974 = vmatprep.subr.mxu0 %v723
    %1975 = vmatpush1.msra.mxu0 %v722
    %1976 = vmatprep.subr.mxu0 %v729
    %1977 = vmatpush1.msra.mxu0 %v728
    %1978 = vmatprep.subr.mxu0 %v735
    %1979 = vmatpush1.msra.mxu0 %v734
    %1980 = vmatprep.subr.mxu0 %v741
    %1981 = vmatpush1.msra.mxu0 %v740
    %1982 = vmatprep.subr.mxu0 %v747
    %1983 = vmatpush1.msra.mxu0 %v746
    %1984 = vmatprep.subr.mxu0 %v753
    %1985 = vmatpush1.msra.mxu0 %v752
    %1986 = vmatprep.subr.mxu0 %v759
    %1987 = vmatpush1.msra.mxu0 %v758
    %1988 = vmatprep.subr.mxu0 %v765
    %1989 = vmatpush1.msra.mxu0 %v764
    %1990 = vmatprep.subr.mxu0 %v771
    %1991 = vmatpush1.msra.mxu0 %v770
    %1992 = vmatprep.mubr.f32.mxu0 %v1847
    %1993 = vmatmul.mubr.f32.gmra.mrb[0].mxu0 %v1846
    %v1994 = vpop.f32.mrb[0].mxu0
    %v1995 = vadd.f32 %v551, %v1994
    %v1996 = vpop.f32.mrb[0].mxu0
    %v1997 = vadd.f32 %v555, %v1996
    %1998 = vdwg.mxu0
    %1999 = vmatprep.subr.mxu0 %v587
    %2000 = vmatpush1.msra.mxu0 %v586
    %2001 = vmatprep.subr.mxu0 %v593
    %2002 = vmatpush1.msra.mxu0 %v592
    %2003 = vmatprep.subr.mxu0 %v599
    %2004 = vmatpush1.msra.mxu0 %v598
    %2005 = vmatprep.subr.mxu0 %v605
    %2006 = vmatpush1.msra.mxu0 %v604
    %2007 = vmatprep.subr.mxu0 %v611
    %2008 = vmatpush1.msra.mxu0 %v610
    %2009 = vmatprep.subr.mxu0 %v617
    %2010 = vmatpush1.msra.mxu0 %v616
    %2011 = vmatprep.subr.mxu0 %v623
    %2012 = vmatpush1.msra.mxu0 %v622
    %2013 = vmatprep.subr.mxu0 %v629
    %2014 = vmatpush1.msra.mxu0 %v628
    %2015 = vmatprep.subr.mxu0 %v635
    %2016 = vmatpush1.msra.mxu0 %v634
    %2017 = vmatprep.subr.mxu0 %v641
    %2018 = vmatpush1.msra.mxu0 %v640
    %2019 = vmatprep.subr.mxu0 %v647
    %2020 = vmatpush1.msra.mxu0 %v646
    %2021 = vmatprep.subr.mxu0 %v653
    %2022 = vmatpush1.msra.mxu0 %v652
    %2023 = vmatprep.subr.mxu0 %v659
    %2024 = vmatpush1.msra.mxu0 %v658
    %2025 = vmatprep.subr.mxu0 %v665
    %2026 = vmatpush1.msra.mxu0 %v664
    %2027 = vmatprep.subr.mxu0 %v671
    %2028 = vmatpush1.msra.mxu0 %v670
    %2029 = vmatprep.subr.mxu0 %v677
    %2030 = vmatpush1.msra.mxu0 %v676
    %2031 = vmatprep.subr.mxu0 %v683
    %2032 = vmatpush1.msra.mxu0 %v682
    %2033 = vmatprep.subr.mxu0 %v689
    %2034 = vmatpush1.msra.mxu0 %v688
    %2035 = vmatprep.subr.mxu0 %v695
    %2036 = vmatpush1.msra.mxu0 %v694
    %2037 = vmatprep.subr.mxu0 %v701
    %2038 = vmatpush1.msra.mxu0 %v700
    %2039 = vmatprep.subr.mxu0 %v707
    %2040 = vmatpush1.msra.mxu0 %v706
    %2041 = vmatprep.subr.mxu0 %v713
    %2042 = vmatpush1.msra.mxu0 %v712
    %2043 = vmatprep.subr.mxu0 %v719
    %2044 = vmatpush1.msra.mxu0 %v718
    %2045 = vmatprep.subr.mxu0 %v725
    %2046 = vmatpush1.msra.mxu0 %v724
    %2047 = vmatprep.subr.mxu0 %v731
    %2048 = vmatpush1.msra.mxu0 %v730
    %2049 = vmatprep.subr.mxu0 %v737
    %2050 = vmatpush1.msra.mxu0 %v736
    %2051 = vmatprep.subr.mxu0 %v743
    %2052 = vmatpush1.msra.mxu0 %v742
    %2053 = vmatprep.subr.mxu0 %v749
    %2054 = vmatpush1.msra.mxu0 %v748
    %2055 = vmatprep.subr.mxu0 %v755
    %2056 = vmatpush1.msra.mxu0 %v754
    %2057 = vmatprep.subr.mxu0 %v761
    %2058 = vmatpush1.msra.mxu0 %v760
    %2059 = vmatprep.subr.mxu0 %v767
    %2060 = vmatpush1.msra.mxu0 %v766
    %2061 = vmatprep.subr.mxu0 %v773
    %2062 = vmatpush1.msra.mxu0 %v772
    %2063 = vmatprep.mubr.f32.mxu0 %v1847
    %2064 = vmatmul.mubr.f32.gmra.mrb[0].mxu0 %v1846
    %v2065 = vpop.f32.mrb[0].mxu0
    %v2066 = vadd.f32 %v559, %v2065
    %v2067 = vpop.f32.mrb[0].mxu0
    %v2068 = vadd.f32 %v563, %v2067
    %2069 = vdwg.mxu0
    %v2070 = vadd.f32 %v1851, %v1924
    %v2071 = vadd.f32 %v1852, %v1926
    %v2072 = vxor.u32 %v2070, 2147483648
    %v2073 = vxor.u32 %v2071, 2147483648
    %v2074 = vmul.f32 %v2072, 1.442695
    %v2075 = vpow.pop %v2074
    %v2076 = vmul.f32 %v2073, 1.442695
    %v2077 = vpow.pop %v2076
    %v2078 = vadd.f32 %v2075, 1.0
    %v2079 = vadd.f32 %v2077, 1.0
    %v2080 = vrcp.pop %v2078
    %v2081 = vmul.f32 1.0, %v2080
    %v2082 = vrcp.pop %v2079
    %v2083 = vmul.f32 1.0, %v2082
    %v2084 = vadd.f32 %v1853, %v1995
    %v2085 = vadd.f32 %v1854, %v1997
    %v2086 = vxor.u32 %v2084, 2147483648
    %v2087 = vxor.u32 %v2085, 2147483648
    %v2088 = vmul.f32 %v2086, 1.442695
    %v2089 = vpow.pop %v2088
    %v2090 = vmul.f32 %v2087, 1.442695
    %v2091 = vpow.pop %v2090
    %v2092 = vadd.f32 %v2089, 1.0
    %v2093 = vadd.f32 %v2091, 1.0
    %v2094 = vrcp.pop %v2092
    %v2095 = vmul.f32 1.0, %v2094
    %v2096 = vrcp.pop %v2093
    %v2097 = vmul.f32 1.0, %v2096
    %v2098 = vmul.f32 %v2081, %v2066
    %v2099 = vmul.f32 %v2083, %v2068
    %v2100 = vadd.f32 %v1855, %v2098
    %v2101 = vadd.f32 %v1856, %v2099
    %v2102 = vtanh.pop %v2100
    %v2103 = vtanh.pop %v2101
    %v2104 = vsub.f32 1.0, %v2095
    %v2105 = vsub.f32 1.0, %v2097
    %v2106 = vmul.f32 %v2104, %v2102
    %v2107 = vmul.f32 %v2105, %v2103
    %v2108 = vmul.f32 %v2095, %v1846
    %v2109 = vmul.f32 %v2097, %v1847
    %v2110 = vadd.f32 %v2106, %v2108
    %v2111 = vadd.f32 %v2107, %v2109
    %s2112 = sadd.s32 %s570, 4
    %p2113 = scmp.lt.s32.totalorder %s2112, 8
    %s2114 = scalar_select %p2113, 1, 0
    %v2115 = vstv %s2114
    %vm2116 = vcmp.eq.s32.totalorder %v2115, 1
    %v2117 = vsel %vm2116, %v2110, %v1846
    %v2118 = vsel %vm2116, %v2111, %v1847
    %s2119 = smul.u32 5, 6
    %s2120 = smul.addr %s2119, 8
    %s2121 = scalar_lea.vmem [#allocation3], %s2120
    %v2122 = vld [vmem:[%s2121] sm:$0xff]
    %v2123 = vld [vmem:[%s2121 + $0x8] sm:$0xff]
    %v2124 = vld [vmem:[%s2121 + $0x10] sm:$0xff]
    %v2125 = vld [vmem:[%s2121 + $0x18] sm:$0xff]
    %v2126 = vld [vmem:[%s2121 + $0x20] sm:$0xff]
    %v2127 = vld [vmem:[%s2121 + $0x28] sm:$0xff]
    %2128 = vmatprep.subr.mxu0 %v583
    %2129 = vmatpush1.msra.mxu0 %v582
    %2130 = vmatprep.subr.mxu0 %v589
    %2131 = vmatpush1.msra.mxu0 %v588
    %2132 = vmatprep.subr.mxu0 %v595
    %2133 = vmatpush1.msra.mxu0 %v594
    %2134 = vmatprep.subr.mxu0 %v601
    %2135 = vmatpush1.msra.mxu0 %v600
    %2136 = vmatprep.subr.mxu0 %v607
    %2137 = vmatpush1.msra.mxu0 %v606
    %2138 = vmatprep.subr.mxu0 %v613
    %2139 = vmatpush1.msra.mxu0 %v612
    %2140 = vmatprep.subr.mxu0 %v619
    %2141 = vmatpush1.msra.mxu0 %v618
    %2142 = vmatprep.subr.mxu0 %v625
    %2143 = vmatpush1.msra.mxu0 %v624
    %2144 = vmatprep.subr.mxu0 %v631
    %2145 = vmatpush1.msra.mxu0 %v630
    %2146 = vmatprep.subr.mxu0 %v637
    %2147 = vmatpush1.msra.mxu0 %v636
    %2148 = vmatprep.subr.mxu0 %v643
    %2149 = vmatpush1.msra.mxu0 %v642
    %2150 = vmatprep.subr.mxu0 %v649
    %2151 = vmatpush1.msra.mxu0 %v648
    %2152 = vmatprep.subr.mxu0 %v655
    %2153 = vmatpush1.msra.mxu0 %v654
    %2154 = vmatprep.subr.mxu0 %v661
    %2155 = vmatpush1.msra.mxu0 %v660
    %2156 = vmatprep.subr.mxu0 %v667
    %2157 = vmatpush1.msra.mxu0 %v666
    %2158 = vmatprep.subr.mxu0 %v673
    %2159 = vmatpush1.msra.mxu0 %v672
    %2160 = vmatprep.subr.mxu0 %v679
    %2161 = vmatpush1.msra.mxu0 %v678
    %2162 = vmatprep.subr.mxu0 %v685
    %2163 = vmatpush1.msra.mxu0 %v684
    %2164 = vmatprep.subr.mxu0 %v691
    %2165 = vmatpush1.msra.mxu0 %v690
    %2166 = vmatprep.subr.mxu0 %v697
    %2167 = vmatpush1.msra.mxu0 %v696
    %2168 = vmatprep.subr.mxu0 %v703
    %2169 = vmatpush1.msra.mxu0 %v702
    %2170 = vmatprep.subr.mxu0 %v709
    %2171 = vmatpush1.msra.mxu0 %v708
    %2172 = vmatprep.subr.mxu0 %v715
    %2173 = vmatpush1.msra.mxu0 %v714
    %2174 = vmatprep.subr.mxu0 %v721
    %2175 = vmatpush1.msra.mxu0 %v720
    %2176 = vmatprep.subr.mxu0 %v727
    %2177 = vmatpush1.msra.mxu0 %v726
    %2178 = vmatprep.subr.mxu0 %v733
    %2179 = vmatpush1.msra.mxu0 %v732
    %2180 = vmatprep.subr.mxu0 %v739
    %2181 = vmatpush1.msra.mxu0 %v738
    %2182 = vmatprep.subr.mxu0 %v745
    %2183 = vmatpush1.msra.mxu0 %v744
    %2184 = vmatprep.subr.mxu0 %v751
    %2185 = vmatpush1.msra.mxu0 %v750
    %2186 = vmatprep.subr.mxu0 %v757
    %2187 = vmatpush1.msra.mxu0 %v756
    %2188 = vmatprep.subr.mxu0 %v763
    %2189 = vmatpush1.msra.mxu0 %v762
    %2190 = vmatprep.subr.mxu0 %v769
    %2191 = vmatpush1.msra.mxu0 %v768
    %2192 = vmatprep.mubr.f32.mxu0 %v2118
    %2193 = vmatmul.mubr.f32.gmra.mrb[0].mxu0 %v2117
    %v2194 = vpop.f32.mrb[0].mxu0
    %v2195 = vadd.f32 %v543, %v2194
    %v2196 = vpop.f32.mrb[0].mxu0
    %v2197 = vadd.f32 %v547, %v2196
    %2198 = vdwg.mxu0
    %2199 = vmatprep.subr.mxu0 %v585
    %2200 = vmatpush1.msra.mxu0 %v584
    %2201 = vmatprep.subr.mxu0 %v591
    %2202 = vmatpush1.msra.mxu0 %v590
    %2203 = vmatprep.subr.mxu0 %v597
    %2204 = vmatpush1.msra.mxu0 %v596
    %2205 = vmatprep.subr.mxu0 %v603
    %2206 = vmatpush1.msra.mxu0 %v602
    %2207 = vmatprep.subr.mxu0 %v609
    %2208 = vmatpush1.msra.mxu0 %v608
    %2209 = vmatprep.subr.mxu0 %v615
    %2210 = vmatpush1.msra.mxu0 %v614
    %2211 = vmatprep.subr.mxu0 %v621
    %2212 = vmatpush1.msra.mxu0 %v620
    %2213 = vmatprep.subr.mxu0 %v627
    %2214 = vmatpush1.msra.mxu0 %v626
    %2215 = vmatprep.subr.mxu0 %v633
    %2216 = vmatpush1.msra.mxu0 %v632
    %2217 = vmatprep.subr.mxu0 %v639
    %2218 = vmatpush1.msra.mxu0 %v638
    %2219 = vmatprep.subr.mxu0 %v645
    %2220 = vmatpush1.msra.mxu0 %v644
    %2221 = vmatprep.subr.mxu0 %v651
    %2222 = vmatpush1.msra.mxu0 %v650
    %2223 = vmatprep.subr.mxu0 %v657
    %2224 = vmatpush1.msra.mxu0 %v656
    %2225 = vmatprep.subr.mxu0 %v663
    %2226 = vmatpush1.msra.mxu0 %v662
    %2227 = vmatprep.subr.mxu0 %v669
    %2228 = vmatpush1.msra.mxu0 %v668
    %2229 = vmatprep.subr.mxu0 %v675
    %2230 = vmatpush1.msra.mxu0 %v674
    %2231 = vmatprep.subr.mxu0 %v681
    %2232 = vmatpush1.msra.mxu0 %v680
    %2233 = vmatprep.subr.mxu0 %v687
    %2234 = vmatpush1.msra.mxu0 %v686
    %2235 = vmatprep.subr.mxu0 %v693
    %2236 = vmatpush1.msra.mxu0 %v692
    %2237 = vmatprep.subr.mxu0 %v699
    %2238 = vmatpush1.msra.mxu0 %v698
    %2239 = vmatprep.subr.mxu0 %v705
    %2240 = vmatpush1.msra.mxu0 %v704
    %2241 = vmatprep.subr.mxu0 %v711
    %2242 = vmatpush1.msra.mxu0 %v710
    %2243 = vmatprep.subr.mxu0 %v717
    %2244 = vmatpush1.msra.mxu0 %v716
    %2245 = vmatprep.subr.mxu0 %v723
    %2246 = vmatpush1.msra.mxu0 %v722
    %2247 = vmatprep.subr.mxu0 %v729
    %2248 = vmatpush1.msra.mxu0 %v728
    %2249 = vmatprep.subr.mxu0 %v735
    %2250 = vmatpush1.msra.mxu0 %v734
    %2251 = vmatprep.subr.mxu0 %v741
    %2252 = vmatpush1.msra.mxu0 %v740
    %2253 = vmatprep.subr.mxu0 %v747
    %2254 = vmatpush1.msra.mxu0 %v746
    %2255 = vmatprep.subr.mxu0 %v753
    %2256 = vmatpush1.msra.mxu0 %v752
    %2257 = vmatprep.subr.mxu0 %v759
    %2258 = vmatpush1.msra.mxu0 %v758
    %2259 = vmatprep.subr.mxu0 %v765
    %2260 = vmatpush1.msra.mxu0 %v764
    %2261 = vmatprep.subr.mxu0 %v771
    %2262 = vmatpush1.msra.mxu0 %v770
    %2263 = vmatprep.mubr.f32.mxu0 %v2118
    %2264 = vmatmul.mubr.f32.gmra.mrb[0].mxu0 %v2117
    %v2265 = vpop.f32.mrb[0].mxu0
    %v2266 = vadd.f32 %v551, %v2265
    %v2267 = vpop.f32.mrb[0].mxu0
    %v2268 = vadd.f32 %v555, %v2267
    %2269 = vdwg.mxu0
    %2270 = vmatprep.subr.mxu0 %v587
    %2271 = vmatpush1.msra.mxu0 %v586
    %2272 = vmatprep.subr.mxu0 %v593
    %2273 = vmatpush1.msra.mxu0 %v592
    %2274 = vmatprep.subr.mxu0 %v599
    %2275 = vmatpush1.msra.mxu0 %v598
    %2276 = vmatprep.subr.mxu0 %v605
    %2277 = vmatpush1.msra.mxu0 %v604
    %2278 = vmatprep.subr.mxu0 %v611
    %2279 = vmatpush1.msra.mxu0 %v610
    %2280 = vmatprep.subr.mxu0 %v617
    %2281 = vmatpush1.msra.mxu0 %v616
    %2282 = vmatprep.subr.mxu0 %v623
    %2283 = vmatpush1.msra.mxu0 %v622
    %2284 = vmatprep.subr.mxu0 %v629
    %2285 = vmatpush1.msra.mxu0 %v628
    %2286 = vmatprep.subr.mxu0 %v635
    %2287 = vmatpush1.msra.mxu0 %v634
    %2288 = vmatprep.subr.mxu0 %v641
    %2289 = vmatpush1.msra.mxu0 %v640
    %2290 = vmatprep.subr.mxu0 %v647
    %2291 = vmatpush1.msra.mxu0 %v646
    %2292 = vmatprep.subr.mxu0 %v653
    %2293 = vmatpush1.msra.mxu0 %v652
    %2294 = vmatprep.subr.mxu0 %v659
    %2295 = vmatpush1.msra.mxu0 %v658
    %2296 = vmatprep.subr.mxu0 %v665
    %2297 = vmatpush1.msra.mxu0 %v664
    %2298 = vmatprep.subr.mxu0 %v671
    %2299 = vmatpush1.msra.mxu0 %v670
    %2300 = vmatprep.subr.mxu0 %v677
    %2301 = vmatpush1.msra.mxu0 %v676
    %2302 = vmatprep.subr.mxu0 %v683
    %2303 = vmatpush1.msra.mxu0 %v682
    %2304 = vmatprep.subr.mxu0 %v689
    %2305 = vmatpush1.msra.mxu0 %v688
    %2306 = vmatprep.subr.mxu0 %v695
    %2307 = vmatpush1.msra.mxu0 %v694
    %2308 = vmatprep.subr.mxu0 %v701
    %2309 = vmatpush1.msra.mxu0 %v700
    %2310 = vmatprep.subr.mxu0 %v707
    %2311 = vmatpush1.msra.mxu0 %v706
    %2312 = vmatprep.subr.mxu0 %v713
    %2313 = vmatpush1.msra.mxu0 %v712
    %2314 = vmatprep.subr.mxu0 %v719
    %2315 = vmatpush1.msra.mxu0 %v718
    %2316 = vmatprep.subr.mxu0 %v725
    %2317 = vmatpush1.msra.mxu0 %v724
    %2318 = vmatprep.subr.mxu0 %v731
    %2319 = vmatpush1.msra.mxu0 %v730
    %2320 = vmatprep.subr.mxu0 %v737
    %2321 = vmatpush1.msra.mxu0 %v736
    %2322 = vmatprep.subr.mxu0 %v743
    %2323 = vmatpush1.msra.mxu0 %v742
    %2324 = vmatprep.subr.mxu0 %v749
    %2325 = vmatpush1.msra.mxu0 %v748
    %2326 = vmatprep.subr.mxu0 %v755
    %2327 = vmatpush1.msra.mxu0 %v754
    %2328 = vmatprep.subr.mxu0 %v761
    %2329 = vmatpush1.msra.mxu0 %v760
    %2330 = vmatprep.subr.mxu0 %v767
    %2331 = vmatpush1.msra.mxu0 %v766
    %2332 = vmatprep.subr.mxu0 %v773
    %2333 = vmatpush1.msra.mxu0 %v772
    %2334 = vmatprep.mubr.f32.mxu0 %v2118
    %2335 = vmatmul.mubr.f32.gmra.mrb[0].mxu0 %v2117
    %v2336 = vpop.f32.mrb[0].mxu0
    %v2337 = vadd.f32 %v559, %v2336
    %v2338 = vpop.f32.mrb[0].mxu0
    %v2339 = vadd.f32 %v563, %v2338
    %2340 = vdwg.mxu0
    %v2341 = vadd.f32 %v2122, %v2195
    %v2342 = vadd.f32 %v2123, %v2197
    %v2343 = vxor.u32 %v2341, 2147483648
    %v2344 = vxor.u32 %v2342, 2147483648
    %v2345 = vmul.f32 %v2343, 1.442695
    %v2346 = vpow.pop %v2345
    %v2347 = vmul.f32 %v2344, 1.442695
    %v2348 = vpow.pop %v2347
    %v2349 = vadd.f32 %v2346, 1.0
    %v2350 = vadd.f32 %v2348, 1.0
    %v2351 = vrcp.pop %v2349
    %v2352 = vmul.f32 1.0, %v2351
    %v2353 = vrcp.pop %v2350
    %v2354 = vmul.f32 1.0, %v2353
    %v2355 = vadd.f32 %v2124, %v2266
    %v2356 = vadd.f32 %v2125, %v2268
    %v2357 = vxor.u32 %v2355, 2147483648
    %v2358 = vxor.u32 %v2356, 2147483648
    %v2359 = vmul.f32 %v2357, 1.442695
    %v2360 = vpow.pop %v2359
    %v2361 = vmul.f32 %v2358, 1.442695
    %v2362 = vpow.pop %v2361
    %v2363 = vadd.f32 %v2360, 1.0
    %v2364 = vadd.f32 %v2362, 1.0
    %v2365 = vrcp.pop %v2363
    %v2366 = vmul.f32 1.0, %v2365
    %v2367 = vrcp.pop %v2364
    %v2368 = vmul.f32 1.0, %v2367
    %v2369 = vmul.f32 %v2352, %v2337
    %v2370 = vmul.f32 %v2354, %v2339
    %v2371 = vadd.f32 %v2126, %v2369
    %v2372 = vadd.f32 %v2127, %v2370
    %v2373 = vtanh.pop %v2371
    %v2374 = vtanh.pop %v2372
    %v2375 = vsub.f32 1.0, %v2366
    %v2376 = vsub.f32 1.0, %v2368
    %v2377 = vmul.f32 %v2375, %v2373
    %v2378 = vmul.f32 %v2376, %v2374
    %v2379 = vmul.f32 %v2366, %v2117
    %v2380 = vmul.f32 %v2368, %v2118
    %v2381 = vadd.f32 %v2377, %v2379
    %v2382 = vadd.f32 %v2378, %v2380
    %s2383 = sadd.s32 %s570, 5
    %p2384 = scmp.lt.s32.totalorder %s2383, 8
    %s2385 = scalar_select %p2384, 1, 0
    %v2386 = vstv %s2385
    %vm2387 = vcmp.eq.s32.totalorder %v2386, 1
    %v2388 = vsel %vm2387, %v2381, %v2117
    %v2389 = vsel %vm2387, %v2382, %v2118
    %s2390 = smul.u32 6, 6
    %s2391 = smul.addr %s2390, 8
    %s2392 = scalar_lea.vmem [#allocation3], %s2391
    %v2393 = vld [vmem:[%s2392] sm:$0xff]
    %v2394 = vld [vmem:[%s2392 + $0x8] sm:$0xff]
    %v2395 = vld [vmem:[%s2392 + $0x10] sm:$0xff]
    %v2396 = vld [vmem:[%s2392 + $0x18] sm:$0xff]
    %v2397 = vld [vmem:[%s2392 + $0x20] sm:$0xff]
    %v2398 = vld [vmem:[%s2392 + $0x28] sm:$0xff]
    %2399 = vmatprep.subr.mxu0 %v583
    %2400 = vmatpush1.msra.mxu0 %v582
    %2401 = vmatprep.subr.mxu0 %v589
    %2402 = vmatpush1.msra.mxu0 %v588
    %2403 = vmatprep.subr.mxu0 %v595
    %2404 = vmatpush1.msra.mxu0 %v594
    %2405 = vmatprep.subr.mxu0 %v601
    %2406 = vmatpush1.msra.mxu0 %v600
    %2407 = vmatprep.subr.mxu0 %v607
    %2408 = vmatpush1.msra.mxu0 %v606
    %2409 = vmatprep.subr.mxu0 %v613
    %2410 = vmatpush1.msra.mxu0 %v612
    %2411 = vmatprep.subr.mxu0 %v619
    %2412 = vmatpush1.msra.mxu0 %v618
    %2413 = vmatprep.subr.mxu0 %v625
    %2414 = vmatpush1.msra.mxu0 %v624
    %2415 = vmatprep.subr.mxu0 %v631
    %2416 = vmatpush1.msra.mxu0 %v630
    %2417 = vmatprep.subr.mxu0 %v637
    %2418 = vmatpush1.msra.mxu0 %v636
    %2419 = vmatprep.subr.mxu0 %v643
    %2420 = vmatpush1.msra.mxu0 %v642
    %2421 = vmatprep.subr.mxu0 %v649
    %2422 = vmatpush1.msra.mxu0 %v648
    %2423 = vmatprep.subr.mxu0 %v655
    %2424 = vmatpush1.msra.mxu0 %v654
    %2425 = vmatprep.subr.mxu0 %v661
    %2426 = vmatpush1.msra.mxu0 %v660
    %2427 = vmatprep.subr.mxu0 %v667
    %2428 = vmatpush1.msra.mxu0 %v666
    %2429 = vmatprep.subr.mxu0 %v673
    %2430 = vmatpush1.msra.mxu0 %v672
    %2431 = vmatprep.subr.mxu0 %v679
    %2432 = vmatpush1.msra.mxu0 %v678
    %2433 = vmatprep.subr.mxu0 %v685
    %2434 = vmatpush1.msra.mxu0 %v684
    %2435 = vmatprep.subr.mxu0 %v691
    %2436 = vmatpush1.msra.mxu0 %v690
    %2437 = vmatprep.subr.mxu0 %v697
    %2438 = vmatpush1.msra.mxu0 %v696
    %2439 = vmatprep.subr.mxu0 %v703
    %2440 = vmatpush1.msra.mxu0 %v702
    %2441 = vmatprep.subr.mxu0 %v709
    %2442 = vmatpush1.msra.mxu0 %v708
    %2443 = vmatprep.subr.mxu0 %v715
    %2444 = vmatpush1.msra.mxu0 %v714
    %2445 = vmatprep.subr.mxu0 %v721
    %2446 = vmatpush1.msra.mxu0 %v720
    %2447 = vmatprep.subr.mxu0 %v727
    %2448 = vmatpush1.msra.mxu0 %v726
    %2449 = vmatprep.subr.mxu0 %v733
    %2450 = vmatpush1.msra.mxu0 %v732
    %2451 = vmatprep.subr.mxu0 %v739
    %2452 = vmatpush1.msra.mxu0 %v738
    %2453 = vmatprep.subr.mxu0 %v745
    %2454 = vmatpush1.msra.mxu0 %v744
    %2455 = vmatprep.subr.mxu0 %v751
    %2456 = vmatpush1.msra.mxu0 %v750
    %2457 = vmatprep.subr.mxu0 %v757
    %2458 = vmatpush1.msra.mxu0 %v756
    %2459 = vmatprep.subr.mxu0 %v763
    %2460 = vmatpush1.msra.mxu0 %v762
    %2461 = vmatprep.subr.mxu0 %v769
    %2462 = vmatpush1.msra.mxu0 %v768
    %2463 = vmatprep.mubr.f32.mxu0 %v2389
    %2464 = vmatmul.mubr.f32.gmra.mrb[0].mxu0 %v2388
    %v2465 = vpop.f32.mrb[0].mxu0
    %v2466 = vadd.f32 %v543, %v2465
    %v2467 = vpop.f32.mrb[0].mxu0
    %v2468 = vadd.f32 %v547, %v2467
    %2469 = vdwg.mxu0
    %2470 = vmatprep.subr.mxu0 %v585
    %2471 = vmatpush1.msra.mxu0 %v584
    %2472 = vmatprep.subr.mxu0 %v591
    %2473 = vmatpush1.msra.mxu0 %v590
    %2474 = vmatprep.subr.mxu0 %v597
    %2475 = vmatpush1.msra.mxu0 %v596
    %2476 = vmatprep.subr.mxu0 %v603
    %2477 = vmatpush1.msra.mxu0 %v602
    %2478 = vmatprep.subr.mxu0 %v609
    %2479 = vmatpush1.msra.mxu0 %v608
    %2480 = vmatprep.subr.mxu0 %v615
    %2481 = vmatpush1.msra.mxu0 %v614
    %2482 = vmatprep.subr.mxu0 %v621
    %2483 = vmatpush1.msra.mxu0 %v620
    %2484 = vmatprep.subr.mxu0 %v627
    %2485 = vmatpush1.msra.mxu0 %v626
    %2486 = vmatprep.subr.mxu0 %v633
    %2487 = vmatpush1.msra.mxu0 %v632
    %2488 = vmatprep.subr.mxu0 %v639
    %2489 = vmatpush1.msra.mxu0 %v638
    %2490 = vmatprep.subr.mxu0 %v645
    %2491 = vmatpush1.msra.mxu0 %v644
    %2492 = vmatprep.subr.mxu0 %v651
    %2493 = vmatpush1.msra.mxu0 %v650
    %2494 = vmatprep.subr.mxu0 %v657
    %2495 = vmatpush1.msra.mxu0 %v656
    %2496 = vmatprep.subr.mxu0 %v663
    %2497 = vmatpush1.msra.mxu0 %v662
    %2498 = vmatprep.subr.mxu0 %v669
    %2499 = vmatpush1.msra.mxu0 %v668
    %2500 = vmatprep.subr.mxu0 %v675
    %2501 = vmatpush1.msra.mxu0 %v674
    %2502 = vmatprep.subr.mxu0 %v681
    %2503 = vmatpush1.msra.mxu0 %v680
    %2504 = vmatprep.subr.mxu0 %v687
    %2505 = vmatpush1.msra.mxu0 %v686
    %2506 = vmatprep.subr.mxu0 %v693
    %2507 = vmatpush1.msra.mxu0 %v692
    %2508 = vmatprep.subr.mxu0 %v699
    %2509 = vmatpush1.msra.mxu0 %v698
    %2510 = vmatprep.subr.mxu0 %v705
    %2511 = vmatpush1.msra.mxu0 %v704
    %2512 = vmatprep.subr.mxu0 %v711
    %2513 = vmatpush1.msra.mxu0 %v710
    %2514 = vmatprep.subr.mxu0 %v717
    %2515 = vmatpush1.msra.mxu0 %v716
    %2516 = vmatprep.subr.mxu0 %v723
    %2517 = vmatpush1.msra.mxu0 %v722
    %2518 = vmatprep.subr.mxu0 %v729
    %2519 = vmatpush1.msra.mxu0 %v728
    %2520 = vmatprep.subr.mxu0 %v735
    %2521 = vmatpush1.msra.mxu0 %v734
    %2522 = vmatprep.subr.mxu0 %v741
    %2523 = vmatpush1.msra.mxu0 %v740
    %2524 = vmatprep.subr.mxu0 %v747
    %2525 = vmatpush1.msra.mxu0 %v746
    %2526 = vmatprep.subr.mxu0 %v753
    %2527 = vmatpush1.msra.mxu0 %v752
    %2528 = vmatprep.subr.mxu0 %v759
    %2529 = vmatpush1.msra.mxu0 %v758
    %2530 = vmatprep.subr.mxu0 %v765
    %2531 = vmatpush1.msra.mxu0 %v764
    %2532 = vmatprep.subr.mxu0 %v771
    %2533 = vmatpush1.msra.mxu0 %v770
    %2534 = vmatprep.mubr.f32.mxu0 %v2389
    %2535 = vmatmul.mubr.f32.gmra.mrb[0].mxu0 %v2388
    %v2536 = vpop.f32.mrb[0].mxu0
    %v2537 = vadd.f32 %v551, %v2536
    %v2538 = vpop.f32.mrb[0].mxu0
    %v2539 = vadd.f32 %v555, %v2538
    %2540 = vdwg.mxu0
    %2541 = vmatprep.subr.mxu0 %v587
    %2542 = vmatpush1.msra.mxu0 %v586
    %2543 = vmatprep.subr.mxu0 %v593
    %2544 = vmatpush1.msra.mxu0 %v592
    %2545 = vmatprep.subr.mxu0 %v599
    %2546 = vmatpush1.msra.mxu0 %v598
    %2547 = vmatprep.subr.mxu0 %v605
    %2548 = vmatpush1.msra.mxu0 %v604
    %2549 = vmatprep.subr.mxu0 %v611
    %2550 = vmatpush1.msra.mxu0 %v610
    %2551 = vmatprep.subr.mxu0 %v617
    %2552 = vmatpush1.msra.mxu0 %v616
    %2553 = vmatprep.subr.mxu0 %v623
    %2554 = vmatpush1.msra.mxu0 %v622
    %2555 = vmatprep.subr.mxu0 %v629
    %2556 = vmatpush1.msra.mxu0 %v628
    %2557 = vmatprep.subr.mxu0 %v635
    %2558 = vmatpush1.msra.mxu0 %v634
    %2559 = vmatprep.subr.mxu0 %v641
    %2560 = vmatpush1.msra.mxu0 %v640
    %2561 = vmatprep.subr.mxu0 %v647
    %2562 = vmatpush1.msra.mxu0 %v646
    %2563 = vmatprep.subr.mxu0 %v653
    %2564 = vmatpush1.msra.mxu0 %v652
    %2565 = vmatprep.subr.mxu0 %v659
    %2566 = vmatpush1.msra.mxu0 %v658
    %2567 = vmatprep.subr.mxu0 %v665
    %2568 = vmatpush1.msra.mxu0 %v664
    %2569 = vmatprep.subr.mxu0 %v671
    %2570 = vmatpush1.msra.mxu0 %v670
    %2571 = vmatprep.subr.mxu0 %v677
    %2572 = vmatpush1.msra.mxu0 %v676
    %2573 = vmatprep.subr.mxu0 %v683
    %2574 = vmatpush1.msra.mxu0 %v682
    %2575 = vmatprep.subr.mxu0 %v689
    %2576 = vmatpush1.msra.mxu0 %v688
    %2577 = vmatprep.subr.mxu0 %v695
    %2578 = vmatpush1.msra.mxu0 %v694
    %2579 = vmatprep.subr.mxu0 %v701
    %2580 = vmatpush1.msra.mxu0 %v700
    %2581 = vmatprep.subr.mxu0 %v707
    %2582 = vmatpush1.msra.mxu0 %v706
    %2583 = vmatprep.subr.mxu0 %v713
    %2584 = vmatpush1.msra.mxu0 %v712
    %2585 = vmatprep.subr.mxu0 %v719
    %2586 = vmatpush1.msra.mxu0 %v718
    %2587 = vmatprep.subr.mxu0 %v725
    %2588 = vmatpush1.msra.mxu0 %v724
    %2589 = vmatprep.subr.mxu0 %v731
    %2590 = vmatpush1.msra.mxu0 %v730
    %2591 = vmatprep.subr.mxu0 %v737
    %2592 = vmatpush1.msra.mxu0 %v736
    %2593 = vmatprep.subr.mxu0 %v743
    %2594 = vmatpush1.msra.mxu0 %v742
    %2595 = vmatprep.subr.mxu0 %v749
    %2596 = vmatpush1.msra.mxu0 %v748
    %2597 = vmatprep.subr.mxu0 %v755
    %2598 = vmatpush1.msra.mxu0 %v754
    %2599 = vmatprep.subr.mxu0 %v761
    %2600 = vmatpush1.msra.mxu0 %v760
    %2601 = vmatprep.subr.mxu0 %v767
    %2602 = vmatpush1.msra.mxu0 %v766
    %2603 = vmatprep.subr.mxu0 %v773
    %2604 = vmatpush1.msra.mxu0 %v772
    %2605 = vmatprep.mubr.f32.mxu0 %v2389
    %2606 = vmatmul.mubr.f32.gmra.mrb[0].mxu0 %v2388
    %v2607 = vpop.f32.mrb[0].mxu0
    %v2608 = vadd.f32 %v559, %v2607
    %v2609 = vpop.f32.mrb[0].mxu0
    %v2610 = vadd.f32 %v563, %v2609
    %2611 = vdwg.mxu0
    %v2612 = vadd.f32 %v2393, %v2466
    %v2613 = vadd.f32 %v2394, %v2468
    %v2614 = vxor.u32 %v2612, 2147483648
    %v2615 = vxor.u32 %v2613, 2147483648
    %v2616 = vmul.f32 %v2614, 1.442695
    %v2617 = vpow.pop %v2616
    %v2618 = vmul.f32 %v2615, 1.442695
    %v2619 = vpow.pop %v2618
    %v2620 = vadd.f32 %v2617, 1.0
    %v2621 = vadd.f32 %v2619, 1.0
    %v2622 = vrcp.pop %v2620
    %v2623 = vmul.f32 1.0, %v2622
    %v2624 = vrcp.pop %v2621
    %v2625 = vmul.f32 1.0, %v2624
    %v2626 = vadd.f32 %v2395, %v2537
    %v2627 = vadd.f32 %v2396, %v2539
    %v2628 = vxor.u32 %v2626, 2147483648
    %v2629 = vxor.u32 %v2627, 2147483648
    %v2630 = vmul.f32 %v2628, 1.442695
    %v2631 = vpow.pop %v2630
    %v2632 = vmul.f32 %v2629, 1.442695
    %v2633 = vpow.pop %v2632
    %v2634 = vadd.f32 %v2631, 1.0
    %v2635 = vadd.f32 %v2633, 1.0
    %v2636 = vrcp.pop %v2634
    %v2637 = vmul.f32 1.0, %v2636
    %v2638 = vrcp.pop %v2635
    %v2639 = vmul.f32 1.0, %v2638
    %v2640 = vmul.f32 %v2623, %v2608
    %v2641 = vmul.f32 %v2625, %v2610
    %v2642 = vadd.f32 %v2397, %v2640
    %v2643 = vadd.f32 %v2398, %v2641
    %v2644 = vtanh.pop %v2642
    %v2645 = vtanh.pop %v2643
    %v2646 = vsub.f32 1.0, %v2637
    %v2647 = vsub.f32 1.0, %v2639
    %v2648 = vmul.f32 %v2646, %v2644
    %v2649 = vmul.f32 %v2647, %v2645
    %v2650 = vmul.f32 %v2637, %v2388
    %v2651 = vmul.f32 %v2639, %v2389
    %v2652 = vadd.f32 %v2648, %v2650
    %v2653 = vadd.f32 %v2649, %v2651
    %s2654 = sadd.s32 %s570, 6
    %p2655 = scmp.lt.s32.totalorder %s2654, 8
    %s2656 = scalar_select %p2655, 1, 0
    %v2657 = vstv %s2656
    %vm2658 = vcmp.eq.s32.totalorder %v2657, 1
    %v2659 = vsel %vm2658, %v2652, %v2388
    %v2660 = vsel %vm2658, %v2653, %v2389
    %s2661 = smul.u32 7, 6
    %s2662 = smul.addr %s2661, 8
    %s2663 = scalar_lea.vmem [#allocation3], %s2662
    %v2664 = vld [vmem:[%s2663] sm:$0xff]
    %v2665 = vld [vmem:[%s2663 + $0x8] sm:$0xff]
    %v2666 = vld [vmem:[%s2663 + $0x10] sm:$0xff]
    %v2667 = vld [vmem:[%s2663 + $0x18] sm:$0xff]
    %v2668 = vld [vmem:[%s2663 + $0x20] sm:$0xff]
    %v2669 = vld [vmem:[%s2663 + $0x28] sm:$0xff]
    %2670 = vmatprep.subr.mxu0 %v583
    %2671 = vmatpush1.msra.mxu0 %v582
    %2672 = vmatprep.subr.mxu0 %v589
    %2673 = vmatpush1.msra.mxu0 %v588
    %2674 = vmatprep.subr.mxu0 %v595
    %2675 = vmatpush1.msra.mxu0 %v594
    %2676 = vmatprep.subr.mxu0 %v601
    %2677 = vmatpush1.msra.mxu0 %v600
    %2678 = vmatprep.subr.mxu0 %v607
    %2679 = vmatpush1.msra.mxu0 %v606
    %2680 = vmatprep.subr.mxu0 %v613
    %2681 = vmatpush1.msra.mxu0 %v612
    %2682 = vmatprep.subr.mxu0 %v619
    %2683 = vmatpush1.msra.mxu0 %v618
    %2684 = vmatprep.subr.mxu0 %v625
    %2685 = vmatpush1.msra.mxu0 %v624
    %2686 = vmatprep.subr.mxu0 %v631
    %2687 = vmatpush1.msra.mxu0 %v630
    %2688 = vmatprep.subr.mxu0 %v637
    %2689 = vmatpush1.msra.mxu0 %v636
    %2690 = vmatprep.subr.mxu0 %v643
    %2691 = vmatpush1.msra.mxu0 %v642
    %2692 = vmatprep.subr.mxu0 %v649
    %2693 = vmatpush1.msra.mxu0 %v648
    %2694 = vmatprep.subr.mxu0 %v655
    %2695 = vmatpush1.msra.mxu0 %v654
    %2696 = vmatprep.subr.mxu0 %v661
    %2697 = vmatpush1.msra.mxu0 %v660
    %2698 = vmatprep.subr.mxu0 %v667
    %2699 = vmatpush1.msra.mxu0 %v666
    %2700 = vmatprep.subr.mxu0 %v673
    %2701 = vmatpush1.msra.mxu0 %v672
    %2702 = vmatprep.subr.mxu0 %v679
    %2703 = vmatpush1.msra.mxu0 %v678
    %2704 = vmatprep.subr.mxu0 %v685
    %2705 = vmatpush1.msra.mxu0 %v684
    %2706 = vmatprep.subr.mxu0 %v691
    %2707 = vmatpush1.msra.mxu0 %v690
    %2708 = vmatprep.subr.mxu0 %v697
    %2709 = vmatpush1.msra.mxu0 %v696
    %2710 = vmatprep.subr.mxu0 %v703
    %2711 = vmatpush1.msra.mxu0 %v702
    %2712 = vmatprep.subr.mxu0 %v709
    %2713 = vmatpush1.msra.mxu0 %v708
    %2714 = vmatprep.subr.mxu0 %v715
    %2715 = vmatpush1.msra.mxu0 %v714
    %2716 = vmatprep.subr.mxu0 %v721
    %2717 = vmatpush1.msra.mxu0 %v720
    %2718 = vmatprep.subr.mxu0 %v727
    %2719 = vmatpush1.msra.mxu0 %v726
    %2720 = vmatprep.subr.mxu0 %v733
    %2721 = vmatpush1.msra.mxu0 %v732
    %2722 = vmatprep.subr.mxu0 %v739
    %2723 = vmatpush1.msra.mxu0 %v738
    %2724 = vmatprep.subr.mxu0 %v745
    %2725 = vmatpush1.msra.mxu0 %v744
    %2726 = vmatprep.subr.mxu0 %v751
    %2727 = vmatpush1.msra.mxu0 %v750
    %2728 = vmatprep.subr.mxu0 %v757
    %2729 = vmatpush1.msra.mxu0 %v756
    %2730 = vmatprep.subr.mxu0 %v763
    %2731 = vmatpush1.msra.mxu0 %v762
    %2732 = vmatprep.subr.mxu0 %v769
    %2733 = vmatpush1.msra.mxu0 %v768
    %2734 = vmatprep.mubr.f32.mxu0 %v2660
    %2735 = vmatmul.mubr.f32.gmra.mrb[0].mxu0 %v2659
    %v2736 = vpop.f32.mrb[0].mxu0
    %v2737 = vadd.f32 %v543, %v2736
    %v2738 = vpop.f32.mrb[0].mxu0
    %v2739 = vadd.f32 %v547, %v2738
    %2740 = vdwg.mxu0
    %2741 = vmatprep.subr.mxu0 %v585
    %2742 = vmatpush1.msra.mxu0 %v584
    %2743 = vmatprep.subr.mxu0 %v591
    %2744 = vmatpush1.msra.mxu0 %v590
    %2745 = vmatprep.subr.mxu0 %v597
    %2746 = vmatpush1.msra.mxu0 %v596
    %2747 = vmatprep.subr.mxu0 %v603
    %2748 = vmatpush1.msra.mxu0 %v602
    %2749 = vmatprep.subr.mxu0 %v609
    %2750 = vmatpush1.msra.mxu0 %v608
    %2751 = vmatprep.subr.mxu0 %v615
    %2752 = vmatpush1.msra.mxu0 %v614
    %2753 = vmatprep.subr.mxu0 %v621
    %2754 = vmatpush1.msra.mxu0 %v620
    %2755 = vmatprep.subr.mxu0 %v627
    %2756 = vmatpush1.msra.mxu0 %v626
    %2757 = vmatprep.subr.mxu0 %v633
    %2758 = vmatpush1.msra.mxu0 %v632
    %2759 = vmatprep.subr.mxu0 %v639
    %2760 = vmatpush1.msra.mxu0 %v638
    %2761 = vmatprep.subr.mxu0 %v645
    %2762 = vmatpush1.msra.mxu0 %v644
    %2763 = vmatprep.subr.mxu0 %v651
    %2764 = vmatpush1.msra.mxu0 %v650
    %2765 = vmatprep.subr.mxu0 %v657
    %2766 = vmatpush1.msra.mxu0 %v656
    %2767 = vmatprep.subr.mxu0 %v663
    %2768 = vmatpush1.msra.mxu0 %v662
    %2769 = vmatprep.subr.mxu0 %v669
    %2770 = vmatpush1.msra.mxu0 %v668
    %2771 = vmatprep.subr.mxu0 %v675
    %2772 = vmatpush1.msra.mxu0 %v674
    %2773 = vmatprep.subr.mxu0 %v681
    %2774 = vmatpush1.msra.mxu0 %v680
    %2775 = vmatprep.subr.mxu0 %v687
    %2776 = vmatpush1.msra.mxu0 %v686
    %2777 = vmatprep.subr.mxu0 %v693
    %2778 = vmatpush1.msra.mxu0 %v692
    %2779 = vmatprep.subr.mxu0 %v699
    %2780 = vmatpush1.msra.mxu0 %v698
    %2781 = vmatprep.subr.mxu0 %v705
    %2782 = vmatpush1.msra.mxu0 %v704
    %2783 = vmatprep.subr.mxu0 %v711
    %2784 = vmatpush1.msra.mxu0 %v710
    %2785 = vmatprep.subr.mxu0 %v717
    %2786 = vmatpush1.msra.mxu0 %v716
    %2787 = vmatprep.subr.mxu0 %v723
    %2788 = vmatpush1.msra.mxu0 %v722
    %2789 = vmatprep.subr.mxu0 %v729
    %2790 = vmatpush1.msra.mxu0 %v728
    %2791 = vmatprep.subr.mxu0 %v735
    %2792 = vmatpush1.msra.mxu0 %v734
    %2793 = vmatprep.subr.mxu0 %v741
    %2794 = vmatpush1.msra.mxu0 %v740
    %2795 = vmatprep.subr.mxu0 %v747
    %2796 = vmatpush1.msra.mxu0 %v746
    %2797 = vmatprep.subr.mxu0 %v753
    %2798 = vmatpush1.msra.mxu0 %v752
    %2799 = vmatprep.subr.mxu0 %v759
    %2800 = vmatpush1.msra.mxu0 %v758
    %2801 = vmatprep.subr.mxu0 %v765
    %2802 = vmatpush1.msra.mxu0 %v764
    %2803 = vmatprep.subr.mxu0 %v771
    %2804 = vmatpush1.msra.mxu0 %v770
    %2805 = vmatprep.mubr.f32.mxu0 %v2660
    %2806 = vmatmul.mubr.f32.gmra.mrb[0].mxu0 %v2659
    %v2807 = vpop.f32.mrb[0].mxu0
    %v2808 = vadd.f32 %v551, %v2807
    %v2809 = vpop.f32.mrb[0].mxu0
    %v2810 = vadd.f32 %v555, %v2809
    %2811 = vdwg.mxu0
    %2812 = vmatprep.subr.mxu0 %v587
    %2813 = vmatpush1.msra.mxu0 %v586
    %2814 = vmatprep.subr.mxu0 %v593
    %2815 = vmatpush1.msra.mxu0 %v592
    %2816 = vmatprep.subr.mxu0 %v599
    %2817 = vmatpush1.msra.mxu0 %v598
    %2818 = vmatprep.subr.mxu0 %v605
    %2819 = vmatpush1.msra.mxu0 %v604
    %2820 = vmatprep.subr.mxu0 %v611
    %2821 = vmatpush1.msra.mxu0 %v610
    %2822 = vmatprep.subr.mxu0 %v617
    %2823 = vmatpush1.msra.mxu0 %v616
    %2824 = vmatprep.subr.mxu0 %v623
    %2825 = vmatpush1.msra.mxu0 %v622
    %2826 = vmatprep.subr.mxu0 %v629
    %2827 = vmatpush1.msra.mxu0 %v628
    %2828 = vmatprep.subr.mxu0 %v635
    %2829 = vmatpush1.msra.mxu0 %v634
    %2830 = vmatprep.subr.mxu0 %v641
    %2831 = vmatpush1.msra.mxu0 %v640
    %2832 = vmatprep.subr.mxu0 %v647
    %2833 = vmatpush1.msra.mxu0 %v646
    %2834 = vmatprep.subr.mxu0 %v653
    %2835 = vmatpush1.msra.mxu0 %v652
    %2836 = vmatprep.subr.mxu0 %v659
    %2837 = vmatpush1.msra.mxu0 %v658
    %2838 = vmatprep.subr.mxu0 %v665
    %2839 = vmatpush1.msra.mxu0 %v664
    %2840 = vmatprep.subr.mxu0 %v671
    %2841 = vmatpush1.msra.mxu0 %v670
    %2842 = vmatprep.subr.mxu0 %v677
    %2843 = vmatpush1.msra.mxu0 %v676
    %2844 = vmatprep.subr.mxu0 %v683
    %2845 = vmatpush1.msra.mxu0 %v682
    %2846 = vmatprep.subr.mxu0 %v689
    %2847 = vmatpush1.msra.mxu0 %v688
    %2848 = vmatprep.subr.mxu0 %v695
    %2849 = vmatpush1.msra.mxu0 %v694
    %2850 = vmatprep.subr.mxu0 %v701
    %2851 = vmatpush1.msra.mxu0 %v700
    %2852 = vmatprep.subr.mxu0 %v707
    %2853 = vmatpush1.msra.mxu0 %v706
    %2854 = vmatprep.subr.mxu0 %v713
    %2855 = vmatpush1.msra.mxu0 %v712
    %2856 = vmatprep.subr.mxu0 %v719
    %2857 = vmatpush1.msra.mxu0 %v718
    %2858 = vmatprep.subr.mxu0 %v725
    %2859 = vmatpush1.msra.mxu0 %v724
    %2860 = vmatprep.subr.mxu0 %v731
    %2861 = vmatpush1.msra.mxu0 %v730
    %2862 = vmatprep.subr.mxu0 %v737
    %2863 = vmatpush1.msra.mxu0 %v736
    %2864 = vmatprep.subr.mxu0 %v743
    %2865 = vmatpush1.msra.mxu0 %v742
    %2866 = vmatprep.subr.mxu0 %v749
    %2867 = vmatpush1.msra.mxu0 %v748
    %2868 = vmatprep.subr.mxu0 %v755
    %2869 = vmatpush1.msra.mxu0 %v754
    %2870 = vmatprep.subr.mxu0 %v761
    %2871 = vmatpush1.msra.mxu0 %v760
    %2872 = vmatprep.subr.mxu0 %v767
    %2873 = vmatpush1.msra.mxu0 %v766
    %2874 = vmatprep.subr.mxu0 %v773
    %2875 = vmatpush1.msra.mxu0 %v772
    %2876 = vmatprep.mubr.f32.mxu0 %v2660
    %2877 = vmatmul.mubr.f32.gmra.mrb[0].mxu0 %v2659
    %v2878 = vpop.f32.mrb[0].mxu0
    %v2879 = vadd.f32 %v559, %v2878
    %v2880 = vpop.f32.mrb[0].mxu0
    %v2881 = vadd.f32 %v563, %v2880
    %2882 = vdwg.mxu0
    %v2883 = vadd.f32 %v2664, %v2737
    %v2884 = vadd.f32 %v2665, %v2739
    %v2885 = vxor.u32 %v2883, 2147483648
    %v2886 = vxor.u32 %v2884, 2147483648
    %v2887 = vmul.f32 %v2885, 1.442695
    %v2888 = vpow.pop %v2887
    %v2889 = vmul.f32 %v2886, 1.442695
    %v2890 = vpow.pop %v2889
    %v2891 = vadd.f32 %v2888, 1.0
    %v2892 = vadd.f32 %v2890, 1.0
    %v2893 = vrcp.pop %v2891
    %v2894 = vmul.f32 1.0, %v2893
    %v2895 = vrcp.pop %v2892
    %v2896 = vmul.f32 1.0, %v2895
    %v2897 = vadd.f32 %v2666, %v2808
    %v2898 = vadd.f32 %v2667, %v2810
    %v2899 = vxor.u32 %v2897, 2147483648
    %v2900 = vxor.u32 %v2898, 2147483648
    %v2901 = vmul.f32 %v2899, 1.442695
    %v2902 = vpow.pop %v2901
    %v2903 = vmul.f32 %v2900, 1.442695
    %v2904 = vpow.pop %v2903
    %v2905 = vadd.f32 %v2902, 1.0
    %v2906 = vadd.f32 %v2904, 1.0
    %v2907 = vrcp.pop %v2905
    %v2908 = vmul.f32 1.0, %v2907
    %v2909 = vrcp.pop %v2906
    %v2910 = vmul.f32 1.0, %v2909
    %v2911 = vmul.f32 %v2894, %v2879
    %v2912 = vmul.f32 %v2896, %v2881
    %v2913 = vadd.f32 %v2668, %v2911
    %v2914 = vadd.f32 %v2669, %v2912
    %v2915 = vtanh.pop %v2913
    %v2916 = vtanh.pop %v2914
    %v2917 = vsub.f32 1.0, %v2908
    %v2918 = vsub.f32 1.0, %v2910
    %v2919 = vmul.f32 %v2917, %v2915
    %v2920 = vmul.f32 %v2918, %v2916
    %v2921 = vmul.f32 %v2908, %v2659
    %v2922 = vmul.f32 %v2910, %v2660
    %v2923 = vadd.f32 %v2919, %v2921
    %v2924 = vadd.f32 %v2920, %v2922
    %s2925 = sadd.s32 %s570, 7
    %p2926 = scmp.lt.s32.totalorder %s2925, 8
    %s2927 = scalar_select %p2926, 1, 0
    %v2928 = vstv %s2927
    %vm2929 = vcmp.eq.s32.totalorder %v2928, 1
    %v2930 = vsel %vm2929, %v2923, %v2659
    %v2931 = vsel %vm2929, %v2924, %v2660
    %2932 = vst [vmem:[#allocation2] sm:$0xff] %v2930
    %2933 = vst [vmem:[#allocation2 + $0x8] sm:$0xff] %v2931
    // Predicated region
    $region46: #{tpu_custom_call.1} parent=1 // pred_check
      %p2934 = pneg %p68
    $region47: #{tpu_custom_call.1} parent=1 // pred_check_branch
      %2936 = sbr.rel (%p2934) target = $region49
    $region48: #{tpu_custom_call.1} parent=1 // pred_region
      %v2937 = vld [vmem:[#allocation9] sm:$0xff]
      %v2938 = vld [vmem:[#allocation9 + $0x8] sm:$0xff]
      %v2939 = vld [vmem:[#allocation9 + $0x10] sm:$0xff]
      %v2940 = vld [vmem:[#allocation9 + $0x18] sm:$0xff]
      %v2941 = vld [vmem:[#allocation9 + $0x20] sm:$0xff]
      %v2942 = vld [vmem:[#allocation9 + $0x28] sm:$0xff]
      %v2943 = vld [vmem:[#allocation9 + $0x30] sm:$0xff]
      %v2944 = vld [vmem:[#allocation9 + $0x38] sm:$0xff]
      %v2945 = vld [vmem:[#allocation9 + $0x40] sm:$0xff]
      %v2946 = vld [vmem:[#allocation9 + $0x48] sm:$0xff]
      %v2947 = vld [vmem:[#allocation9 + $0x50] sm:$0xff]
      %v2948 = vld [vmem:[#allocation9 + $0x58] sm:$0xff]
      %v2949 = vld [vmem:[#allocation9 + $0x60] sm:$0xff]
      %v2950 = vld [vmem:[#allocation9 + $0x68] sm:$0xff]
      %v2951 = vld [vmem:[#allocation9 + $0x70] sm:$0xff]
      %v2952 = vld [vmem:[#allocation9 + $0x78] sm:$0xff]
      %v2953 = vld [vmem:[#allocation9 + $0x80] sm:$0xff]
      %v2954 = vld [vmem:[#allocation9 + $0x88] sm:$0xff]
      %v2955 = vld [vmem:[#allocation9 + $0x90] sm:$0xff]
      %v2956 = vld [vmem:[#allocation9 + $0x98] sm:$0xff]
      %v2957 = vld [vmem:[#allocation9 + $0xa0] sm:$0xff]
      %v2958 = vld [vmem:[#allocation9 + $0xa8] sm:$0xff]
      %v2959 = vld [vmem:[#allocation9 + $0xb0] sm:$0xff]
      %v2960 = vld [vmem:[#allocation9 + $0xb8] sm:$0xff]
      %v2961 = vld [vmem:[#allocation9 + $0xc0] sm:$0xff]
      %v2962 = vld [vmem:[#allocation9 + $0xc8] sm:$0xff]
      %v2963 = vld [vmem:[#allocation9 + $0xd0] sm:$0xff]
      %v2964 = vld [vmem:[#allocation9 + $0xd8] sm:$0xff]
      %v2965 = vld [vmem:[#allocation9 + $0xe0] sm:$0xff]
      %v2966 = vld [vmem:[#allocation9 + $0xe8] sm:$0xff]
      %v2967 = vld [vmem:[#allocation9 + $0xf0] sm:$0xff]
      %v2968 = vld [vmem:[#allocation9 + $0xf8] sm:$0xff]
      %v2969 = vld [vmem:[%s6] sm:$0x1]
      %v2971 = vlaneseq
      %v2972 = vshrl.u32 %v2971, 7
      %v2973 = vsub.s32 0, %v2972
      %v2974 = vrot.slane %v2969, %v2973
      %2976 = vmatprep.subr.mxu0 0.0
      %2977 = vmatpush1.msra.mxu0 %v2937
      %2978 = vmatprep.subr.mxu0 0.0
      %2979 = vmatpush1.msra.mxu0 %v2938
      %2980 = vmatprep.subr.mxu0 0.0
      %2981 = vmatpush1.msra.mxu0 %v2939
      %2982 = vmatprep.subr.mxu0 0.0
      %2983 = vmatpush1.msra.mxu0 %v2940
      %2984 = vmatprep.subr.mxu0 0.0
      %2985 = vmatpush1.msra.mxu0 %v2941
      %2986 = vmatprep.subr.mxu0 0.0
      %2987 = vmatpush1.msra.mxu0 %v2942
      %2988 = vmatprep.subr.mxu0 0.0
      %2989 = vmatpush1.msra.mxu0 %v2943
      %2990 = vmatprep.subr.mxu0 0.0
      %2991 = vmatpush1.msra.mxu0 %v2944
      %2992 = vmatprep.subr.mxu0 0.0
      %2993 = vmatpush1.msra.mxu0 %v2945
      %2994 = vmatprep.subr.mxu0 0.0
      %2995 = vmatpush1.msra.mxu0 %v2946
      %2996 = vmatprep.subr.mxu0 0.0
      %2997 = vmatpush1.msra.mxu0 %v2947
      %2998 = vmatprep.subr.mxu0 0.0
      %2999 = vmatpush1.msra.mxu0 %v2948
      %3000 = vmatprep.subr.mxu0 0.0
      %3001 = vmatpush1.msra.mxu0 %v2949
      %3002 = vmatprep.subr.mxu0 0.0
      %3003 = vmatpush1.msra.mxu0 %v2950
      %3004 = vmatprep.subr.mxu0 0.0
      %3005 = vmatpush1.msra.mxu0 %v2951
      %3006 = vmatprep.subr.mxu0 0.0
      %3007 = vmatpush1.msra.mxu0 %v2952
      %3008 = vmatprep.subr.mxu0 0.0
      %3009 = vmatpush1.msra.mxu0 %v2953
      %3010 = vmatprep.subr.mxu0 0.0
      %3011 = vmatpush1.msra.mxu0 %v2954
      %3012 = vmatprep.subr.mxu0 0.0
      %3013 = vmatpush1.msra.mxu0 %v2955
      %3014 = vmatprep.subr.mxu0 0.0
      %3015 = vmatpush1.msra.mxu0 %v2956
      %3016 = vmatprep.subr.mxu0 0.0
      %3017 = vmatpush1.msra.mxu0 %v2957
      %3018 = vmatprep.subr.mxu0 0.0
      %3019 = vmatpush1.msra.mxu0 %v2958
      %3020 = vmatprep.subr.mxu0 0.0
      %3021 = vmatpush1.msra.mxu0 %v2959
      %3022 = vmatprep.subr.mxu0 0.0
      %3023 = vmatpush1.msra.mxu0 %v2960
      %3024 = vmatprep.subr.mxu0 0.0
      %3025 = vmatpush1.msra.mxu0 %v2961
      %3026 = vmatprep.subr.mxu0 0.0
      %3027 = vmatpush1.msra.mxu0 %v2962
      %3028 = vmatprep.subr.mxu0 0.0
      %3029 = vmatpush1.msra.mxu0 %v2963
      %3030 = vmatprep.subr.mxu0 0.0
      %3031 = vmatpush1.msra.mxu0 %v2964
      %3032 = vmatprep.subr.mxu0 0.0
      %3033 = vmatpush1.msra.mxu0 %v2965
      %3034 = vmatprep.subr.mxu0 0.0
      %3035 = vmatpush1.msra.mxu0 %v2966
      %3036 = vmatprep.subr.mxu0 0.0
      %3037 = vmatpush1.msra.mxu0 %v2967
      %3038 = vmatprep.subr.mxu0 0.0
      %3039 = vmatpush1.msra.mxu0 %v2968
      %3040 = vmatprep.mubr.f32.mxu0 %v2931
      %3041 = vmatmul.mubr.f32.gmra.mrb[0].mxu0 %v2930
      %v3042 = vpop.f32.mrb[0].mxu0
      %v3043 = vadd.f32 %v2974, %v3042
      %v3044 = vpop.f32.mrb[0].mxu0
      %3045 = vdwg.mxu0
      %v3046 = vxor.u32 %v3043, 2147483648
      %v3047 = vmul.f32 %v3046, 1.442695
      %v3048 = vpow.pop %v3047
      %v3049 = vadd.f32 %v3048, 1.0
      %v3050 = vrcp.pop %v3049
      %v3051 = vmul.f32 1.0, %v3050
      %3052 = vst [vmem:[#allocation10] sm:$0xff] %v3051
    $region49: #{tpu_custom_call.1} parent=1 // pred_fallthru
      _
    // Predicated region
    $region50: #{tpu_custom_call.1} parent=1 // pred_check
      _
    $region51: #{tpu_custom_call.1} parent=1 // pred_check_branch
      %3054 = sbr.rel (0) target = $region53
    $region52: #{tpu_custom_call.1} parent=1 // pred_region
      %s3056 = ssub.s32 128, 128
      %3057 = vsyncadd [#allocation6], %s3056
      %s3059 = sshll.u32 [#allocation10], 4
      %s3060 = int_to_ptr.vmem [resolvable:$true] %s3059
      %3062 = dma.vmem_to_hbm [thread:$0]  %s3060, 128, %s7, [#allocation6]
    $region53: #{tpu_custom_call.1} parent=1 // pred_fallthru
      _
    // Predicated region
    $region54: #{tpu_custom_call.1} parent=1 // pred_check
      _
    $region55: #{tpu_custom_call.1} parent=1 // pred_check_branch
      %3064 = sbr.rel (0) target = $region57
    $region56: #{tpu_custom_call.1} parent=1 // pred_region
      %3065 = dma.done [#allocation6], 128
    $region57: #{tpu_custom_call.1} parent=1 // pred_fallthru
      _
    %3066 = vsyncpa [#allocation5], 1
    %3067 = vsyncpa [#allocation8], 1
    %3068 = vsyncpa [#allocation6], 1

</llo_original>
